<compile_context>
chip_gen: v6e
topology: v6e:2x2x1
jax: 0.10.0
libtpu: 0.0.40
codegen_flags: <defaults>
</compile_context>

<pallas_src>
import numpy as np
from functools import partial

import jax
import jax.numpy as jnp
from jax.experimental import pallas as pl
from jax.experimental.pallas import tpu as pltpu


MAX_TILE_N = 256      # batch-tile cap; multiple of 8.  Safe on v5e/v6e/v7x VMEM.
KSIZE = 5             # LeNet conv kernel size


# ----------------------------------------------------------------------------
# Fused Pallas kernel: whole LeNet-5 forward for one batch tile.
# ----------------------------------------------------------------------------
def _lenet5_kernel(x_ref, a1_ref, b1_ref, a2_ref, b2_ref, a3_ref, b3_ref,
                   w4_ref, b4_ref, w5_ref, b5_ref, o_ref):
    f32, bf16 = jnp.float32, jnp.bfloat16
    TN = x_ref.shape[1] // 28                      # batch-tile size (rows per m-group)

    def mm(lhs, rhs):
        return jnp.dot(lhs, rhs, preferred_element_type=f32)

    a1 = a1_ref[...]                               # [160, 168] bf16 (K-stacked bands)
    b1 = b1_ref[...]                               # [1, 168]   f32

    # ---- conv1 + ReLU + H-pool ----------------------------------------------
    # Input rows are host-arranged as (r = i % 4, m = i // 4, n) with the 5
    # H-taps already concatenated along the lane axis (width 5*32 = 160), so
    # block r produces conv1 output rows i = 4*m + r with ONE K=160 matmul.
    # Pool #1's H-average is the p=0/p=1 add below; its 0.5 factor and its
    # W-average are folded into a2.
    hp1 = []
    for q in range(2):                             # pooled row i2 = 2*m + q
        blk = None
        for p in range(2):
            r = 2 * q + p
            lhs = x_ref[0, r * 7 * TN:(r + 1) * 7 * TN, :]         # [7*TN, 160] bf16
            act = jnp.maximum(mm(lhs, a1) + b1, 0.0)               # [7*TN, 168] f32
            blk = act if blk is None else blk + act
        hp1.append(blk.astype(bf16))               # cast once; sliced below

    # ---- conv2 + ReLU + H-pool (W-pool of stage 1 folded into a2) ------------
    # Output rows i' = 2*i3 + p2, i3 in [0,5).  Pool #2's H-average is the
    # p2=0/p2=1 add; its 0.5 factor and W-average are folded into a3.
    hp2 = None
    for p2 in range(2):
        acc = None
        for di in range(KSIZE):
            c2 = p2 + di                           # needed pooled row i2 = 2*m0 + q
            q, m0 = c2 % 2, c2 // 2
            lhs = hp1[q][m0 * TN:(m0 + 5) * TN, :]                 # [5*TN, 168] bf16
            part = mm(lhs, a2_ref[di])                             # [5*TN, 160] f32
            acc = part if acc is None else acc + part
        act = jnp.maximum(acc + b2_ref[...], 0.0)
        hp2 = act if hp2 is None else hp2 + act
    hp2 = hp2.astype(bf16)                         # [5*TN, 160], cast once

    # ---- conv3 + ReLU (5x5 -> 1x1; W-pool of stage 2 folded into a3) ---------
    acc3 = None
    for di in range(KSIZE):
        lhs = hp2[di * TN:(di + 1) * TN, :]                        # [TN, 160] bf16
        part = mm(lhs, a3_ref[di])                                 # [TN, 120] f32
        acc3 = part if acc3 is None else acc3 + part
    h3 = jnp.maximum(acc3 + b3_ref[...], 0.0)                      # [TN, 120]

    # ---- fc1 + ReLU, fc2 (lane-dense padded store) ----------------------------
    h4 = jnp.maximum(mm(h3.astype(bf16), w4_ref[...]) + b4_ref[...], 0.0)   # [TN, 84]
    o_ref[...] = mm(h4.astype(bf16), w5_ref[...]) + b5_ref[...]             # [TN, OUTP]


# ----------------------------------------------------------------------------
# Host-side weight preparation (tiny, ONE-TIME linear-algebra glue — hoisted
# out of the per-call jit and executed once at model-load time).
# ----------------------------------------------------------------------------
def _shift_tensor(k, w_in, w_out):
    s = np.zeros((k, w_in, w_out), np.float32)
    for d in range(k):
        s[d, np.arange(w_out) + d, np.arange(w_out)] = 1.0
    return s


def _pool_matrix(w, c):
    # [w*c, (w//2)*c]: averages adjacent column pairs (per channel), factor 0.5.
    s = np.zeros((w, w // 2), np.float32)
    s[2 * np.arange(w // 2), np.arange(w // 2)] = 0.5
    s[2 * np.arange(w // 2) + 1, np.arange(w // 2)] = 0.5
    return np.kron(s, np.eye(c, dtype=np.float32))


def _conv_band_matrices(w, w_in, w_out):
    # w: [Cout, Cin, k, k] (torch layout) -> A: [k, w_in*Cin, w_out*Cout] with
    # A[di][jj*Cin + ci, j*Cout + co] = w[co, ci, di, jj - j]  (banded over W).
    cout, cin, k, _ = w.shape
    shift = jnp.asarray(_shift_tensor(k, w_in, w_out))       # [k(dj), w_in, w_out]
    wt = jnp.transpose(w, (2, 3, 1, 0))                       # [k(di), k(dj), Cin, Cout]
    a = jnp.einsum('dwj,edio->ewijo', shift, wt)              # [di, w_in, Cin, w_out, Cout]
    return a.reshape(k, w_in * cin, w_out * cout)


def prepare_operands(params, num_classes):
    """Build VMEM-resident kernel operands. Call ONCE at model-load time."""
    f32, bf16 = jnp.float32, jnp.bfloat16
    # conv1: 32 -> 28 spatial, Cin=1, Cout=6; bands stacked along K (K = 160)
    # to pair with the host-side H-im2col of the input.
    a1 = _conv_band_matrices(params["w1"], 32, 28).reshape(KSIZE * 32, 28 * 6)   # [160, 168]
    b1 = jnp.tile(params["b1"], 28).reshape(1, -1)                                # [1, 168]
    # conv2 on H-pooled rows; W-average of pool#1 AND its 0.5 H-pool factor folded in.
    pw1 = jnp.asarray(_pool_matrix(28, 6))                                        # [168, 84]
    a2 = 0.5 * jnp.einsum('pk,ekn->epn', pw1,
                          _conv_band_matrices(params["w2"], 14, 10))              # [5, 168, 160]
    b2 = jnp.tile(params["b2"], 10).reshape(1, -1)                                # [1, 160]
    # conv3; W-average of pool#2 AND its 0.5 H-pool factor folded in.
    pw2 = jnp.asarray(_pool_matrix(10, 16))                                       # [160, 80]
    a3 = 0.5 * jnp.einsum('pk,ekn->epn', pw2,
                          _conv_band_matrices(params["w3"], 5, 1))                # [5, 160, 120]
    b3 = params["b3"].reshape(1, -1)                                              # [1, 120]
    # fully-connected layers (fc2 padded to a lane-dense width)
    w4 = params["w_fc1"].T                                                        # [120, 84]
    b4 = params["b_fc1"].reshape(1, -1)                                           # [1, 84]
    outp = ((num_classes + 127) // 128) * 128
    w5 = jnp.zeros((84, outp), f32).at[:, :num_classes].set(params["w_fc2"].T)
    b5 = jnp.zeros((1, outp), f32).at[:, :num_classes].set(
        params["b_fc2"].reshape(1, -1))
    ops = (a1.astype(bf16), b1.astype(f32), a2.astype(bf16), b2.astype(f32),
           a3.astype(bf16), b3.astype(f32), w4.astype(bf16), b4.astype(f32),
           w5.astype(bf16), b5.astype(f32))
    return ops


# ----------------------------------------------------------------------------
# Forward pass
# ----------------------------------------------------------------------------
@partial(jax.jit, static_argnums=(2,))
def lenet5_forward(x_nchw, ops, num_classes):
    a1, b1, a2, b2, a3, b3, w4, b4, w5, b5 = ops
    N = x_nchw.shape[0]
    outp = w5.shape[1]

    # Adaptive batch tile: big enough to fill the MXU, never larger than needed.
    tn = min(MAX_TILE_N, max(8, ((N + 7) // 8) * 8))
    n_tiles = (N + tn - 1) // tn
    n_pad = n_tiles * tn

    # Host-side input prep (all fused into the surrounding jit, no gather):
    #  * squeeze channel, pad batch to a tile multiple,
    #  * H-im2col: concat the 5 taps along the lane axis (width 5*32 = 160),
    #  * phase-deinterleave rows to (i % 4, i // 4, n) per batch tile so every
    #    in-kernel read is a static, 8-row-aligned contiguous slice.
    x = x_nchw[:, 0].astype(jnp.float32)                                  # [N, 32, 32]
    x = jnp.pad(x, ((0, n_pad - N), (0, 0), (0, 0)))
    xs = jnp.concatenate([x[:, d:d + 28, :] for d in range(KSIZE)], axis=-1)  # [n_pad, 28, 160]
    xs = xs.reshape(n_tiles, tn, 7, 4, KSIZE * 32).transpose(0, 3, 2, 1, 4)   # [tiles, r, m, n, w]
    x_prep = xs.reshape(n_tiles, 28 * tn, KSIZE * 32).astype(jnp.bfloat16)

    # Constant-index weight specs: the pipeline never re-fetches them (their
    # block index is invariant across the grid), so they stay VMEM-resident.
    in_specs = [
        pl.BlockSpec((1, 28 * tn, KSIZE * 32), lambda b: (b, 0, 0)),      # input tile
        pl.BlockSpec(a1.shape, lambda b: (0, 0)),
        pl.BlockSpec(b1.shape, lambda b: (0, 0)),
        pl.BlockSpec(a2.shape, lambda b: (0, 0, 0)),
        pl.BlockSpec(b2.shape, lambda b: (0, 0)),
        pl.BlockSpec(a3.shape, lambda b: (0, 0, 0)),
        pl.BlockSpec(b3.shape, lambda b: (0, 0)),
        pl.BlockSpec(w4.shape, lambda b: (0, 0)),
        pl.BlockSpec(b4.shape, lambda b: (0, 0)),
        pl.BlockSpec(w5.shape, lambda b: (0, 0)),
        pl.BlockSpec(b5.shape, lambda b: (0, 0)),
    ]

    out = pl.pallas_call(
        _lenet5_kernel,
        out_shape=jax.ShapeDtypeStruct((n_pad, outp), jnp.float32),
        grid_spec=pltpu.PrefetchScalarGridSpec(
            num_scalar_prefetch=0,
            grid=(n_tiles,),
            in_specs=in_specs,
            out_specs=pl.BlockSpec((tn, outp), lambda b: (b, 0)),
        ),
        compiler_params=pltpu.CompilerParams(
            dimension_semantics=("parallel",),       # tiles split across v7x TCs
            vmem_limit_bytes=48 * 1024 * 1024,       # v7x-safe (64 MiB physical)
        ),
    )(x_prep, a1, b1, a2, b2, a3, b3, w4, b4, w5, b5)

    return out[:N, :num_classes]


# ----------------------------------------------------------------------------
# Parameter init (PyTorch-default-like uniform init, torch weight layouts)
# ----------------------------------------------------------------------------
def init_params(key, num_classes):
    def uinit(k, shape, fan_in):
        bound = 1.0 / jnp.sqrt(fan_in)
        return jax.random.uniform(k, shape, jnp.float32, -bound, bound)

    keys = jax.random.split(key, 10)
    p = {}
    p["w1"] = uinit(keys[0], (6, 1, 5, 5), 1 * 5 * 5)
    p["b1"] = uinit(keys[1], (6,), 1 * 5 * 5)
    p["w2"] = uinit(keys[2], (16, 6, 5, 5), 6 * 5 * 5)
    p["b2"] = uinit(keys[3], (16,), 6 * 5 * 5)
    p["w3"] = uinit(keys[4], (120, 16, 5, 5), 16 * 5 * 5)
    p["b3"] = uinit(keys[5], (120,), 16 * 5 * 5)
    p["w_fc1"] = uinit(keys[6], (84, 120), 120)
    p["b_fc1"] = uinit(keys[7], (84,), 120)
    p["w_fc2"] = uinit(keys[8], (num_classes, 84), 84)
    p["b_fc2"] = uinit(keys[9], (num_classes,), 84)
    return p


if __name__ == "__main__":
    num_classes = 10
    key = jax.random.PRNGKey(0)
    kx, kp = jax.random.split(key)
    # LeNet-5 requires 32x32 single-channel input for the 120-dim flatten.
    x = jax.random.normal(kx, (2, 1, 32, 32), jnp.float32)
    params = init_params(kp, num_classes)

    # One-time weight prep (hoisted out of the per-call forward).
    ops = jax.block_until_ready(prepare_operands(params, num_classes))

    out = lenet5_forward(x, ops, num_classes)
    jax.block_until_ready(out)
    assert out.shape == (2, num_classes)
    print("KERNEL_OK")
</pallas_src>

<mosaic_0001>
module attributes {stable_mosaic.version = 11 : i64} {
  func.func @_lenet5_kernel(%arg0: i32, %arg1: memref<1x224x160xbf16, #tpu.memory_space<vmem>>, %arg2: memref<160x168xbf16, #tpu.memory_space<vmem>>, %arg3: memref<1x168xf32, #tpu.memory_space<vmem>>, %arg4: memref<5x168x160xbf16, #tpu.memory_space<vmem>>, %arg5: memref<1x160xf32, #tpu.memory_space<vmem>>, %arg6: memref<5x160x120xbf16, #tpu.memory_space<vmem>>, %arg7: memref<1x120xf32, #tpu.memory_space<vmem>>, %arg8: memref<120x84xbf16, #tpu.memory_space<vmem>>, %arg9: memref<1x84xf32, #tpu.memory_space<vmem>>, %arg10: memref<84x128xbf16, #tpu.memory_space<vmem>>, %arg11: memref<1x128xf32, #tpu.memory_space<vmem>>, %arg12: memref<8x128xf32, #tpu.memory_space<vmem>>) attributes {dimension_semantics = [#tpu.dimension_semantics<parallel>], iteration_bounds = array<i64: 1>, scalar_prefetch = 0 : i64, scratch_operands = 0 : i64, tpu.core_type = #tpu.core_type<tc>, window_params = [{transform_indices = @transform_0, window_bounds = array<i64: 1, 224, 160>}, {pipeline_mode = #tpu.pipeline_mode<synchronous>, transform_indices = @transform_1, window_bounds = array<i64: 160, 168>}, {pipeline_mode = #tpu.pipeline_mode<synchronous>, transform_indices = @transform_2, window_bounds = array<i64: 1, 168>}, {pipeline_mode = #tpu.pipeline_mode<synchronous>, transform_indices = @transform_3, window_bounds = array<i64: 5, 168, 160>}, {pipeline_mode = #tpu.pipeline_mode<synchronous>, transform_indices = @transform_4, window_bounds = array<i64: 1, 160>}, {pipeline_mode = #tpu.pipeline_mode<synchronous>, transform_indices = @transform_5, window_bounds = array<i64: 5, 160, 120>}, {pipeline_mode = #tpu.pipeline_mode<synchronous>, transform_indices = @transform_6, window_bounds = array<i64: 1, 120>}, {pipeline_mode = #tpu.pipeline_mode<synchronous>, transform_indices = @transform_7, window_bounds = array<i64: 120, 84>}, {pipeline_mode = #tpu.pipeline_mode<synchronous>, transform_indices = @transform_8, window_bounds = array<i64: 1, 84>}, {pipeline_mode = #tpu.pipeline_mode<synchronous>, transform_indices = @transform_9, window_bounds = array<i64: 84, 128>}, {pipeline_mode = #tpu.pipeline_mode<synchronous>, transform_indices = @transform_10, window_bounds = array<i64: 1, 128>}, {transform_indices = @transform_11, window_bounds = array<i64: 8, 128>}]} {
    %c0 = arith.constant 0 : index
    %c0_0 = arith.constant 0 : index
    %0 = vector.load %arg2[%c0, %c0_0] : memref<160x168xbf16, #tpu.memory_space<vmem>>, vector<160x168xbf16>
    %c0_1 = arith.constant 0 : index
    %c0_2 = arith.constant 0 : index
    %1 = vector.load %arg3[%c0_1, %c0_2] : memref<1x168xf32, #tpu.memory_space<vmem>>, vector<1x168xf32>
    %c0_3 = arith.constant 0 : index
    %c0_4 = arith.constant 0 : index
    %c0_5 = arith.constant 0 : index
    %2 = vector.load %arg1[%c0_3, %c0_4, %c0_5] : memref<1x224x160xbf16, #tpu.memory_space<vmem>>, vector<1x56x160xbf16>
    %3 = vector.shape_cast %2 : vector<1x56x160xbf16> to vector<56x160xbf16>
    %cst = arith.constant dense<0.000000e+00> : vector<56x168xf32>
    %4 = tpu.matmul %3, %0, %cst {dimension_numbers = #tpu.dot_dimension_numbers<[1], [0], [0], [1], [0, 0, 1, 1], [], []>} : vector<56x160xbf16>, vector<160x168xbf16>, vector<56x168xf32> -> vector<56x168xf32>
    %5 = vector.broadcast %1 : vector<1x168xf32> to vector<56x168xf32>
    %6 = arith.addf %4, %5 : vector<56x168xf32>
    %cst_6 = arith.constant 0.000000e+00 : f32
    %7 = vector.broadcast %cst_6 : f32 to vector<56x168xf32>
    %8 = arith.maximumf %6, %7 : vector<56x168xf32>
    %c0_7 = arith.constant 0 : index
    %c56 = arith.constant 56 : index
    %c0_8 = arith.constant 0 : index
    %9 = vector.load %arg1[%c0_7, %c56, %c0_8] : memref<1x224x160xbf16, #tpu.memory_space<vmem>>, vector<1x56x160xbf16>
    %10 = vector.shape_cast %9 : vector<1x56x160xbf16> to vector<56x160xbf16>
    %cst_9 = arith.constant dense<0.000000e+00> : vector<56x168xf32>
    %11 = tpu.matmul %10, %0, %cst_9 {dimension_numbers = #tpu.dot_dimension_numbers<[1], [0], [0], [1], [0, 0, 1, 1], [], []>} : vector<56x160xbf16>, vector<160x168xbf16>, vector<56x168xf32> -> vector<56x168xf32>
    %12 = vector.broadcast %1 : vector<1x168xf32> to vector<56x168xf32>
    %13 = arith.addf %11, %12 : vector<56x168xf32>
    %cst_10 = arith.constant 0.000000e+00 : f32
    %14 = vector.broadcast %cst_10 : f32 to vector<56x168xf32>
    %15 = arith.maximumf %13, %14 : vector<56x168xf32>
    %16 = arith.addf %8, %15 : vector<56x168xf32>
    %17 = arith.truncf %16 : vector<56x168xf32> to vector<56x168xbf16>
    %c0_11 = arith.constant 0 : index
    %c112 = arith.constant 112 : index
    %c0_12 = arith.constant 0 : index
    %18 = vector.load %arg1[%c0_11, %c112, %c0_12] : memref<1x224x160xbf16, #tpu.memory_space<vmem>>, vector<1x56x160xbf16>
    %19 = vector.shape_cast %18 : vector<1x56x160xbf16> to vector<56x160xbf16>
    %cst_13 = arith.constant dense<0.000000e+00> : vector<56x168xf32>
    %20 = tpu.matmul %19, %0, %cst_13 {dimension_numbers = #tpu.dot_dimension_numbers<[1], [0], [0], [1], [0, 0, 1, 1], [], []>} : vector<56x160xbf16>, vector<160x168xbf16>, vector<56x168xf32> -> vector<56x168xf32>
    %21 = vector.broadcast %1 : vector<1x168xf32> to vector<56x168xf32>
    %22 = arith.addf %20, %21 : vector<56x168xf32>
    %cst_14 = arith.constant 0.000000e+00 : f32
    %23 = vector.broadcast %cst_14 : f32 to vector<56x168xf32>
    %24 = arith.maximumf %22, %23 : vector<56x168xf32>
    %c0_15 = arith.constant 0 : index
    %c168 = arith.constant 168 : index
    %c0_16 = arith.constant 0 : index
    %25 = vector.load %arg1[%c0_15, %c168, %c0_16] : memref<1x224x160xbf16, #tpu.memory_space<vmem>>, vector<1x56x160xbf16>
    %26 = vector.shape_cast %25 : vector<1x56x160xbf16> to vector<56x160xbf16>
    %cst_17 = arith.constant dense<0.000000e+00> : vector<56x168xf32>
    %27 = tpu.matmul %26, %0, %cst_17 {dimension_numbers = #tpu.dot_dimension_numbers<[1], [0], [0], [1], [0, 0, 1, 1], [], []>} : vector<56x160xbf16>, vector<160x168xbf16>, vector<56x168xf32> -> vector<56x168xf32>
    %28 = vector.broadcast %1 : vector<1x168xf32> to vector<56x168xf32>
    %29 = arith.addf %27, %28 : vector<56x168xf32>
    %cst_18 = arith.constant 0.000000e+00 : f32
    %30 = vector.broadcast %cst_18 : f32 to vector<56x168xf32>
    %31 = arith.maximumf %29, %30 : vector<56x168xf32>
    %32 = arith.addf %24, %31 : vector<56x168xf32>
    %33 = arith.truncf %32 : vector<56x168xf32> to vector<56x168xbf16>
    %34 = vector.extract_strided_slice %17 {offsets = [0, 0], sizes = [40, 168], strides = [1, 1]} : vector<56x168xbf16> to vector<40x168xbf16>
    %c0_19 = arith.constant 0 : index
    %c0_20 = arith.constant 0 : index
    %c0_21 = arith.constant 0 : index
    %35 = vector.load %arg4[%c0_19, %c0_20, %c0_21] : memref<5x168x160xbf16, #tpu.memory_space<vmem>>, vector<1x168x160xbf16>
    %36 = vector.shape_cast %35 : vector<1x168x160xbf16> to vector<168x160xbf16>
    %cst_22 = arith.constant dense<0.000000e+00> : vector<40x160xf32>
    %37 = tpu.matmul %34, %36, %cst_22 {dimension_numbers = #tpu.dot_dimension_numbers<[1], [0], [0], [1], [0, 0, 1, 1], [], []>} : vector<40x168xbf16>, vector<168x160xbf16>, vector<40x160xf32> -> vector<40x160xf32>
    %38 = vector.extract_strided_slice %33 {offsets = [0, 0], sizes = [40, 168], strides = [1, 1]} : vector<56x168xbf16> to vector<40x168xbf16>
    %c1 = arith.constant 1 : index
    %c0_23 = arith.constant 0 : index
    %c0_24 = arith.constant 0 : index
    %39 = vector.load %arg4[%c1, %c0_23, %c0_24] : memref<5x168x160xbf16, #tpu.memory_space<vmem>>, vector<1x168x160xbf16>
    %40 = vector.shape_cast %39 : vector<1x168x160xbf16> to vector<168x160xbf16>
    %cst_25 = arith.constant dense<0.000000e+00> : vector<40x160xf32>
    %41 = tpu.matmul %38, %40, %cst_25 {dimension_numbers = #tpu.dot_dimension_numbers<[1], [0], [0], [1], [0, 0, 1, 1], [], []>} : vector<40x168xbf16>, vector<168x160xbf16>, vector<40x160xf32> -> vector<40x160xf32>
    %42 = arith.addf %37, %41 : vector<40x160xf32>
    %43 = vector.extract_strided_slice %17 {offsets = [8, 0], sizes = [40, 168], strides = [1, 1]} : vector<56x168xbf16> to vector<40x168xbf16>
    %c2 = arith.constant 2 : index
    %c0_26 = arith.constant 0 : index
    %c0_27 = arith.constant 0 : index
    %44 = vector.load %arg4[%c2, %c0_26, %c0_27] : memref<5x168x160xbf16, #tpu.memory_space<vmem>>, vector<1x168x160xbf16>
    %45 = vector.shape_cast %44 : vector<1x168x160xbf16> to vector<168x160xbf16>
    %cst_28 = arith.constant dense<0.000000e+00> : vector<40x160xf32>
    %46 = tpu.matmul %43, %45, %cst_28 {dimension_numbers = #tpu.dot_dimension_numbers<[1], [0], [0], [1], [0, 0, 1, 1], [], []>} : vector<40x168xbf16>, vector<168x160xbf16>, vector<40x160xf32> -> vector<40x160xf32>
    %47 = arith.addf %42, %46 : vector<40x160xf32>
    %48 = vector.extract_strided_slice %33 {offsets = [8, 0], sizes = [40, 168], strides = [1, 1]} : vector<56x168xbf16> to vector<40x168xbf16>
    %c3 = arith.constant 3 : index
    %c0_29 = arith.constant 0 : index
    %c0_30 = arith.constant 0 : index
    %49 = vector.load %arg4[%c3, %c0_29, %c0_30] : memref<5x168x160xbf16, #tpu.memory_space<vmem>>, vector<1x168x160xbf16>
    %50 = vector.shape_cast %49 : vector<1x168x160xbf16> to vector<168x160xbf16>
    %cst_31 = arith.constant dense<0.000000e+00> : vector<40x160xf32>
    %51 = tpu.matmul %48, %50, %cst_31 {dimension_numbers = #tpu.dot_dimension_numbers<[1], [0], [0], [1], [0, 0, 1, 1], [], []>} : vector<40x168xbf16>, vector<168x160xbf16>, vector<40x160xf32> -> vector<40x160xf32>
    %52 = arith.addf %47, %51 : vector<40x160xf32>
    %53 = vector.extract_strided_slice %17 {offsets = [16, 0], sizes = [40, 168], strides = [1, 1]} : vector<56x168xbf16> to vector<40x168xbf16>
    %c4 = arith.constant 4 : index
    %c0_32 = arith.constant 0 : index
    %c0_33 = arith.constant 0 : index
    %54 = vector.load %arg4[%c4, %c0_32, %c0_33] : memref<5x168x160xbf16, #tpu.memory_space<vmem>>, vector<1x168x160xbf16>
    %55 = vector.shape_cast %54 : vector<1x168x160xbf16> to vector<168x160xbf16>
    %cst_34 = arith.constant dense<0.000000e+00> : vector<40x160xf32>
    %56 = tpu.matmul %53, %55, %cst_34 {dimension_numbers = #tpu.dot_dimension_numbers<[1], [0], [0], [1], [0, 0, 1, 1], [], []>} : vector<40x168xbf16>, vector<168x160xbf16>, vector<40x160xf32> -> vector<40x160xf32>
    %57 = arith.addf %52, %56 : vector<40x160xf32>
    %c0_35 = arith.constant 0 : index
    %c0_36 = arith.constant 0 : index
    %58 = vector.load %arg5[%c0_35, %c0_36] : memref<1x160xf32, #tpu.memory_space<vmem>>, vector<1x160xf32>
    %59 = vector.broadcast %58 : vector<1x160xf32> to vector<40x160xf32>
    %60 = arith.addf %57, %59 : vector<40x160xf32>
    %cst_37 = arith.constant 0.000000e+00 : f32
    %61 = vector.broadcast %cst_37 : f32 to vector<40x160xf32>
    %62 = arith.maximumf %60, %61 : vector<40x160xf32>
    %63 = vector.extract_strided_slice %33 {offsets = [0, 0], sizes = [40, 168], strides = [1, 1]} : vector<56x168xbf16> to vector<40x168xbf16>
    %c0_38 = arith.constant 0 : index
    %c0_39 = arith.constant 0 : index
    %c0_40 = arith.constant 0 : index
    %64 = vector.load %arg4[%c0_38, %c0_39, %c0_40] : memref<5x168x160xbf16, #tpu.memory_space<vmem>>, vector<1x168x160xbf16>
    %65 = vector.shape_cast %64 : vector<1x168x160xbf16> to vector<168x160xbf16>
    %cst_41 = arith.constant dense<0.000000e+00> : vector<40x160xf32>
    %66 = tpu.matmul %63, %65, %cst_41 {dimension_numbers = #tpu.dot_dimension_numbers<[1], [0], [0], [1], [0, 0, 1, 1], [], []>} : vector<40x168xbf16>, vector<168x160xbf16>, vector<40x160xf32> -> vector<40x160xf32>
    %67 = vector.extract_strided_slice %17 {offsets = [8, 0], sizes = [40, 168], strides = [1, 1]} : vector<56x168xbf16> to vector<40x168xbf16>
    %c1_42 = arith.constant 1 : index
    %c0_43 = arith.constant 0 : index
    %c0_44 = arith.constant 0 : index
    %68 = vector.load %arg4[%c1_42, %c0_43, %c0_44] : memref<5x168x160xbf16, #tpu.memory_space<vmem>>, vector<1x168x160xbf16>
    %69 = vector.shape_cast %68 : vector<1x168x160xbf16> to vector<168x160xbf16>
    %cst_45 = arith.constant dense<0.000000e+00> : vector<40x160xf32>
    %70 = tpu.matmul %67, %69, %cst_45 {dimension_numbers = #tpu.dot_dimension_numbers<[1], [0], [0], [1], [0, 0, 1, 1], [], []>} : vector<40x168xbf16>, vector<168x160xbf16>, vector<40x160xf32> -> vector<40x160xf32>
    %71 = arith.addf %66, %70 : vector<40x160xf32>
    %72 = vector.extract_strided_slice %33 {offsets = [8, 0], sizes = [40, 168], strides = [1, 1]} : vector<56x168xbf16> to vector<40x168xbf16>
    %c2_46 = arith.constant 2 : index
    %c0_47 = arith.constant 0 : index
    %c0_48 = arith.constant 0 : index
    %73 = vector.load %arg4[%c2_46, %c0_47, %c0_48] : memref<5x168x160xbf16, #tpu.memory_space<vmem>>, vector<1x168x160xbf16>
    %74 = vector.shape_cast %73 : vector<1x168x160xbf16> to vector<168x160xbf16>
    %cst_49 = arith.constant dense<0.000000e+00> : vector<40x160xf32>
    %75 = tpu.matmul %72, %74, %cst_49 {dimension_numbers = #tpu.dot_dimension_numbers<[1], [0], [0], [1], [0, 0, 1, 1], [], []>} : vector<40x168xbf16>, vector<168x160xbf16>, vector<40x160xf32> -> vector<40x160xf32>
    %76 = arith.addf %71, %75 : vector<40x160xf32>
    %77 = vector.extract_strided_slice %17 {offsets = [16, 0], sizes = [40, 168], strides = [1, 1]} : vector<56x168xbf16> to vector<40x168xbf16>
    %c3_50 = arith.constant 3 : index
    %c0_51 = arith.constant 0 : index
    %c0_52 = arith.constant 0 : index
    %78 = vector.load %arg4[%c3_50, %c0_51, %c0_52] : memref<5x168x160xbf16, #tpu.memory_space<vmem>>, vector<1x168x160xbf16>
    %79 = vector.shape_cast %78 : vector<1x168x160xbf16> to vector<168x160xbf16>
    %cst_53 = arith.constant dense<0.000000e+00> : vector<40x160xf32>
    %80 = tpu.matmul %77, %79, %cst_53 {dimension_numbers = #tpu.dot_dimension_numbers<[1], [0], [0], [1], [0, 0, 1, 1], [], []>} : vector<40x168xbf16>, vector<168x160xbf16>, vector<40x160xf32> -> vector<40x160xf32>
    %81 = arith.addf %76, %80 : vector<40x160xf32>
    %82 = vector.extract_strided_slice %33 {offsets = [16, 0], sizes = [40, 168], strides = [1, 1]} : vector<56x168xbf16> to vector<40x168xbf16>
    %c4_54 = arith.constant 4 : index
    %c0_55 = arith.constant 0 : index
    %c0_56 = arith.constant 0 : index
    %83 = vector.load %arg4[%c4_54, %c0_55, %c0_56] : memref<5x168x160xbf16, #tpu.memory_space<vmem>>, vector<1x168x160xbf16>
    %84 = vector.shape_cast %83 : vector<1x168x160xbf16> to vector<168x160xbf16>
    %cst_57 = arith.constant dense<0.000000e+00> : vector<40x160xf32>
    %85 = tpu.matmul %82, %84, %cst_57 {dimension_numbers = #tpu.dot_dimension_numbers<[1], [0], [0], [1], [0, 0, 1, 1], [], []>} : vector<40x168xbf16>, vector<168x160xbf16>, vector<40x160xf32> -> vector<40x160xf32>
    %86 = arith.addf %81, %85 : vector<40x160xf32>
    %c0_58 = arith.constant 0 : index
    %c0_59 = arith.constant 0 : index
    %87 = vector.load %arg5[%c0_58, %c0_59] : memref<1x160xf32, #tpu.memory_space<vmem>>, vector<1x160xf32>
    %88 = vector.broadcast %87 : vector<1x160xf32> to vector<40x160xf32>
    %89 = arith.addf %86, %88 : vector<40x160xf32>
    %cst_60 = arith.constant 0.000000e+00 : f32
    %90 = vector.broadcast %cst_60 : f32 to vector<40x160xf32>
    %91 = arith.maximumf %89, %90 : vector<40x160xf32>
    %92 = arith.addf %62, %91 : vector<40x160xf32>
    %93 = arith.truncf %92 : vector<40x160xf32> to vector<40x160xbf16>
    %94 = vector.extract_strided_slice %93 {offsets = [0, 0], sizes = [8, 160], strides = [1, 1]} : vector<40x160xbf16> to vector<8x160xbf16>
    %c0_61 = arith.constant 0 : index
    %c0_62 = arith.constant 0 : index
    %c0_63 = arith.constant 0 : index
    %95 = vector.load %arg6[%c0_61, %c0_62, %c0_63] : memref<5x160x120xbf16, #tpu.memory_space<vmem>>, vector<1x160x120xbf16>
    %96 = vector.shape_cast %95 : vector<1x160x120xbf16> to vector<160x120xbf16>
    %cst_64 = arith.constant dense<0.000000e+00> : vector<8x120xf32>
    %97 = tpu.matmul %94, %96, %cst_64 {dimension_numbers = #tpu.dot_dimension_numbers<[1], [0], [0], [1], [0, 0, 1, 1], [], []>} : vector<8x160xbf16>, vector<160x120xbf16>, vector<8x120xf32> -> vector<8x120xf32>
    %98 = vector.extract_strided_slice %93 {offsets = [8, 0], sizes = [8, 160], strides = [1, 1]} : vector<40x160xbf16> to vector<8x160xbf16>
    %c1_65 = arith.constant 1 : index
    %c0_66 = arith.constant 0 : index
    %c0_67 = arith.constant 0 : index
    %99 = vector.load %arg6[%c1_65, %c0_66, %c0_67] : memref<5x160x120xbf16, #tpu.memory_space<vmem>>, vector<1x160x120xbf16>
    %100 = vector.shape_cast %99 : vector<1x160x120xbf16> to vector<160x120xbf16>
    %cst_68 = arith.constant dense<0.000000e+00> : vector<8x120xf32>
    %101 = tpu.matmul %98, %100, %cst_68 {dimension_numbers = #tpu.dot_dimension_numbers<[1], [0], [0], [1], [0, 0, 1, 1], [], []>} : vector<8x160xbf16>, vector<160x120xbf16>, vector<8x120xf32> -> vector<8x120xf32>
    %102 = arith.addf %97, %101 : vector<8x120xf32>
    %103 = vector.extract_strided_slice %93 {offsets = [16, 0], sizes = [8, 160], strides = [1, 1]} : vector<40x160xbf16> to vector<8x160xbf16>
    %c2_69 = arith.constant 2 : index
    %c0_70 = arith.constant 0 : index
    %c0_71 = arith.constant 0 : index
    %104 = vector.load %arg6[%c2_69, %c0_70, %c0_71] : memref<5x160x120xbf16, #tpu.memory_space<vmem>>, vector<1x160x120xbf16>
    %105 = vector.shape_cast %104 : vector<1x160x120xbf16> to vector<160x120xbf16>
    %cst_72 = arith.constant dense<0.000000e+00> : vector<8x120xf32>
    %106 = tpu.matmul %103, %105, %cst_72 {dimension_numbers = #tpu.dot_dimension_numbers<[1], [0], [0], [1], [0, 0, 1, 1], [], []>} : vector<8x160xbf16>, vector<160x120xbf16>, vector<8x120xf32> -> vector<8x120xf32>
    %107 = arith.addf %102, %106 : vector<8x120xf32>
    %108 = vector.extract_strided_slice %93 {offsets = [24, 0], sizes = [8, 160], strides = [1, 1]} : vector<40x160xbf16> to vector<8x160xbf16>
    %c3_73 = arith.constant 3 : index
    %c0_74 = arith.constant 0 : index
    %c0_75 = arith.constant 0 : index
    %109 = vector.load %arg6[%c3_73, %c0_74, %c0_75] : memref<5x160x120xbf16, #tpu.memory_space<vmem>>, vector<1x160x120xbf16>
    %110 = vector.shape_cast %109 : vector<1x160x120xbf16> to vector<160x120xbf16>
    %cst_76 = arith.constant dense<0.000000e+00> : vector<8x120xf32>
    %111 = tpu.matmul %108, %110, %cst_76 {dimension_numbers = #tpu.dot_dimension_numbers<[1], [0], [0], [1], [0, 0, 1, 1], [], []>} : vector<8x160xbf16>, vector<160x120xbf16>, vector<8x120xf32> -> vector<8x120xf32>
    %112 = arith.addf %107, %111 : vector<8x120xf32>
    %113 = vector.extract_strided_slice %93 {offsets = [32, 0], sizes = [8, 160], strides = [1, 1]} : vector<40x160xbf16> to vector<8x160xbf16>
    %c4_77 = arith.constant 4 : index
    %c0_78 = arith.constant 0 : index
    %c0_79 = arith.constant 0 : index
    %114 = vector.load %arg6[%c4_77, %c0_78, %c0_79] : memref<5x160x120xbf16, #tpu.memory_space<vmem>>, vector<1x160x120xbf16>
    %115 = vector.shape_cast %114 : vector<1x160x120xbf16> to vector<160x120xbf16>
    %cst_80 = arith.constant dense<0.000000e+00> : vector<8x120xf32>
    %116 = tpu.matmul %113, %115, %cst_80 {dimension_numbers = #tpu.dot_dimension_numbers<[1], [0], [0], [1], [0, 0, 1, 1], [], []>} : vector<8x160xbf16>, vector<160x120xbf16>, vector<8x120xf32> -> vector<8x120xf32>
    %117 = arith.addf %112, %116 : vector<8x120xf32>
    %c0_81 = arith.constant 0 : index
    %c0_82 = arith.constant 0 : index
    %118 = vector.load %arg7[%c0_81, %c0_82] : memref<1x120xf32, #tpu.memory_space<vmem>>, vector<1x120xf32>
    %119 = vector.broadcast %118 : vector<1x120xf32> to vector<8x120xf32>
    %120 = arith.addf %117, %119 : vector<8x120xf32>
    %cst_83 = arith.constant 0.000000e+00 : f32
    %121 = vector.broadcast %cst_83 : f32 to vector<8x120xf32>
    %122 = arith.maximumf %120, %121 : vector<8x120xf32>
    %123 = arith.truncf %122 : vector<8x120xf32> to vector<8x120xbf16>
    %c0_84 = arith.constant 0 : index
    %c0_85 = arith.constant 0 : index
    %124 = vector.load %arg8[%c0_84, %c0_85] : memref<120x84xbf16, #tpu.memory_space<vmem>>, vector<120x84xbf16>
    %cst_86 = arith.constant dense<0.000000e+00> : vector<8x84xf32>
    %125 = tpu.matmul %123, %124, %cst_86 {dimension_numbers = #tpu.dot_dimension_numbers<[1], [0], [0], [1], [0, 0, 1, 1], [], []>} : vector<8x120xbf16>, vector<120x84xbf16>, vector<8x84xf32> -> vector<8x84xf32>
    %c0_87 = arith.constant 0 : index
    %c0_88 = arith.constant 0 : index
    %126 = vector.load %arg9[%c0_87, %c0_88] : memref<1x84xf32, #tpu.memory_space<vmem>>, vector<1x84xf32>
    %127 = vector.broadcast %126 : vector<1x84xf32> to vector<8x84xf32>
    %128 = arith.addf %125, %127 : vector<8x84xf32>
    %cst_89 = arith.constant 0.000000e+00 : f32
    %129 = vector.broadcast %cst_89 : f32 to vector<8x84xf32>
    %130 = arith.maximumf %128, %129 : vector<8x84xf32>
    %131 = arith.truncf %130 : vector<8x84xf32> to vector<8x84xbf16>
    %c0_90 = arith.constant 0 : index
    %c0_91 = arith.constant 0 : index
    %132 = vector.load %arg10[%c0_90, %c0_91] : memref<84x128xbf16, #tpu.memory_space<vmem>>, vector<84x128xbf16>
    %cst_92 = arith.constant dense<0.000000e+00> : vector<8x128xf32>
    %133 = tpu.matmul %131, %132, %cst_92 {dimension_numbers = #tpu.dot_dimension_numbers<[1], [0], [0], [1], [0, 0, 1, 1], [], []>} : vector<8x84xbf16>, vector<84x128xbf16>, vector<8x128xf32> -> vector<8x128xf32>
    %c0_93 = arith.constant 0 : index
    %c0_94 = arith.constant 0 : index
    %134 = vector.load %arg11[%c0_93, %c0_94] : memref<1x128xf32, #tpu.memory_space<vmem>>, vector<1x128xf32>
    %135 = vector.broadcast %134 : vector<1x128xf32> to vector<8x128xf32>
    %136 = arith.addf %133, %135 : vector<8x128xf32>
    %c0_95 = arith.constant 0 : index
    %c0_96 = arith.constant 0 : index
    %137 = vector.load %arg12[%c0_95, %c0_96] : memref<8x128xf32, #tpu.memory_space<vmem>>, vector<8x128xf32>
    tpu.vector_store %arg12[%c0_95, %c0_96], %136 {strides = array<i32>} : memref<8x128xf32, #tpu.memory_space<vmem>>, vector<8x128xf32>,
    return
  }
  func.func @transform_0(%arg0: i32) -> (i32, i32, i32) {
    %c0_i32 = arith.constant 0 : i32
    %c0_i32_0 = arith.constant 0 : i32
    %c0_i32_1 = arith.constant 0 : i32
    return %arg0, %c0_i32, %c0_i32_0 : i32, i32, i32
  }
  func.func @transform_1(%arg0: i32) -> (i32, i32) {
    %c0_i32 = arith.constant 0 : i32
    %c0_i32_0 = arith.constant 0 : i32
    %c0_i32_1 = arith.constant 0 : i32
    return %c0_i32, %c0_i32_0 : i32, i32
  }
  func.func @transform_2(%arg0: i32) -> (i32, i32) {
    %c0_i32 = arith.constant 0 : i32
    %c0_i32_0 = arith.constant 0 : i32
    %c0_i32_1 = arith.constant 0 : i32
    return %c0_i32, %c0_i32_0 : i32, i32
  }
  func.func @transform_3(%arg0: i32) -> (i32, i32, i32) {
    %c0_i32 = arith.constant 0 : i32
    %c0_i32_0 = arith.constant 0 : i32
    %c0_i32_1 = arith.constant 0 : i32
    %c0_i32_2 = arith.constant 0 : i32
    return %c0_i32, %c0_i32_0, %c0_i32_1 : i32, i32, i32
  }
  func.func @transform_4(%arg0: i32) -> (i32, i32) {
    %c0_i32 = arith.constant 0 : i32
    %c0_i32_0 = arith.constant 0 : i32
    %c0_i32_1 = arith.constant 0 : i32
    return %c0_i32, %c0_i32_0 : i32, i32
  }
  func.func @transform_5(%arg0: i32) -> (i32, i32, i32) {
    %c0_i32 = arith.constant 0 : i32
    %c0_i32_0 = arith.constant 0 : i32
    %c0_i32_1 = arith.constant 0 : i32
    %c0_i32_2 = arith.constant 0 : i32
    return %c0_i32, %c0_i32_0, %c0_i32_1 : i32, i32, i32
  }
  func.func @transform_6(%arg0: i32) -> (i32, i32) {
    %c0_i32 = arith.constant 0 : i32
    %c0_i32_0 = arith.constant 0 : i32
    %c0_i32_1 = arith.constant 0 : i32
    return %c0_i32, %c0_i32_0 : i32, i32
  }
  func.func @transform_7(%arg0: i32) -> (i32, i32) {
    %c0_i32 = arith.constant 0 : i32
    %c0_i32_0 = arith.constant 0 : i32
    %c0_i32_1 = arith.constant 0 : i32
    return %c0_i32, %c0_i32_0 : i32, i32
  }
  func.func @transform_8(%arg0: i32) -> (i32, i32) {
    %c0_i32 = arith.constant 0 : i32
    %c0_i32_0 = arith.constant 0 : i32
    %c0_i32_1 = arith.constant 0 : i32
    return %c0_i32, %c0_i32_0 : i32, i32
  }
  func.func @transform_9(%arg0: i32) -> (i32, i32) {
    %c0_i32 = arith.constant 0 : i32
    %c0_i32_0 = arith.constant 0 : i32
    %c0_i32_1 = arith.constant 0 : i32
    return %c0_i32, %c0_i32_0 : i32, i32
  }
  func.func @transform_10(%arg0: i32) -> (i32, i32) {
    %c0_i32 = arith.constant 0 : i32
    %c0_i32_0 = arith.constant 0 : i32
    %c0_i32_1 = arith.constant 0 : i32
    return %c0_i32, %c0_i32_0 : i32, i32
  }
  func.func @transform_11(%arg0: i32) -> (i32, i32) {
    %c0_i32 = arith.constant 0 : i32
    %c0_i32_0 = arith.constant 0 : i32
    return %arg0, %c0_i32 : i32, i32
  }
}

</mosaic_0001>

<llo_original>
// kernel: lenet5_forward.1
$region0: #{lenet5_forward.1}
  #allocation0 [shape = 'u32[]', space=smem, size = 0x4, offset = 0x4, fixed_abs, tag = 'smem constant byte address 0x4 - core index']
  #allocation1 [shape = 'u32[144,128]{1,0:T(1,128)}', space=vmem, size = 0x12000, scoped, tag = 'internal scratch']
  %s0 = inlined_call_operand.vmem [shape: bf16[1,224,160], index: 0, kind: input, shape index: {}]
  %s1 = inlined_call_operand.vmem [shape: bf16[160,168], index: 1, kind: input, shape index: {}]
  %s2 = inlined_call_operand.vmem [shape: f32[1,168], index: 2, kind: input, shape index: {}]
  %s3 = inlined_call_operand.vmem [shape: bf16[5,168,160], index: 3, kind: input, shape index: {}]
  %s4 = inlined_call_operand.vmem [shape: f32[1,160], index: 4, kind: input, shape index: {}]
  %s5 = inlined_call_operand.vmem [shape: bf16[5,160,120], index: 5, kind: input, shape index: {}]
  %s6 = inlined_call_operand.vmem [shape: f32[1,120], index: 6, kind: input, shape index: {}]
  %s7 = inlined_call_operand.vmem [shape: bf16[120,84], index: 7, kind: input, shape index: {}]
  %s8 = inlined_call_operand.vmem [shape: f32[1,84], index: 8, kind: input, shape index: {}]
  %s9 = inlined_call_operand.vmem [shape: bf16[84,128], index: 9, kind: input, shape index: {}]
  %s10 = inlined_call_operand.vmem [shape: f32[1,128], index: 10, kind: input, shape index: {}]
  %s11 = inlined_call_operand.vmem [shape: f32[8,128], index: 11, kind: output, shape index: {}]
  %s12 = sld [smem:[#allocation0]]
  $region54: #{lenet5_forward.1} parent=0
    _
  %s14 = ssub.s32 1, %s12
  %s15 = scalar_select 0, %s14, %s12
  // Predicated region
  $region2: #{lenet5_forward.1} parent=0 // pred_check
    _
  $region3: #{lenet5_forward.1} parent=0 // pred_check_branch
    %17 = sbr.rel (0) target = $region5
  $region4: #{lenet5_forward.1} parent=0 // pred_region
    _
  $region5: #{lenet5_forward.1} parent=0 // pred_fallthru
    _
  // Predicated region
  $region6: #{lenet5_forward.1} parent=0 // pred_check
    _
  $region7: #{lenet5_forward.1} parent=0 // pred_check_branch
    %19 = sbr.rel (0) target = $region9
  $region8: #{lenet5_forward.1} parent=0 // pred_region
    _
  $region9: #{lenet5_forward.1} parent=0 // pred_fallthru
    _
  // Predicated region
  $region10: #{lenet5_forward.1} parent=0 // pred_check
    _
  $region11: #{lenet5_forward.1} parent=0 // pred_check_branch
    %21 = sbr.rel (0) target = $region13
  $region12: #{lenet5_forward.1} parent=0 // pred_region
    _
  $region13: #{lenet5_forward.1} parent=0 // pred_fallthru
    _
  // Predicated region
  $region14: #{lenet5_forward.1} parent=0 // pred_check
    _
  $region15: #{lenet5_forward.1} parent=0 // pred_check_branch
    %23 = sbr.rel (0) target = $region17
  $region16: #{lenet5_forward.1} parent=0 // pred_region
    _
  $region17: #{lenet5_forward.1} parent=0 // pred_fallthru
    _
  // Predicated region
  $region18: #{lenet5_forward.1} parent=0 // pred_check
    _
  $region19: #{lenet5_forward.1} parent=0 // pred_check_branch
    %25 = sbr.rel (0) target = $region21
  $region20: #{lenet5_forward.1} parent=0 // pred_region
    _
  $region21: #{lenet5_forward.1} parent=0 // pred_fallthru
    _
  // Predicated region
  $region22: #{lenet5_forward.1} parent=0 // pred_check
    _
  $region23: #{lenet5_forward.1} parent=0 // pred_check_branch
    %27 = sbr.rel (0) target = $region25
  $region24: #{lenet5_forward.1} parent=0 // pred_region
    _
  $region25: #{lenet5_forward.1} parent=0 // pred_fallthru
    _
  // Predicated region
  $region26: #{lenet5_forward.1} parent=0 // pred_check
    _
  $region27: #{lenet5_forward.1} parent=0 // pred_check_branch
    %29 = sbr.rel (0) target = $region29
  $region28: #{lenet5_forward.1} parent=0 // pred_region
    _
  $region29: #{lenet5_forward.1} parent=0 // pred_fallthru
    _
  // Predicated region
  $region30: #{lenet5_forward.1} parent=0 // pred_check
    _
  $region31: #{lenet5_forward.1} parent=0 // pred_check_branch
    %31 = sbr.rel (0) target = $region33
  $region32: #{lenet5_forward.1} parent=0 // pred_region
    _
  $region33: #{lenet5_forward.1} parent=0 // pred_fallthru
    _
  // Predicated region
  $region34: #{lenet5_forward.1} parent=0 // pred_check
    _
  $region35: #{lenet5_forward.1} parent=0 // pred_check_branch
    %33 = sbr.rel (0) target = $region37
  $region36: #{lenet5_forward.1} parent=0 // pred_region
    _
  $region37: #{lenet5_forward.1} parent=0 // pred_fallthru
    _
  // Predicated region
  $region38: #{lenet5_forward.1} parent=0 // pred_check
    _
  $region39: #{lenet5_forward.1} parent=0 // pred_check_branch
    %35 = sbr.rel (0) target = $region41
  $region40: #{lenet5_forward.1} parent=0 // pred_region
    _
  $region41: #{lenet5_forward.1} parent=0 // pred_fallthru
    _
  // Predicated region
  $region42: #{lenet5_forward.1} parent=0 // pred_check
    _
  $region43: #{lenet5_forward.1} parent=0 // pred_check_branch
    %37 = sbr.rel (0) target = $region45
  $region44: #{lenet5_forward.1} parent=0 // pred_region
    _
  $region45: #{lenet5_forward.1} parent=0 // pred_fallthru
    _
  %v39 = vld [vmem:[%s1] sm:$0xff]
  %v40 = vld [vmem:[%s1 + $0x8] sm:$0xff]
  %v41 = vld [vmem:[%s1 + $0x10] sm:$0xff]
  %v42 = vld [vmem:[%s1 + $0x18] sm:$0xff]
  %v43 = vld [vmem:[%s1 + $0x20] sm:$0xff]
  %v44 = vld [vmem:[%s1 + $0x28] sm:$0xff]
  %v45 = vld [vmem:[%s1 + $0x30] sm:$0xff]
  %v46 = vld [vmem:[%s1 + $0x38] sm:$0xff]
  %v47 = vld [vmem:[%s1 + $0x40] sm:$0xff]
  %v48 = vld [vmem:[%s1 + $0x48] sm:$0xff]
  %v49 = vld [vmem:[%s1 + $0x50] sm:$0xff]
  %v50 = vld [vmem:[%s1 + $0x58] sm:$0xff]
  %v51 = vld [vmem:[%s1 + $0x60] sm:$0xff]
  %v52 = vld [vmem:[%s1 + $0x68] sm:$0xff]
  %v53 = vld [vmem:[%s1 + $0x70] sm:$0xff]
  %v54 = vld [vmem:[%s1 + $0x78] sm:$0xff]
  %v55 = vld [vmem:[%s1 + $0x80] sm:$0xff]
  %v56 = vld [vmem:[%s1 + $0x88] sm:$0xff]
  %v57 = vld [vmem:[%s1 + $0x90] sm:$0xff]
  %v58 = vld [vmem:[%s1 + $0x98] sm:$0xff]
  %v59 = vld [vmem:[%s2] sm:$0x3]
  %v60 = vld [vmem:[%s0] sm:$0xff]
  %v61 = vld [vmem:[%s0 + $0x8] sm:$0xff]
  %v62 = vld [vmem:[%s0 + $0x10] sm:$0xff]
  %v63 = vld [vmem:[%s0 + $0x18] sm:$0xff]
  %v64 = vld [vmem:[%s0 + $0x20] sm:$0xff]
  %v65 = vld [vmem:[%s0 + $0x28] sm:$0xff]
  %v66 = vld [vmem:[%s0 + $0x30] sm:$0xff]
  %v68 = vlaneseq
  %v69 = vshrl.u32 %v68, 7
  %v70 = vsub.s32 0, %v69
  %v71 = vrot.slane %v59, %v70
  %v72 = vlaneseq
  %v73 = vshrl.u32 %v72, 7
  %v74 = vsub.s32 1, %v73
  %v75 = vrot.slane %v59, %v74
  %v85 = vunpack.c.l.b16 %v60
  %v86 = vunpack.c.h.b16 %v60
  %v87 = vunpack.c.l.b16 %v61
  %v88 = vunpack.c.h.b16 %v61
  %v89 = vunpack.c.l.b16 %v62
  %v90 = vunpack.c.h.b16 %v62
  %v91 = vunpack.c.l.b16 %v63
  %v92 = vunpack.c.h.b16 %v63
  %v93 = vunpack.c.l.b16 %v64
  %v94 = vunpack.c.h.b16 %v64
  %v95 = vunpack.c.l.b16 %v65
  %v96 = vunpack.c.h.b16 %v65
  %v97 = vunpack.c.l.b16 %v66
  %v98 = vunpack.c.h.b16 %v66
  %v99 = vpack.c.b16 %v87, %v85
  %v100 = vpack.c.b16 %v88, %v86
  %v101 = vpack.c.b16 %v91, %v89
  %v102 = vpack.c.b16 %v92, %v90
  %v103 = vpack.c.b16 %v95, %v93
  %v104 = vpack.c.b16 %v96, %v94
  %v105 = vpack.c.b16 %v97, %v97
  %v106 = vpack.c.b16 %v98, %v98
  %v131 = vunpack.c.l.b16 %v39
  %v132 = vunpack.c.h.b16 %v39
  %v133 = vunpack.c.l.b16 %v40
  %v134 = vunpack.c.h.b16 %v40
  %v135 = vunpack.c.l.b16 %v41
  %v136 = vunpack.c.h.b16 %v41
  %v137 = vunpack.c.l.b16 %v42
  %v138 = vunpack.c.h.b16 %v42
  %v139 = vunpack.c.l.b16 %v43
  %v140 = vunpack.c.h.b16 %v43
  %v141 = vunpack.c.l.b16 %v44
  %v142 = vunpack.c.h.b16 %v44
  %v143 = vunpack.c.l.b16 %v45
  %v144 = vunpack.c.h.b16 %v45
  %v145 = vunpack.c.l.b16 %v46
  %v146 = vunpack.c.h.b16 %v46
  %v147 = vunpack.c.l.b16 %v47
  %v148 = vunpack.c.h.b16 %v47
  %v149 = vunpack.c.l.b16 %v48
  %v150 = vunpack.c.h.b16 %v48
  %v151 = vunpack.c.l.b16 %v49
  %v152 = vunpack.c.h.b16 %v49
  %v153 = vunpack.c.l.b16 %v50
  %v154 = vunpack.c.h.b16 %v50
  %v155 = vunpack.c.l.b16 %v51
  %v156 = vunpack.c.h.b16 %v51
  %v157 = vunpack.c.l.b16 %v52
  %v158 = vunpack.c.h.b16 %v52
  %v159 = vunpack.c.l.b16 %v53
  %v160 = vunpack.c.h.b16 %v53
  %v161 = vunpack.c.l.b16 %v54
  %v162 = vunpack.c.h.b16 %v54
  %v163 = vunpack.c.l.b16 %v55
  %v164 = vunpack.c.h.b16 %v55
  %v165 = vunpack.c.l.b16 %v56
  %v166 = vunpack.c.h.b16 %v56
  %v167 = vunpack.c.l.b16 %v57
  %v168 = vunpack.c.h.b16 %v57
  %v169 = vunpack.c.l.b16 %v58
  %v170 = vunpack.c.h.b16 %v58
  %v171 = vpack.c.b16 %v133, %v131
  %v172 = vpack.c.b16 %v134, %v132
  %v173 = vpack.c.b16 %v137, %v135
  %v174 = vpack.c.b16 %v138, %v136
  %v175 = vpack.c.b16 %v141, %v139
  %v176 = vpack.c.b16 %v142, %v140
  %v177 = vpack.c.b16 %v145, %v143
  %v178 = vpack.c.b16 %v146, %v144
  %v179 = vpack.c.b16 %v149, %v147
  %v180 = vpack.c.b16 %v150, %v148
  %v181 = vpack.c.b16 %v153, %v151
  %v182 = vpack.c.b16 %v154, %v152
  %v183 = vpack.c.b16 %v157, %v155
  %v184 = vpack.c.b16 %v158, %v156
  %v185 = vpack.c.b16 %v161, %v159
  %v186 = vpack.c.b16 %v162, %v160
  %v187 = vpack.c.b16 %v165, %v163
  %v188 = vpack.c.b16 %v166, %v164
  %v189 = vpack.c.b16 %v169, %v167
  %v190 = vpack.c.b16 %v170, %v168
  %vm211 = vcmask 261120
  %v213 = vsel %vm211, %v100, 0
  %v216 = vsel %vm211, %v102, 0
  %v219 = vsel %vm211, %v104, 0
  %v222 = vsel %vm211, %v106, 0
  %224 = vmatprep.subr.bf16.mxu0 %v186
  %225 = vmatpush1.bf16.msra.mxu0 %v185
  %226 = vmatprep.subr.bf16.mxu0 %v184
  %227 = vmatpush1.bf16.msra.mxu0 %v183
  %228 = vmatprep.subr.bf16.mxu0 %v182
  %229 = vmatpush1.bf16.msra.mxu0 %v181
  %230 = vmatprep.subr.bf16.mxu0 %v180
  %231 = vmatpush1.bf16.msra.mxu0 %v179
  %232 = vmatprep.subr.bf16.mxu0 %v178
  %233 = vmatpush1.bf16.msra.mxu0 %v177
  %234 = vmatprep.subr.bf16.mxu0 %v176
  %235 = vmatpush1.bf16.msra.mxu0 %v175
  %236 = vmatprep.subr.bf16.mxu0 %v174
  %237 = vmatpush1.bf16.msra.mxu0 %v173
  %238 = vmatprep.subr.bf16.mxu0 %v172
  %239 = vmatpush1.bf16.msra.mxu0 %v171
  %240 = vmatprep.subr.bf16.mxu0 0
  %241 = vmatpush2.bf16.msra.mxu0 0
  %242 = vmatprep.subr.bf16.mxu0 0
  %243 = vmatpush2.bf16.msra.mxu0 0
  %244 = vmatprep.subr.bf16.mxu0 0
  %245 = vmatpush2.bf16.msra.mxu0 0
  %246 = vmatprep.subr.bf16.mxu0 0
  %247 = vmatpush2.bf16.msra.mxu0 0
  %248 = vmatprep.subr.bf16.mxu0 0
  %249 = vmatpush2.bf16.msra.mxu0 0
  %250 = vmatprep.subr.bf16.mxu0 0
  %251 = vmatpush2.bf16.msra.mxu0 0
  %252 = vmatprep.subr.bf16.mxu0 %v190
  %253 = vmatpush2.bf16.msra.mxu0 %v189
  %254 = vmatprep.subr.bf16.mxu0 %v188
  %255 = vmatpush2.bf16.msra.mxu0 %v187
  %256 = vmatprep.mubr.bf16.mxu0 %v213
  %257 = vmatmul.mubr.bf16.gmra.mxu0 %v99
  %v258 = vpop.f32.mrf.mxu0
  %v259 = vadd.f32 %v71, %v258
  %v260 = vpop.f32.mrf.mxu0
  %v261 = vadd.f32 %v75, %v260
  %v262 = vpop.f32.mrf.mxu0
  %v263 = vadd.f32 %v71, %v262
  %v264 = vpop.f32.mrf.mxu0
  %v265 = vadd.f32 %v75, %v264
  %266 = vmatprep.mubr.bf16.mxu0 %v216
  %267 = vmatmul.mubr.bf16.gmra.mxu0 %v101
  %v268 = vpop.f32.mrf.mxu0
  %v269 = vadd.f32 %v71, %v268
  %v270 = vpop.f32.mrf.mxu0
  %v271 = vadd.f32 %v75, %v270
  %v272 = vpop.f32.mrf.mxu0
  %v273 = vadd.f32 %v71, %v272
  %v274 = vpop.f32.mrf.mxu0
  %v275 = vadd.f32 %v75, %v274
  %276 = vmatprep.mubr.bf16.mxu0 %v219
  %277 = vmatmul.mubr.bf16.gmra.mxu0 %v103
  %v278 = vpop.f32.mrf.mxu0
  %v279 = vadd.f32 %v71, %v278
  %v280 = vpop.f32.mrf.mxu0
  %v281 = vadd.f32 %v75, %v280
  %v282 = vpop.f32.mrf.mxu0
  %v283 = vadd.f32 %v71, %v282
  %v284 = vpop.f32.mrf.mxu0
  %v285 = vadd.f32 %v75, %v284
  %286 = vmatprep.mubr.bf16.mxu0 %v222
  %287 = vmatmul.mubr.bf16.gmra.mxu0 %v105
  %v288 = vpop.f32.mrf.mxu0
  %v289 = vadd.f32 %v71, %v288
  %v290 = vpop.f32.mrf.mxu0
  %v291 = vadd.f32 %v75, %v290
  %v292 = vpop.f32.mrf.mxu0
  %v293 = vpop.f32.mrf.mxu0
  %294 = vdwg.mxu0
  %v295 = vmax.f32 %v259, 0.0
  %v296 = vmax.f32 %v261, 0.0
  %v297 = vmax.f32 %v263, 0.0
  %v298 = vmax.f32 %v265, 0.0
  %v299 = vmax.f32 %v269, 0.0
  %v300 = vmax.f32 %v271, 0.0
  %v301 = vmax.f32 %v273, 0.0
  %v302 = vmax.f32 %v275, 0.0
  %v303 = vmax.f32 %v279, 0.0
  %v304 = vmax.f32 %v281, 0.0
  %v305 = vmax.f32 %v283, 0.0
  %v306 = vmax.f32 %v285, 0.0
  %v307 = vmax.f32 %v289, 0.0
  %v308 = vmax.f32 %v291, 0.0
  %v309 = vld [vmem:[%s0 + $0x38] sm:$0xff]
  %v310 = vld [vmem:[%s0 + $0x40] sm:$0xff]
  %v311 = vld [vmem:[%s0 + $0x48] sm:$0xff]
  %v312 = vld [vmem:[%s0 + $0x50] sm:$0xff]
  %v313 = vld [vmem:[%s0 + $0x58] sm:$0xff]
  %v314 = vld [vmem:[%s0 + $0x60] sm:$0xff]
  %v315 = vld [vmem:[%s0 + $0x68] sm:$0xff]
  %v323 = vunpack.c.l.b16 %v309
  %v324 = vunpack.c.h.b16 %v309
  %v325 = vunpack.c.l.b16 %v310
  %v326 = vunpack.c.h.b16 %v310
  %v327 = vunpack.c.l.b16 %v311
  %v328 = vunpack.c.h.b16 %v311
  %v329 = vunpack.c.l.b16 %v312
  %v330 = vunpack.c.h.b16 %v312
  %v331 = vunpack.c.l.b16 %v313
  %v332 = vunpack.c.h.b16 %v313
  %v333 = vunpack.c.l.b16 %v314
  %v334 = vunpack.c.h.b16 %v314
  %v335 = vunpack.c.l.b16 %v315
  %v336 = vunpack.c.h.b16 %v315
  %v337 = vpack.c.b16 %v325, %v323
  %v338 = vpack.c.b16 %v326, %v324
  %v339 = vpack.c.b16 %v329, %v327
  %v340 = vpack.c.b16 %v330, %v328
  %v341 = vpack.c.b16 %v333, %v331
  %v342 = vpack.c.b16 %v334, %v332
  %v343 = vpack.c.b16 %v335, %v335
  %v344 = vpack.c.b16 %v336, %v336
  %v350 = vsel %vm211, %v338, 0
  %v353 = vsel %vm211, %v340, 0
  %v356 = vsel %vm211, %v342, 0
  %v359 = vsel %vm211, %v344, 0
  %361 = vmatprep.subr.bf16.mxu0 %v186
  %362 = vmatpush1.bf16.msra.mxu0 %v185
  %363 = vmatprep.subr.bf16.mxu0 %v184
  %364 = vmatpush1.bf16.msra.mxu0 %v183
  %365 = vmatprep.subr.bf16.mxu0 %v182
  %366 = vmatpush1.bf16.msra.mxu0 %v181
  %367 = vmatprep.subr.bf16.mxu0 %v180
  %368 = vmatpush1.bf16.msra.mxu0 %v179
  %369 = vmatprep.subr.bf16.mxu0 %v178
  %370 = vmatpush1.bf16.msra.mxu0 %v177
  %371 = vmatprep.subr.bf16.mxu0 %v176
  %372 = vmatpush1.bf16.msra.mxu0 %v175
  %373 = vmatprep.subr.bf16.mxu0 %v174
  %374 = vmatpush1.bf16.msra.mxu0 %v173
  %375 = vmatprep.subr.bf16.mxu0 %v172
  %376 = vmatpush1.bf16.msra.mxu0 %v171
  %377 = vmatprep.subr.bf16.mxu0 0
  %378 = vmatpush2.bf16.msra.mxu0 0
  %379 = vmatprep.subr.bf16.mxu0 0
  %380 = vmatpush2.bf16.msra.mxu0 0
  %381 = vmatprep.subr.bf16.mxu0 0
  %382 = vmatpush2.bf16.msra.mxu0 0
  %383 = vmatprep.subr.bf16.mxu0 0
  %384 = vmatpush2.bf16.msra.mxu0 0
  %385 = vmatprep.subr.bf16.mxu0 0
  %386 = vmatpush2.bf16.msra.mxu0 0
  %387 = vmatprep.subr.bf16.mxu0 0
  %388 = vmatpush2.bf16.msra.mxu0 0
  %389 = vmatprep.subr.bf16.mxu0 %v190
  %390 = vmatpush2.bf16.msra.mxu0 %v189
  %391 = vmatprep.subr.bf16.mxu0 %v188
  %392 = vmatpush2.bf16.msra.mxu0 %v187
  %393 = vmatprep.mubr.bf16.mxu0 %v350
  %394 = vmatmul.mubr.bf16.gmra.mxu0 %v337
  %v395 = vpop.f32.mrf.mxu0
  %v396 = vadd.f32 %v71, %v395
  %v397 = vpop.f32.mrf.mxu0
  %v398 = vadd.f32 %v75, %v397
  %v399 = vpop.f32.mrf.mxu0
  %v400 = vadd.f32 %v71, %v399
  %v401 = vpop.f32.mrf.mxu0
  %v402 = vadd.f32 %v75, %v401
  %403 = vmatprep.mubr.bf16.mxu0 %v353
  %404 = vmatmul.mubr.bf16.gmra.mxu0 %v339
  %v405 = vpop.f32.mrf.mxu0
  %v406 = vadd.f32 %v71, %v405
  %v407 = vpop.f32.mrf.mxu0
  %v408 = vadd.f32 %v75, %v407
  %v409 = vpop.f32.mrf.mxu0
  %v410 = vadd.f32 %v71, %v409
  %v411 = vpop.f32.mrf.mxu0
  %v412 = vadd.f32 %v75, %v411
  %413 = vmatprep.mubr.bf16.mxu0 %v356
  %414 = vmatmul.mubr.bf16.gmra.mxu0 %v341
  %v415 = vpop.f32.mrf.mxu0
  %v416 = vadd.f32 %v71, %v415
  %v417 = vpop.f32.mrf.mxu0
  %v418 = vadd.f32 %v75, %v417
  %v419 = vpop.f32.mrf.mxu0
  %v420 = vadd.f32 %v71, %v419
  %v421 = vpop.f32.mrf.mxu0
  %v422 = vadd.f32 %v75, %v421
  %423 = vmatprep.mubr.bf16.mxu0 %v359
  %424 = vmatmul.mubr.bf16.gmra.mxu0 %v343
  %v425 = vpop.f32.mrf.mxu0
  %v426 = vadd.f32 %v71, %v425
  %v427 = vpop.f32.mrf.mxu0
  %v428 = vadd.f32 %v75, %v427
  %v429 = vpop.f32.mrf.mxu0
  %v430 = vpop.f32.mrf.mxu0
  %431 = vdwg.mxu0
  %v432 = vmax.f32 %v396, 0.0
  %v433 = vmax.f32 %v398, 0.0
  %v434 = vmax.f32 %v400, 0.0
  %v435 = vmax.f32 %v402, 0.0
  %v436 = vmax.f32 %v406, 0.0
  %v437 = vmax.f32 %v408, 0.0
  %v438 = vmax.f32 %v410, 0.0
  %v439 = vmax.f32 %v412, 0.0
  %v440 = vmax.f32 %v416, 0.0
  %v441 = vmax.f32 %v418, 0.0
  %v442 = vmax.f32 %v420, 0.0
  %v443 = vmax.f32 %v422, 0.0
  %v444 = vmax.f32 %v426, 0.0
  %v445 = vmax.f32 %v428, 0.0
  %v446 = vadd.f32 %v295, %v432
  %v447 = vadd.f32 %v296, %v433
  %v448 = vadd.f32 %v297, %v434
  %v449 = vadd.f32 %v298, %v435
  %v450 = vadd.f32 %v299, %v436
  %v451 = vadd.f32 %v300, %v437
  %v452 = vadd.f32 %v301, %v438
  %v453 = vadd.f32 %v302, %v439
  %v454 = vadd.f32 %v303, %v440
  %v455 = vadd.f32 %v304, %v441
  %v456 = vadd.f32 %v305, %v442
  %v457 = vadd.f32 %v306, %v443
  %v458 = vadd.f32 %v307, %v444
  %v459 = vadd.f32 %v308, %v445
  %v460 = vpack.c.bf16 %v448, %v446
  %v461 = vpack.c.bf16 %v449, %v447
  %v462 = vpack.c.bf16 %v452, %v450
  %v463 = vpack.c.bf16 %v453, %v451
  %v464 = vpack.c.bf16 %v456, %v454
  %v465 = vpack.c.bf16 %v457, %v455
  %v466 = vpack.c.bf16 %v458, %v458
  %v467 = vpack.c.bf16 %v459, %v459
  %v468 = vld [vmem:[%s0 + $0x70] sm:$0xff]
  %v469 = vld [vmem:[%s0 + $0x78] sm:$0xff]
  %v470 = vld [vmem:[%s0 + $0x80] sm:$0xff]
  %v471 = vld [vmem:[%s0 + $0x88] sm:$0xff]
  %v472 = vld [vmem:[%s0 + $0x90] sm:$0xff]
  %v473 = vld [vmem:[%s0 + $0x98] sm:$0xff]
  %v474 = vld [vmem:[%s0 + $0xa0] sm:$0xff]
  %v482 = vunpack.c.l.b16 %v468
  %v483 = vunpack.c.h.b16 %v468
  %v484 = vunpack.c.l.b16 %v469
  %v485 = vunpack.c.h.b16 %v469
  %v486 = vunpack.c.l.b16 %v470
  %v487 = vunpack.c.h.b16 %v470
  %v488 = vunpack.c.l.b16 %v471
  %v489 = vunpack.c.h.b16 %v471
  %v490 = vunpack.c.l.b16 %v472
  %v491 = vunpack.c.h.b16 %v472
  %v492 = vunpack.c.l.b16 %v473
  %v493 = vunpack.c.h.b16 %v473
  %v494 = vunpack.c.l.b16 %v474
  %v495 = vunpack.c.h.b16 %v474
  %v496 = vpack.c.b16 %v484, %v482
  %v497 = vpack.c.b16 %v485, %v483
  %v498 = vpack.c.b16 %v488, %v486
  %v499 = vpack.c.b16 %v489, %v487
  %v500 = vpack.c.b16 %v492, %v490
  %v501 = vpack.c.b16 %v493, %v491
  %v502 = vpack.c.b16 %v494, %v494
  %v503 = vpack.c.b16 %v495, %v495
  %v509 = vsel %vm211, %v497, 0
  %v512 = vsel %vm211, %v499, 0
  %v515 = vsel %vm211, %v501, 0
  %v518 = vsel %vm211, %v503, 0
  %520 = vmatprep.subr.bf16.mxu0 %v186
  %521 = vmatpush1.bf16.msra.mxu0 %v185
  %522 = vmatprep.subr.bf16.mxu0 %v184
  %523 = vmatpush1.bf16.msra.mxu0 %v183
  %524 = vmatprep.subr.bf16.mxu0 %v182
  %525 = vmatpush1.bf16.msra.mxu0 %v181
  %526 = vmatprep.subr.bf16.mxu0 %v180
  %527 = vmatpush1.bf16.msra.mxu0 %v179
  %528 = vmatprep.subr.bf16.mxu0 %v178
  %529 = vmatpush1.bf16.msra.mxu0 %v177
  %530 = vmatprep.subr.bf16.mxu0 %v176
  %531 = vmatpush1.bf16.msra.mxu0 %v175
  %532 = vmatprep.subr.bf16.mxu0 %v174
  %533 = vmatpush1.bf16.msra.mxu0 %v173
  %534 = vmatprep.subr.bf16.mxu0 %v172
  %535 = vmatpush1.bf16.msra.mxu0 %v171
  %536 = vmatprep.subr.bf16.mxu0 0
  %537 = vmatpush2.bf16.msra.mxu0 0
  %538 = vmatprep.subr.bf16.mxu0 0
  %539 = vmatpush2.bf16.msra.mxu0 0
  %540 = vmatprep.subr.bf16.mxu0 0
  %541 = vmatpush2.bf16.msra.mxu0 0
  %542 = vmatprep.subr.bf16.mxu0 0
  %543 = vmatpush2.bf16.msra.mxu0 0
  %544 = vmatprep.subr.bf16.mxu0 0
  %545 = vmatpush2.bf16.msra.mxu0 0
  %546 = vmatprep.subr.bf16.mxu0 0
  %547 = vmatpush2.bf16.msra.mxu0 0
  %548 = vmatprep.subr.bf16.mxu0 %v190
  %549 = vmatpush2.bf16.msra.mxu0 %v189
  %550 = vmatprep.subr.bf16.mxu0 %v188
  %551 = vmatpush2.bf16.msra.mxu0 %v187
  %552 = vmatprep.mubr.bf16.mxu0 %v509
  %553 = vmatmul.mubr.bf16.gmra.mxu0 %v496
  %v554 = vpop.f32.mrf.mxu0
  %v555 = vadd.f32 %v71, %v554
  %v556 = vpop.f32.mrf.mxu0
  %v557 = vadd.f32 %v75, %v556
  %v558 = vpop.f32.mrf.mxu0
  %v559 = vadd.f32 %v71, %v558
  %v560 = vpop.f32.mrf.mxu0
  %v561 = vadd.f32 %v75, %v560
  %562 = vmatprep.mubr.bf16.mxu0 %v512
  %563 = vmatmul.mubr.bf16.gmra.mxu0 %v498
  %v564 = vpop.f32.mrf.mxu0
  %v565 = vadd.f32 %v71, %v564
  %v566 = vpop.f32.mrf.mxu0
  %v567 = vadd.f32 %v75, %v566
  %v568 = vpop.f32.mrf.mxu0
  %v569 = vadd.f32 %v71, %v568
  %v570 = vpop.f32.mrf.mxu0
  %v571 = vadd.f32 %v75, %v570
  %572 = vmatprep.mubr.bf16.mxu0 %v515
  %573 = vmatmul.mubr.bf16.gmra.mxu0 %v500
  %v574 = vpop.f32.mrf.mxu0
  %v575 = vadd.f32 %v71, %v574
  %v576 = vpop.f32.mrf.mxu0
  %v577 = vadd.f32 %v75, %v576
  %v578 = vpop.f32.mrf.mxu0
  %v579 = vadd.f32 %v71, %v578
  %v580 = vpop.f32.mrf.mxu0
  %v581 = vadd.f32 %v75, %v580
  %582 = vmatprep.mubr.bf16.mxu0 %v518
  %583 = vmatmul.mubr.bf16.gmra.mxu0 %v502
  %v584 = vpop.f32.mrf.mxu0
  %v585 = vadd.f32 %v71, %v584
  %v586 = vpop.f32.mrf.mxu0
  %v587 = vadd.f32 %v75, %v586
  %v588 = vpop.f32.mrf.mxu0
  %v589 = vpop.f32.mrf.mxu0
  %590 = vdwg.mxu0
  %v591 = vmax.f32 %v555, 0.0
  %v592 = vmax.f32 %v557, 0.0
  %v593 = vmax.f32 %v559, 0.0
  %v594 = vmax.f32 %v561, 0.0
  %v595 = vmax.f32 %v565, 0.0
  %v596 = vmax.f32 %v567, 0.0
  %v597 = vmax.f32 %v569, 0.0
  %v598 = vmax.f32 %v571, 0.0
  %v599 = vmax.f32 %v575, 0.0
  %v600 = vmax.f32 %v577, 0.0
  %v601 = vmax.f32 %v579, 0.0
  %v602 = vmax.f32 %v581, 0.0
  %v603 = vmax.f32 %v585, 0.0
  %v604 = vmax.f32 %v587, 0.0
  %v605 = vld [vmem:[%s0 + $0xa8] sm:$0xff]
  %v606 = vld [vmem:[%s0 + $0xb0] sm:$0xff]
  %v607 = vld [vmem:[%s0 + $0xb8] sm:$0xff]
  %v608 = vld [vmem:[%s0 + $0xc0] sm:$0xff]
  %v609 = vld [vmem:[%s0 + $0xc8] sm:$0xff]
  %v610 = vld [vmem:[%s0 + $0xd0] sm:$0xff]
  %v611 = vld [vmem:[%s0 + $0xd8] sm:$0xff]
  %v619 = vunpack.c.l.b16 %v605
  %v620 = vunpack.c.h.b16 %v605
  %v621 = vunpack.c.l.b16 %v606
  %v622 = vunpack.c.h.b16 %v606
  %v623 = vunpack.c.l.b16 %v607
  %v624 = vunpack.c.h.b16 %v607
  %v625 = vunpack.c.l.b16 %v608
  %v626 = vunpack.c.h.b16 %v608
  %v627 = vunpack.c.l.b16 %v609
  %v628 = vunpack.c.h.b16 %v609
  %v629 = vunpack.c.l.b16 %v610
  %v630 = vunpack.c.h.b16 %v610
  %v631 = vunpack.c.l.b16 %v611
  %v632 = vunpack.c.h.b16 %v611
  %v633 = vpack.c.b16 %v621, %v619
  %v634 = vpack.c.b16 %v622, %v620
  %v635 = vpack.c.b16 %v625, %v623
  %v636 = vpack.c.b16 %v626, %v624
  %v637 = vpack.c.b16 %v629, %v627
  %v638 = vpack.c.b16 %v630, %v628
  %v639 = vpack.c.b16 %v631, %v631
  %v640 = vpack.c.b16 %v632, %v632
  %v646 = vsel %vm211, %v634, 0
  %v649 = vsel %vm211, %v636, 0
  %v652 = vsel %vm211, %v638, 0
  %v655 = vsel %vm211, %v640, 0
  %657 = vmatprep.subr.bf16.mxu0 %v186
  %658 = vmatpush1.bf16.msra.mxu0 %v185
  %659 = vmatprep.subr.bf16.mxu0 %v184
  %660 = vmatpush1.bf16.msra.mxu0 %v183
  %661 = vmatprep.subr.bf16.mxu0 %v182
  %662 = vmatpush1.bf16.msra.mxu0 %v181
  %663 = vmatprep.subr.bf16.mxu0 %v180
  %664 = vmatpush1.bf16.msra.mxu0 %v179
  %665 = vmatprep.subr.bf16.mxu0 %v178
  %666 = vmatpush1.bf16.msra.mxu0 %v177
  %667 = vmatprep.subr.bf16.mxu0 %v176
  %668 = vmatpush1.bf16.msra.mxu0 %v175
  %669 = vmatprep.subr.bf16.mxu0 %v174
  %670 = vmatpush1.bf16.msra.mxu0 %v173
  %671 = vmatprep.subr.bf16.mxu0 %v172
  %672 = vmatpush1.bf16.msra.mxu0 %v171
  %673 = vmatprep.subr.bf16.mxu0 0
  %674 = vmatpush2.bf16.msra.mxu0 0
  %675 = vmatprep.subr.bf16.mxu0 0
  %676 = vmatpush2.bf16.msra.mxu0 0
  %677 = vmatprep.subr.bf16.mxu0 0
  %678 = vmatpush2.bf16.msra.mxu0 0
  %679 = vmatprep.subr.bf16.mxu0 0
  %680 = vmatpush2.bf16.msra.mxu0 0
  %681 = vmatprep.subr.bf16.mxu0 0
  %682 = vmatpush2.bf16.msra.mxu0 0
  %683 = vmatprep.subr.bf16.mxu0 0
  %684 = vmatpush2.bf16.msra.mxu0 0
  %685 = vmatprep.subr.bf16.mxu0 %v190
  %686 = vmatpush2.bf16.msra.mxu0 %v189
  %687 = vmatprep.subr.bf16.mxu0 %v188
  %688 = vmatpush2.bf16.msra.mxu0 %v187
  %689 = vmatprep.mubr.bf16.mxu0 %v646
  %690 = vmatmul.mubr.bf16.gmra.mxu0 %v633
  %v691 = vpop.f32.mrf.mxu0
  %v692 = vadd.f32 %v71, %v691
  %v693 = vpop.f32.mrf.mxu0
  %v694 = vadd.f32 %v75, %v693
  %v695 = vpop.f32.mrf.mxu0
  %v696 = vadd.f32 %v71, %v695
  %v697 = vpop.f32.mrf.mxu0
  %v698 = vadd.f32 %v75, %v697
  %699 = vmatprep.mubr.bf16.mxu0 %v649
  %700 = vmatmul.mubr.bf16.gmra.mxu0 %v635
  %v701 = vpop.f32.mrf.mxu0
  %v702 = vadd.f32 %v71, %v701
  %v703 = vpop.f32.mrf.mxu0
  %v704 = vadd.f32 %v75, %v703
  %v705 = vpop.f32.mrf.mxu0
  %v706 = vadd.f32 %v71, %v705
  %v707 = vpop.f32.mrf.mxu0
  %v708 = vadd.f32 %v75, %v707
  %709 = vmatprep.mubr.bf16.mxu0 %v652
  %710 = vmatmul.mubr.bf16.gmra.mxu0 %v637
  %v711 = vpop.f32.mrf.mxu0
  %v712 = vadd.f32 %v71, %v711
  %v713 = vpop.f32.mrf.mxu0
  %v714 = vadd.f32 %v75, %v713
  %v715 = vpop.f32.mrf.mxu0
  %v716 = vadd.f32 %v71, %v715
  %v717 = vpop.f32.mrf.mxu0
  %v718 = vadd.f32 %v75, %v717
  %719 = vmatprep.mubr.bf16.mxu0 %v655
  %720 = vmatmul.mubr.bf16.gmra.mxu0 %v639
  %v721 = vpop.f32.mrf.mxu0
  %v722 = vadd.f32 %v71, %v721
  %v723 = vpop.f32.mrf.mxu0
  %v724 = vadd.f32 %v75, %v723
  %v725 = vpop.f32.mrf.mxu0
  %v726 = vpop.f32.mrf.mxu0
  %727 = vdwg.mxu0
  %v728 = vmax.f32 %v692, 0.0
  %v729 = vmax.f32 %v694, 0.0
  %v730 = vmax.f32 %v696, 0.0
  %v731 = vmax.f32 %v698, 0.0
  %v732 = vmax.f32 %v702, 0.0
  %v733 = vmax.f32 %v704, 0.0
  %v734 = vmax.f32 %v706, 0.0
  %v735 = vmax.f32 %v708, 0.0
  %v736 = vmax.f32 %v712, 0.0
  %v737 = vmax.f32 %v714, 0.0
  %v738 = vmax.f32 %v716, 0.0
  %v739 = vmax.f32 %v718, 0.0
  %v740 = vmax.f32 %v722, 0.0
  %v741 = vmax.f32 %v724, 0.0
  %v742 = vadd.f32 %v591, %v728
  %v743 = vadd.f32 %v592, %v729
  %v744 = vadd.f32 %v593, %v730
  %v745 = vadd.f32 %v594, %v731
  %v746 = vadd.f32 %v595, %v732
  %v747 = vadd.f32 %v596, %v733
  %v748 = vadd.f32 %v597, %v734
  %v749 = vadd.f32 %v598, %v735
  %v750 = vadd.f32 %v599, %v736
  %v751 = vadd.f32 %v600, %v737
  %v752 = vadd.f32 %v601, %v738
  %v753 = vadd.f32 %v602, %v739
  %v754 = vadd.f32 %v603, %v740
  %v755 = vadd.f32 %v604, %v741
  %v756 = vpack.c.bf16 %v744, %v742
  %v757 = vpack.c.bf16 %v745, %v743
  %v758 = vpack.c.bf16 %v748, %v746
  %v759 = vpack.c.bf16 %v749, %v747
  %v760 = vpack.c.bf16 %v752, %v750
  %v761 = vpack.c.bf16 %v753, %v751
  %v762 = vpack.c.bf16 %v754, %v754
  %v763 = vpack.c.bf16 %v755, %v755
  %v764 = vld [vmem:[%s3] sm:$0xff]
  %v765 = vld [vmem:[%s3 + $0x8] sm:$0xff]
  %v766 = vld [vmem:[%s3 + $0x10] sm:$0xff]
  %v767 = vld [vmem:[%s3 + $0x18] sm:$0xff]
  %v768 = vld [vmem:[%s3 + $0x20] sm:$0xff]
  %v769 = vld [vmem:[%s3 + $0x28] sm:$0xff]
  %v770 = vld [vmem:[%s3 + $0x30] sm:$0xff]
  %v771 = vld [vmem:[%s3 + $0x38] sm:$0xff]
  %v772 = vld [vmem:[%s3 + $0x40] sm:$0xff]
  %v773 = vld [vmem:[%s3 + $0x48] sm:$0xff]
  %v774 = vld [vmem:[%s3 + $0x50] sm:$0xff]
  %v775 = vld [vmem:[%s3 + $0x58] sm:$0xff]
  %v776 = vld [vmem:[%s3 + $0x60] sm:$0xff]
  %v777 = vld [vmem:[%s3 + $0x68] sm:$0xff]
  %v778 = vld [vmem:[%s3 + $0x70] sm:$0xff]
  %v779 = vld [vmem:[%s3 + $0x78] sm:$0xff]
  %v780 = vld [vmem:[%s3 + $0x80] sm:$0xff]
  %v781 = vld [vmem:[%s3 + $0x88] sm:$0xff]
  %v782 = vld [vmem:[%s3 + $0x90] sm:$0xff]
  %v783 = vld [vmem:[%s3 + $0x98] sm:$0xff]
  %v784 = vld [vmem:[%s3 + $0xa0] sm:$0xff]
  %s785 = scalar_lea.vmem %s3, 168
  %v786 = vld [vmem:[%s785] sm:$0xff]
  %v787 = vld [vmem:[%s785 + $0x8] sm:$0xff]
  %v788 = vld [vmem:[%s785 + $0x10] sm:$0xff]
  %v789 = vld [vmem:[%s785 + $0x18] sm:$0xff]
  %v790 = vld [vmem:[%s785 + $0x20] sm:$0xff]
  %v791 = vld [vmem:[%s785 + $0x28] sm:$0xff]
  %v792 = vld [vmem:[%s785 + $0x30] sm:$0xff]
  %v793 = vld [vmem:[%s785 + $0x38] sm:$0xff]
  %v794 = vld [vmem:[%s785 + $0x40] sm:$0xff]
  %v795 = vld [vmem:[%s785 + $0x48] sm:$0xff]
  %v796 = vld [vmem:[%s785 + $0x50] sm:$0xff]
  %v797 = vld [vmem:[%s785 + $0x58] sm:$0xff]
  %v798 = vld [vmem:[%s785 + $0x60] sm:$0xff]
  %v799 = vld [vmem:[%s785 + $0x68] sm:$0xff]
  %v800 = vld [vmem:[%s785 + $0x70] sm:$0xff]
  %v801 = vld [vmem:[%s785 + $0x78] sm:$0xff]
  %v802 = vld [vmem:[%s785 + $0x80] sm:$0xff]
  %v803 = vld [vmem:[%s785 + $0x88] sm:$0xff]
  %v804 = vld [vmem:[%s785 + $0x90] sm:$0xff]
  %v805 = vld [vmem:[%s785 + $0x98] sm:$0xff]
  %v806 = vld [vmem:[%s785 + $0xa0] sm:$0xff]
  %v828 = vunpack.c.l.b16 %v786
  %v829 = vunpack.c.h.b16 %v786
  %v830 = vunpack.c.l.b16 %v787
  %v831 = vunpack.c.h.b16 %v787
  %v832 = vunpack.c.l.b16 %v788
  %v833 = vunpack.c.h.b16 %v788
  %v834 = vunpack.c.l.b16 %v789
  %v835 = vunpack.c.h.b16 %v789
  %v836 = vunpack.c.l.b16 %v790
  %v837 = vunpack.c.h.b16 %v790
  %v838 = vunpack.c.l.b16 %v791
  %v839 = vunpack.c.h.b16 %v791
  %v840 = vunpack.c.l.b16 %v792
  %v841 = vunpack.c.h.b16 %v792
  %v842 = vunpack.c.l.b16 %v793
  %v843 = vunpack.c.h.b16 %v793
  %v844 = vunpack.c.l.b16 %v794
  %v845 = vunpack.c.h.b16 %v794
  %v846 = vunpack.c.l.b16 %v795
  %v847 = vunpack.c.h.b16 %v795
  %v848 = vunpack.c.l.b16 %v796
  %v849 = vunpack.c.h.b16 %v796
  %v850 = vunpack.c.l.b16 %v797
  %v851 = vunpack.c.h.b16 %v797
  %v852 = vunpack.c.l.b16 %v798
  %v853 = vunpack.c.h.b16 %v798
  %v854 = vunpack.c.l.b16 %v799
  %v855 = vunpack.c.h.b16 %v799
  %v856 = vunpack.c.l.b16 %v800
  %v857 = vunpack.c.h.b16 %v800
  %v858 = vunpack.c.l.b16 %v801
  %v859 = vunpack.c.h.b16 %v801
  %v860 = vunpack.c.l.b16 %v802
  %v861 = vunpack.c.h.b16 %v802
  %v862 = vunpack.c.l.b16 %v803
  %v863 = vunpack.c.h.b16 %v803
  %v864 = vunpack.c.l.b16 %v804
  %v865 = vunpack.c.h.b16 %v804
  %v866 = vunpack.c.l.b16 %v805
  %v867 = vunpack.c.h.b16 %v805
  %v868 = vunpack.c.l.b16 %v806
  %v869 = vunpack.c.h.b16 %v806
  %v870 = vpack.c.b16 %v830, %v828
  %v871 = vpack.c.b16 %v831, %v829
  %v872 = vpack.c.b16 %v834, %v832
  %v873 = vpack.c.b16 %v835, %v833
  %v874 = vpack.c.b16 %v838, %v836
  %v875 = vpack.c.b16 %v839, %v837
  %v876 = vpack.c.b16 %v842, %v840
  %v877 = vpack.c.b16 %v843, %v841
  %v878 = vpack.c.b16 %v846, %v844
  %v879 = vpack.c.b16 %v847, %v845
  %v880 = vpack.c.b16 %v850, %v848
  %v881 = vpack.c.b16 %v851, %v849
  %v882 = vpack.c.b16 %v854, %v852
  %v883 = vpack.c.b16 %v855, %v853
  %v884 = vpack.c.b16 %v858, %v856
  %v885 = vpack.c.b16 %v859, %v857
  %v886 = vpack.c.b16 %v862, %v860
  %v887 = vpack.c.b16 %v863, %v861
  %v888 = vpack.c.b16 %v866, %v864
  %v889 = vpack.c.b16 %v867, %v865
  %v890 = vpack.c.b16 %v868, %v868
  %v891 = vpack.c.b16 %v869, %v869
  %vm912 = vcmask 326656
  %v914 = vsel %vm912, %v757, 0
  %v917 = vsel %vm912, %v759, 0
  %v920 = vsel %vm912, %v761, 0
  %vm922 = vcmask 1043456
  %v924 = vsel %vm922, %v890, 0
  %v927 = vsel %vm922, %v891, 0
  %929 = vmatprep.subr.bf16.mxu0 %v885
  %930 = vmatpush1.bf16.msra.mxu0 %v884
  %931 = vmatprep.subr.bf16.mxu0 %v883
  %932 = vmatpush1.bf16.msra.mxu0 %v882
  %933 = vmatprep.subr.bf16.mxu0 %v881
  %934 = vmatpush1.bf16.msra.mxu0 %v880
  %935 = vmatprep.subr.bf16.mxu0 %v879
  %936 = vmatpush1.bf16.msra.mxu0 %v878
  %937 = vmatprep.subr.bf16.mxu0 %v877
  %938 = vmatpush1.bf16.msra.mxu0 %v876
  %939 = vmatprep.subr.bf16.mxu0 %v875
  %940 = vmatpush1.bf16.msra.mxu0 %v874
  %941 = vmatprep.subr.bf16.mxu0 %v873
  %942 = vmatpush1.bf16.msra.mxu0 %v872
  %943 = vmatprep.subr.bf16.mxu0 %v871
  %944 = vmatpush1.bf16.msra.mxu0 %v870
  %945 = vmatprep.subr.bf16.mxu0 0
  %946 = vmatpush2.bf16.msra.mxu0 0
  %947 = vmatprep.subr.bf16.mxu0 0
  %948 = vmatpush2.bf16.msra.mxu0 0
  %949 = vmatprep.subr.bf16.mxu0 0
  %950 = vmatpush2.bf16.msra.mxu0 0
  %951 = vmatprep.subr.bf16.mxu0 0
  %952 = vmatpush2.bf16.msra.mxu0 0
  %953 = vmatprep.subr.bf16.mxu0 0
  %954 = vmatpush2.bf16.msra.mxu0 0
  %955 = vmatprep.subr.bf16.mxu0 %v927
  %956 = vmatpush2.bf16.msra.mxu0 %v924
  %957 = vmatprep.subr.bf16.mxu0 %v889
  %958 = vmatpush2.bf16.msra.mxu0 %v888
  %959 = vmatprep.subr.bf16.mxu0 %v887
  %960 = vmatpush2.bf16.msra.mxu0 %v886
  %961 = vmatprep.mubr.bf16.mxu0 %v914
  %962 = vmatmul.mubr.bf16.gmra.mxu0 %v756
  %v963 = vpop.f32.mrf.mxu0
  %v964 = vadd.f32 0.0, %v963
  %v965 = vpop.f32.mrf.mxu0
  %v966 = vadd.f32 0.0, %v965
  %v967 = vpop.f32.mrf.mxu0
  %v968 = vadd.f32 0.0, %v967
  %v969 = vpop.f32.mrf.mxu0
  %v970 = vadd.f32 0.0, %v969
  %971 = vmatprep.mubr.bf16.mxu0 %v917
  %972 = vmatmul.mubr.bf16.gmra.mxu0 %v758
  %v973 = vpop.f32.mrf.mxu0
  %v974 = vadd.f32 0.0, %v973
  %v975 = vpop.f32.mrf.mxu0
  %v976 = vadd.f32 0.0, %v975
  %v977 = vpop.f32.mrf.mxu0
  %v978 = vadd.f32 0.0, %v977
  %v979 = vpop.f32.mrf.mxu0
  %v980 = vadd.f32 0.0, %v979
  %981 = vmatprep.mubr.bf16.mxu0 %v920
  %982 = vmatmul.mubr.bf16.gmra.mxu0 %v760
  %v983 = vpop.f32.mrf.mxu0
  %v984 = vadd.f32 0.0, %v983
  %v985 = vpop.f32.mrf.mxu0
  %v986 = vadd.f32 0.0, %v985
  %v987 = vpop.f32.mrf.mxu0
  %v988 = vpop.f32.mrf.mxu0
  %989 = vdwg.mxu0
  %v1011 = vunpack.c.l.b16 %v764
  %v1012 = vunpack.c.h.b16 %v764
  %v1013 = vunpack.c.l.b16 %v765
  %v1014 = vunpack.c.h.b16 %v765
  %v1015 = vunpack.c.l.b16 %v766
  %v1016 = vunpack.c.h.b16 %v766
  %v1017 = vunpack.c.l.b16 %v767
  %v1018 = vunpack.c.h.b16 %v767
  %v1019 = vunpack.c.l.b16 %v768
  %v1020 = vunpack.c.h.b16 %v768
  %v1021 = vunpack.c.l.b16 %v769
  %v1022 = vunpack.c.h.b16 %v769
  %v1023 = vunpack.c.l.b16 %v770
  %v1024 = vunpack.c.h.b16 %v770
  %v1025 = vunpack.c.l.b16 %v771
  %v1026 = vunpack.c.h.b16 %v771
  %v1027 = vunpack.c.l.b16 %v772
  %v1028 = vunpack.c.h.b16 %v772
  %v1029 = vunpack.c.l.b16 %v773
  %v1030 = vunpack.c.h.b16 %v773
  %v1031 = vunpack.c.l.b16 %v774
  %v1032 = vunpack.c.h.b16 %v774
  %v1033 = vunpack.c.l.b16 %v775
  %v1034 = vunpack.c.h.b16 %v775
  %v1035 = vunpack.c.l.b16 %v776
  %v1036 = vunpack.c.h.b16 %v776
  %v1037 = vunpack.c.l.b16 %v777
  %v1038 = vunpack.c.h.b16 %v777
  %v1039 = vunpack.c.l.b16 %v778
  %v1040 = vunpack.c.h.b16 %v778
  %v1041 = vunpack.c.l.b16 %v779
  %v1042 = vunpack.c.h.b16 %v779
  %v1043 = vunpack.c.l.b16 %v780
  %v1044 = vunpack.c.h.b16 %v780
  %v1045 = vunpack.c.l.b16 %v781
  %v1046 = vunpack.c.h.b16 %v781
  %v1047 = vunpack.c.l.b16 %v782
  %v1048 = vunpack.c.h.b16 %v782
  %v1049 = vunpack.c.l.b16 %v783
  %v1050 = vunpack.c.h.b16 %v783
  %v1051 = vunpack.c.l.b16 %v784
  %v1052 = vunpack.c.h.b16 %v784
  %v1053 = vpack.c.b16 %v1013, %v1011
  %v1054 = vpack.c.b16 %v1014, %v1012
  %v1055 = vpack.c.b16 %v1017, %v1015
  %v1056 = vpack.c.b16 %v1018, %v1016
  %v1057 = vpack.c.b16 %v1021, %v1019
  %v1058 = vpack.c.b16 %v1022, %v1020
  %v1059 = vpack.c.b16 %v1025, %v1023
  %v1060 = vpack.c.b16 %v1026, %v1024
  %v1061 = vpack.c.b16 %v1029, %v1027
  %v1062 = vpack.c.b16 %v1030, %v1028
  %v1063 = vpack.c.b16 %v1033, %v1031
  %v1064 = vpack.c.b16 %v1034, %v1032
  %v1065 = vpack.c.b16 %v1037, %v1035
  %v1066 = vpack.c.b16 %v1038, %v1036
  %v1067 = vpack.c.b16 %v1041, %v1039
  %v1068 = vpack.c.b16 %v1042, %v1040
  %v1069 = vpack.c.b16 %v1045, %v1043
  %v1070 = vpack.c.b16 %v1046, %v1044
  %v1071 = vpack.c.b16 %v1049, %v1047
  %v1072 = vpack.c.b16 %v1050, %v1048
  %v1073 = vpack.c.b16 %v1051, %v1051
  %v1074 = vpack.c.b16 %v1052, %v1052
  %v1096 = vsel %vm912, %v461, 0
  %v1099 = vsel %vm912, %v463, 0
  %v1102 = vsel %vm912, %v465, 0
  %v1105 = vsel %vm922, %v1073, 0
  %v1108 = vsel %vm922, %v1074, 0
  %1110 = vmatprep.subr.bf16.mxu0 %v1068
  %1111 = vmatpush1.bf16.msra.mxu0 %v1067
  %1112 = vmatprep.subr.bf16.mxu0 %v1066
  %1113 = vmatpush1.bf16.msra.mxu0 %v1065
  %1114 = vmatprep.subr.bf16.mxu0 %v1064
  %1115 = vmatpush1.bf16.msra.mxu0 %v1063
  %1116 = vmatprep.subr.bf16.mxu0 %v1062
  %1117 = vmatpush1.bf16.msra.mxu0 %v1061
  %1118 = vmatprep.subr.bf16.mxu0 %v1060
  %1119 = vmatpush1.bf16.msra.mxu0 %v1059
  %1120 = vmatprep.subr.bf16.mxu0 %v1058
  %1121 = vmatpush1.bf16.msra.mxu0 %v1057
  %1122 = vmatprep.subr.bf16.mxu0 %v1056
  %1123 = vmatpush1.bf16.msra.mxu0 %v1055
  %1124 = vmatprep.subr.bf16.mxu0 %v1054
  %1125 = vmatpush1.bf16.msra.mxu0 %v1053
  %1126 = vmatprep.subr.bf16.mxu0 0
  %1127 = vmatpush2.bf16.msra.mxu0 0
  %1128 = vmatprep.subr.bf16.mxu0 0
  %1129 = vmatpush2.bf16.msra.mxu0 0
  %1130 = vmatprep.subr.bf16.mxu0 0
  %1131 = vmatpush2.bf16.msra.mxu0 0
  %1132 = vmatprep.subr.bf16.mxu0 0
  %1133 = vmatpush2.bf16.msra.mxu0 0
  %1134 = vmatprep.subr.bf16.mxu0 0
  %1135 = vmatpush2.bf16.msra.mxu0 0
  %1136 = vmatprep.subr.bf16.mxu0 %v1108
  %1137 = vmatpush2.bf16.msra.mxu0 %v1105
  %1138 = vmatprep.subr.bf16.mxu0 %v1072
  %1139 = vmatpush2.bf16.msra.mxu0 %v1071
  %1140 = vmatprep.subr.bf16.mxu0 %v1070
  %1141 = vmatpush2.bf16.msra.mxu0 %v1069
  %1142 = vmatprep.mubr.bf16.mxu0 %v1096
  %1143 = vmatmul.mubr.bf16.gmra.mxu0 %v460
  %v1144 = vpop.f32.mrf.mxu0
  %v1145 = vadd.f32 %v964, %v1144
  %v1146 = vpop.f32.mrf.mxu0
  %v1147 = vadd.f32 %v966, %v1146
  %v1148 = vpop.f32.mrf.mxu0
  %v1149 = vadd.f32 %v968, %v1148
  %v1150 = vpop.f32.mrf.mxu0
  %v1151 = vadd.f32 %v970, %v1150
  %1152 = vmatprep.mubr.bf16.mxu0 %v1099
  %1153 = vmatmul.mubr.bf16.gmra.mxu0 %v462
  %v1154 = vpop.f32.mrf.mxu0
  %v1155 = vadd.f32 %v974, %v1154
  %v1156 = vpop.f32.mrf.mxu0
  %v1157 = vadd.f32 %v976, %v1156
  %v1158 = vpop.f32.mrf.mxu0
  %v1159 = vadd.f32 %v978, %v1158
  %v1160 = vpop.f32.mrf.mxu0
  %v1161 = vadd.f32 %v980, %v1160
  %1162 = vmatprep.mubr.bf16.mxu0 %v1102
  %1163 = vmatmul.mubr.bf16.gmra.mxu0 %v464
  %v1164 = vpop.f32.mrf.mxu0
  %v1165 = vadd.f32 %v984, %v1164
  %v1166 = vpop.f32.mrf.mxu0
  %v1167 = vadd.f32 %v986, %v1166
  %v1168 = vpop.f32.mrf.mxu0
  %v1169 = vpop.f32.mrf.mxu0
  %1170 = vdwg.mxu0
  %s1171 = scalar_lea.vmem %s3, 336
  %v1172 = vld [vmem:[%s1171] sm:$0xff]
  %v1173 = vld [vmem:[%s1171 + $0x8] sm:$0xff]
  %v1174 = vld [vmem:[%s1171 + $0x10] sm:$0xff]
  %v1175 = vld [vmem:[%s1171 + $0x18] sm:$0xff]
  %v1176 = vld [vmem:[%s1171 + $0x20] sm:$0xff]
  %v1177 = vld [vmem:[%s1171 + $0x28] sm:$0xff]
  %v1178 = vld [vmem:[%s1171 + $0x30] sm:$0xff]
  %v1179 = vld [vmem:[%s1171 + $0x38] sm:$0xff]
  %v1180 = vld [vmem:[%s1171 + $0x40] sm:$0xff]
  %v1181 = vld [vmem:[%s1171 + $0x48] sm:$0xff]
  %v1182 = vld [vmem:[%s1171 + $0x50] sm:$0xff]
  %v1183 = vld [vmem:[%s1171 + $0x58] sm:$0xff]
  %v1184 = vld [vmem:[%s1171 + $0x60] sm:$0xff]
  %v1185 = vld [vmem:[%s1171 + $0x68] sm:$0xff]
  %v1186 = vld [vmem:[%s1171 + $0x70] sm:$0xff]
  %v1187 = vld [vmem:[%s1171 + $0x78] sm:$0xff]
  %v1188 = vld [vmem:[%s1171 + $0x80] sm:$0xff]
  %v1189 = vld [vmem:[%s1171 + $0x88] sm:$0xff]
  %v1190 = vld [vmem:[%s1171 + $0x90] sm:$0xff]
  %v1191 = vld [vmem:[%s1171 + $0x98] sm:$0xff]
  %v1192 = vld [vmem:[%s1171 + $0xa0] sm:$0xff]
  %vm1199 = vcmask 1043456
  %v1200 = vrot.slane %v460, 4
  %v1201 = vrot.slane %v462, 4
  %v1202 = vsel %vm1199, %v1200, %v1201
  %v1203 = vrot.slane %v461, 4
  %v1204 = vrot.slane %v463, 4
  %v1205 = vsel %vm1199, %v1203, %v1204
  %v1206 = vrot.slane %v464, 4
  %v1207 = vsel %vm1199, %v1201, %v1206
  %v1208 = vrot.slane %v465, 4
  %v1209 = vsel %vm1199, %v1204, %v1208
  %v1234 = vunpack.c.l.b16 %v1172
  %v1235 = vunpack.c.h.b16 %v1172
  %v1236 = vunpack.c.l.b16 %v1173
  %v1237 = vunpack.c.h.b16 %v1173
  %v1238 = vunpack.c.l.b16 %v1174
  %v1239 = vunpack.c.h.b16 %v1174
  %v1240 = vunpack.c.l.b16 %v1175
  %v1241 = vunpack.c.h.b16 %v1175
  %v1242 = vunpack.c.l.b16 %v1176
  %v1243 = vunpack.c.h.b16 %v1176
  %v1244 = vunpack.c.l.b16 %v1177
  %v1245 = vunpack.c.h.b16 %v1177
  %v1246 = vunpack.c.l.b16 %v1178
  %v1247 = vunpack.c.h.b16 %v1178
  %v1248 = vunpack.c.l.b16 %v1179
  %v1249 = vunpack.c.h.b16 %v1179
  %v1250 = vunpack.c.l.b16 %v1180
  %v1251 = vunpack.c.h.b16 %v1180
  %v1252 = vunpack.c.l.b16 %v1181
  %v1253 = vunpack.c.h.b16 %v1181
  %v1254 = vunpack.c.l.b16 %v1182
  %v1255 = vunpack.c.h.b16 %v1182
  %v1256 = vunpack.c.l.b16 %v1183
  %v1257 = vunpack.c.h.b16 %v1183
  %v1258 = vunpack.c.l.b16 %v1184
  %v1259 = vunpack.c.h.b16 %v1184
  %v1260 = vunpack.c.l.b16 %v1185
  %v1261 = vunpack.c.h.b16 %v1185
  %v1262 = vunpack.c.l.b16 %v1186
  %v1263 = vunpack.c.h.b16 %v1186
  %v1264 = vunpack.c.l.b16 %v1187
  %v1265 = vunpack.c.h.b16 %v1187
  %v1266 = vunpack.c.l.b16 %v1188
  %v1267 = vunpack.c.h.b16 %v1188
  %v1268 = vunpack.c.l.b16 %v1189
  %v1269 = vunpack.c.h.b16 %v1189
  %v1270 = vunpack.c.l.b16 %v1190
  %v1271 = vunpack.c.h.b16 %v1190
  %v1272 = vunpack.c.l.b16 %v1191
  %v1273 = vunpack.c.h.b16 %v1191
  %v1274 = vunpack.c.l.b16 %v1192
  %v1275 = vunpack.c.h.b16 %v1192
  %v1276 = vpack.c.b16 %v1236, %v1234
  %v1277 = vpack.c.b16 %v1237, %v1235
  %v1278 = vpack.c.b16 %v1240, %v1238
  %v1279 = vpack.c.b16 %v1241, %v1239
  %v1280 = vpack.c.b16 %v1244, %v1242
  %v1281 = vpack.c.b16 %v1245, %v1243
  %v1282 = vpack.c.b16 %v1248, %v1246
  %v1283 = vpack.c.b16 %v1249, %v1247
  %v1284 = vpack.c.b16 %v1252, %v1250
  %v1285 = vpack.c.b16 %v1253, %v1251
  %v1286 = vpack.c.b16 %v1256, %v1254
  %v1287 = vpack.c.b16 %v1257, %v1255
  %v1288 = vpack.c.b16 %v1260, %v1258
  %v1289 = vpack.c.b16 %v1261, %v1259
  %v1290 = vpack.c.b16 %v1264, %v1262
  %v1291 = vpack.c.b16 %v1265, %v1263
  %v1292 = vpack.c.b16 %v1268, %v1266
  %v1293 = vpack.c.b16 %v1269, %v1267
  %v1294 = vpack.c.b16 %v1272, %v1270
  %v1295 = vpack.c.b16 %v1273, %v1271
  %v1296 = vpack.c.b16 %v1274, %v1274
  %v1297 = vpack.c.b16 %v1275, %v1275
  %v1319 = vsel %vm912, %v1205, 0
  %v1322 = vsel %vm912, %v1209, 0
  %v1325 = vsel %vm912, %v1208, 0
  %v1328 = vsel %vm922, %v1296, 0
  %v1331 = vsel %vm922, %v1297, 0
  %1333 = vmatprep.subr.bf16.mxu0 %v1291
  %1334 = vmatpush1.bf16.msra.mxu0 %v1290
  %1335 = vmatprep.subr.bf16.mxu0 %v1289
  %1336 = vmatpush1.bf16.msra.mxu0 %v1288
  %1337 = vmatprep.subr.bf16.mxu0 %v1287
  %1338 = vmatpush1.bf16.msra.mxu0 %v1286
  %1339 = vmatprep.subr.bf16.mxu0 %v1285
  %1340 = vmatpush1.bf16.msra.mxu0 %v1284
  %1341 = vmatprep.subr.bf16.mxu0 %v1283
  %1342 = vmatpush1.bf16.msra.mxu0 %v1282
  %1343 = vmatprep.subr.bf16.mxu0 %v1281
  %1344 = vmatpush1.bf16.msra.mxu0 %v1280
  %1345 = vmatprep.subr.bf16.mxu0 %v1279
  %1346 = vmatpush1.bf16.msra.mxu0 %v1278
  %1347 = vmatprep.subr.bf16.mxu0 %v1277
  %1348 = vmatpush1.bf16.msra.mxu0 %v1276
  %1349 = vmatprep.subr.bf16.mxu0 0
  %1350 = vmatpush2.bf16.msra.mxu0 0
  %1351 = vmatprep.subr.bf16.mxu0 0
  %1352 = vmatpush2.bf16.msra.mxu0 0
  %1353 = vmatprep.subr.bf16.mxu0 0
  %1354 = vmatpush2.bf16.msra.mxu0 0
  %1355 = vmatprep.subr.bf16.mxu0 0
  %1356 = vmatpush2.bf16.msra.mxu0 0
  %1357 = vmatprep.subr.bf16.mxu0 0
  %1358 = vmatpush2.bf16.msra.mxu0 0
  %1359 = vmatprep.subr.bf16.mxu0 %v1331
  %1360 = vmatpush2.bf16.msra.mxu0 %v1328
  %1361 = vmatprep.subr.bf16.mxu0 %v1295
  %1362 = vmatpush2.bf16.msra.mxu0 %v1294
  %1363 = vmatprep.subr.bf16.mxu0 %v1293
  %1364 = vmatpush2.bf16.msra.mxu0 %v1292
  %1365 = vmatprep.mubr.bf16.mxu0 %v1319
  %1366 = vmatmul.mubr.bf16.gmra.mxu0 %v1202
  %v1367 = vpop.f32.mrf.mxu0
  %v1368 = vadd.f32 0.0, %v1367
  %v1369 = vpop.f32.mrf.mxu0
  %v1370 = vadd.f32 0.0, %v1369
  %v1371 = vpop.f32.mrf.mxu0
  %v1372 = vadd.f32 0.0, %v1371
  %v1373 = vpop.f32.mrf.mxu0
  %v1374 = vadd.f32 0.0, %v1373
  %1375 = vmatprep.mubr.bf16.mxu0 %v1322
  %1376 = vmatmul.mubr.bf16.gmra.mxu0 %v1207
  %v1377 = vpop.f32.mrf.mxu0
  %v1378 = vadd.f32 0.0, %v1377
  %v1379 = vpop.f32.mrf.mxu0
  %v1380 = vadd.f32 0.0, %v1379
  %v1381 = vpop.f32.mrf.mxu0
  %v1382 = vadd.f32 0.0, %v1381
  %v1383 = vpop.f32.mrf.mxu0
  %v1384 = vadd.f32 0.0, %v1383
  %1385 = vmatprep.mubr.bf16.mxu0 %v1325
  %1386 = vmatmul.mubr.bf16.gmra.mxu0 %v1206
  %v1387 = vpop.f32.mrf.mxu0
  %v1388 = vadd.f32 0.0, %v1387
  %v1389 = vpop.f32.mrf.mxu0
  %v1390 = vadd.f32 0.0, %v1389
  %v1391 = vpop.f32.mrf.mxu0
  %v1392 = vpop.f32.mrf.mxu0
  %1393 = vdwg.mxu0
  %v1394 = vadd.f32 %v1145, %v1368
  %v1395 = vadd.f32 %v1147, %v1370
  %v1396 = vadd.f32 %v1149, %v1372
  %v1397 = vadd.f32 %v1151, %v1374
  %v1398 = vadd.f32 %v1155, %v1378
  %v1399 = vadd.f32 %v1157, %v1380
  %v1400 = vadd.f32 %v1159, %v1382
  %v1401 = vadd.f32 %v1161, %v1384
  %v1402 = vadd.f32 %v1165, %v1388
  %v1403 = vadd.f32 %v1167, %v1390
  %s1404 = scalar_lea.vmem %s3, 504
  %v1405 = vld [vmem:[%s1404] sm:$0xff]
  %v1406 = vld [vmem:[%s1404 + $0x8] sm:$0xff]
  %v1407 = vld [vmem:[%s1404 + $0x10] sm:$0xff]
  %v1408 = vld [vmem:[%s1404 + $0x18] sm:$0xff]
  %v1409 = vld [vmem:[%s1404 + $0x20] sm:$0xff]
  %v1410 = vld [vmem:[%s1404 + $0x28] sm:$0xff]
  %v1411 = vld [vmem:[%s1404 + $0x30] sm:$0xff]
  %v1412 = vld [vmem:[%s1404 + $0x38] sm:$0xff]
  %v1413 = vld [vmem:[%s1404 + $0x40] sm:$0xff]
  %v1414 = vld [vmem:[%s1404 + $0x48] sm:$0xff]
  %v1415 = vld [vmem:[%s1404 + $0x50] sm:$0xff]
  %v1416 = vld [vmem:[%s1404 + $0x58] sm:$0xff]
  %v1417 = vld [vmem:[%s1404 + $0x60] sm:$0xff]
  %v1418 = vld [vmem:[%s1404 + $0x68] sm:$0xff]
  %v1419 = vld [vmem:[%s1404 + $0x70] sm:$0xff]
  %v1420 = vld [vmem:[%s1404 + $0x78] sm:$0xff]
  %v1421 = vld [vmem:[%s1404 + $0x80] sm:$0xff]
  %v1422 = vld [vmem:[%s1404 + $0x88] sm:$0xff]
  %v1423 = vld [vmem:[%s1404 + $0x90] sm:$0xff]
  %v1424 = vld [vmem:[%s1404 + $0x98] sm:$0xff]
  %v1425 = vld [vmem:[%s1404 + $0xa0] sm:$0xff]
  %v1432 = vrot.slane %v756, 4
  %v1433 = vrot.slane %v758, 4
  %v1434 = vsel %vm1199, %v1432, %v1433
  %v1435 = vrot.slane %v757, 4
  %v1436 = vrot.slane %v759, 4
  %v1437 = vsel %vm1199, %v1435, %v1436
  %v1438 = vrot.slane %v760, 4
  %v1439 = vsel %vm1199, %v1433, %v1438
  %v1440 = vrot.slane %v761, 4
  %v1441 = vsel %vm1199, %v1436, %v1440
  %v1466 = vunpack.c.l.b16 %v1405
  %v1467 = vunpack.c.h.b16 %v1405
  %v1468 = vunpack.c.l.b16 %v1406
  %v1469 = vunpack.c.h.b16 %v1406
  %v1470 = vunpack.c.l.b16 %v1407
  %v1471 = vunpack.c.h.b16 %v1407
  %v1472 = vunpack.c.l.b16 %v1408
  %v1473 = vunpack.c.h.b16 %v1408
  %v1474 = vunpack.c.l.b16 %v1409
  %v1475 = vunpack.c.h.b16 %v1409
  %v1476 = vunpack.c.l.b16 %v1410
  %v1477 = vunpack.c.h.b16 %v1410
  %v1478 = vunpack.c.l.b16 %v1411
  %v1479 = vunpack.c.h.b16 %v1411
  %v1480 = vunpack.c.l.b16 %v1412
  %v1481 = vunpack.c.h.b16 %v1412
  %v1482 = vunpack.c.l.b16 %v1413
  %v1483 = vunpack.c.h.b16 %v1413
  %v1484 = vunpack.c.l.b16 %v1414
  %v1485 = vunpack.c.h.b16 %v1414
  %v1486 = vunpack.c.l.b16 %v1415
  %v1487 = vunpack.c.h.b16 %v1415
  %v1488 = vunpack.c.l.b16 %v1416
  %v1489 = vunpack.c.h.b16 %v1416
  %v1490 = vunpack.c.l.b16 %v1417
  %v1491 = vunpack.c.h.b16 %v1417
  %v1492 = vunpack.c.l.b16 %v1418
  %v1493 = vunpack.c.h.b16 %v1418
  %v1494 = vunpack.c.l.b16 %v1419
  %v1495 = vunpack.c.h.b16 %v1419
  %v1496 = vunpack.c.l.b16 %v1420
  %v1497 = vunpack.c.h.b16 %v1420
  %v1498 = vunpack.c.l.b16 %v1421
  %v1499 = vunpack.c.h.b16 %v1421
  %v1500 = vunpack.c.l.b16 %v1422
  %v1501 = vunpack.c.h.b16 %v1422
  %v1502 = vunpack.c.l.b16 %v1423
  %v1503 = vunpack.c.h.b16 %v1423
  %v1504 = vunpack.c.l.b16 %v1424
  %v1505 = vunpack.c.h.b16 %v1424
  %v1506 = vunpack.c.l.b16 %v1425
  %v1507 = vunpack.c.h.b16 %v1425
  %v1508 = vpack.c.b16 %v1468, %v1466
  %v1509 = vpack.c.b16 %v1469, %v1467
  %v1510 = vpack.c.b16 %v1472, %v1470
  %v1511 = vpack.c.b16 %v1473, %v1471
  %v1512 = vpack.c.b16 %v1476, %v1474
  %v1513 = vpack.c.b16 %v1477, %v1475
  %v1514 = vpack.c.b16 %v1480, %v1478
  %v1515 = vpack.c.b16 %v1481, %v1479
  %v1516 = vpack.c.b16 %v1484, %v1482
  %v1517 = vpack.c.b16 %v1485, %v1483
  %v1518 = vpack.c.b16 %v1488, %v1486
  %v1519 = vpack.c.b16 %v1489, %v1487
  %v1520 = vpack.c.b16 %v1492, %v1490
  %v1521 = vpack.c.b16 %v1493, %v1491
  %v1522 = vpack.c.b16 %v1496, %v1494
  %v1523 = vpack.c.b16 %v1497, %v1495
  %v1524 = vpack.c.b16 %v1500, %v1498
  %v1525 = vpack.c.b16 %v1501, %v1499
  %v1526 = vpack.c.b16 %v1504, %v1502
  %v1527 = vpack.c.b16 %v1505, %v1503
  %v1528 = vpack.c.b16 %v1506, %v1506
  %v1529 = vpack.c.b16 %v1507, %v1507
  %v1551 = vsel %vm912, %v1437, 0
  %v1554 = vsel %vm912, %v1441, 0
  %v1557 = vsel %vm912, %v1440, 0
  %v1560 = vsel %vm922, %v1528, 0
  %v1563 = vsel %vm922, %v1529, 0
  %1565 = vmatprep.subr.bf16.mxu0 %v1523
  %1566 = vmatpush1.bf16.msra.mxu0 %v1522
  %1567 = vmatprep.subr.bf16.mxu0 %v1521
  %1568 = vmatpush1.bf16.msra.mxu0 %v1520
  %1569 = vmatprep.subr.bf16.mxu0 %v1519
  %1570 = vmatpush1.bf16.msra.mxu0 %v1518
  %1571 = vmatprep.subr.bf16.mxu0 %v1517
  %1572 = vmatpush1.bf16.msra.mxu0 %v1516
  %1573 = vmatprep.subr.bf16.mxu0 %v1515
  %1574 = vmatpush1.bf16.msra.mxu0 %v1514
  %1575 = vmatprep.subr.bf16.mxu0 %v1513
  %1576 = vmatpush1.bf16.msra.mxu0 %v1512
  %1577 = vmatprep.subr.bf16.mxu0 %v1511
  %1578 = vmatpush1.bf16.msra.mxu0 %v1510
  %1579 = vmatprep.subr.bf16.mxu0 %v1509
  %1580 = vmatpush1.bf16.msra.mxu0 %v1508
  %1581 = vmatprep.subr.bf16.mxu0 0
  %1582 = vmatpush2.bf16.msra.mxu0 0
  %1583 = vmatprep.subr.bf16.mxu0 0
  %1584 = vmatpush2.bf16.msra.mxu0 0
  %1585 = vmatprep.subr.bf16.mxu0 0
  %1586 = vmatpush2.bf16.msra.mxu0 0
  %1587 = vmatprep.subr.bf16.mxu0 0
  %1588 = vmatpush2.bf16.msra.mxu0 0
  %1589 = vmatprep.subr.bf16.mxu0 0
  %1590 = vmatpush2.bf16.msra.mxu0 0
  %1591 = vmatprep.subr.bf16.mxu0 %v1563
  %1592 = vmatpush2.bf16.msra.mxu0 %v1560
  %1593 = vmatprep.subr.bf16.mxu0 %v1527
  %1594 = vmatpush2.bf16.msra.mxu0 %v1526
  %1595 = vmatprep.subr.bf16.mxu0 %v1525
  %1596 = vmatpush2.bf16.msra.mxu0 %v1524
  %1597 = vmatprep.mubr.bf16.mxu0 %v1551
  %1598 = vmatmul.mubr.bf16.gmra.mxu0 %v1434
  %v1599 = vpop.f32.mrf.mxu0
  %v1600 = vadd.f32 0.0, %v1599
  %v1601 = vpop.f32.mrf.mxu0
  %v1602 = vadd.f32 0.0, %v1601
  %v1603 = vpop.f32.mrf.mxu0
  %v1604 = vadd.f32 0.0, %v1603
  %v1605 = vpop.f32.mrf.mxu0
  %v1606 = vadd.f32 0.0, %v1605
  %1607 = vmatprep.mubr.bf16.mxu0 %v1554
  %1608 = vmatmul.mubr.bf16.gmra.mxu0 %v1439
  %v1609 = vpop.f32.mrf.mxu0
  %v1610 = vadd.f32 0.0, %v1609
  %v1611 = vpop.f32.mrf.mxu0
  %v1612 = vadd.f32 0.0, %v1611
  %v1613 = vpop.f32.mrf.mxu0
  %v1614 = vadd.f32 0.0, %v1613
  %v1615 = vpop.f32.mrf.mxu0
  %v1616 = vadd.f32 0.0, %v1615
  %1617 = vmatprep.mubr.bf16.mxu0 %v1557
  %1618 = vmatmul.mubr.bf16.gmra.mxu0 %v1438
  %v1619 = vpop.f32.mrf.mxu0
  %v1620 = vadd.f32 0.0, %v1619
  %v1621 = vpop.f32.mrf.mxu0
  %v1622 = vadd.f32 0.0, %v1621
  %v1623 = vpop.f32.mrf.mxu0
  %v1624 = vpop.f32.mrf.mxu0
  %1625 = vdwg.mxu0
  %v1626 = vadd.f32 %v1394, %v1600
  %v1627 = vadd.f32 %v1395, %v1602
  %v1628 = vadd.f32 %v1396, %v1604
  %v1629 = vadd.f32 %v1397, %v1606
  %v1630 = vadd.f32 %v1398, %v1610
  %v1631 = vadd.f32 %v1399, %v1612
  %v1632 = vadd.f32 %v1400, %v1614
  %v1633 = vadd.f32 %v1401, %v1616
  %v1634 = vadd.f32 %v1402, %v1620
  %v1635 = vadd.f32 %v1403, %v1622
  %s1636 = scalar_lea.vmem %s3, 672
  %v1637 = vld [vmem:[%s1636] sm:$0xff]
  %v1638 = vld [vmem:[%s1636 + $0x8] sm:$0xff]
  %v1639 = vld [vmem:[%s1636 + $0x10] sm:$0xff]
  %v1640 = vld [vmem:[%s1636 + $0x18] sm:$0xff]
  %v1641 = vld [vmem:[%s1636 + $0x20] sm:$0xff]
  %v1642 = vld [vmem:[%s1636 + $0x28] sm:$0xff]
  %v1643 = vld [vmem:[%s1636 + $0x30] sm:$0xff]
  %v1644 = vld [vmem:[%s1636 + $0x38] sm:$0xff]
  %v1645 = vld [vmem:[%s1636 + $0x40] sm:$0xff]
  %v1646 = vld [vmem:[%s1636 + $0x48] sm:$0xff]
  %v1647 = vld [vmem:[%s1636 + $0x50] sm:$0xff]
  %v1648 = vld [vmem:[%s1636 + $0x58] sm:$0xff]
  %v1649 = vld [vmem:[%s1636 + $0x60] sm:$0xff]
  %v1650 = vld [vmem:[%s1636 + $0x68] sm:$0xff]
  %v1651 = vld [vmem:[%s1636 + $0x70] sm:$0xff]
  %v1652 = vld [vmem:[%s1636 + $0x78] sm:$0xff]
  %v1653 = vld [vmem:[%s1636 + $0x80] sm:$0xff]
  %v1654 = vld [vmem:[%s1636 + $0x88] sm:$0xff]
  %v1655 = vld [vmem:[%s1636 + $0x90] sm:$0xff]
  %v1656 = vld [vmem:[%s1636 + $0x98] sm:$0xff]
  %v1657 = vld [vmem:[%s1636 + $0xa0] sm:$0xff]
  %v1679 = vunpack.c.l.b16 %v1637
  %v1680 = vunpack.c.h.b16 %v1637
  %v1681 = vunpack.c.l.b16 %v1638
  %v1682 = vunpack.c.h.b16 %v1638
  %v1683 = vunpack.c.l.b16 %v1639
  %v1684 = vunpack.c.h.b16 %v1639
  %v1685 = vunpack.c.l.b16 %v1640
  %v1686 = vunpack.c.h.b16 %v1640
  %v1687 = vunpack.c.l.b16 %v1641
  %v1688 = vunpack.c.h.b16 %v1641
  %v1689 = vunpack.c.l.b16 %v1642
  %v1690 = vunpack.c.h.b16 %v1642
  %v1691 = vunpack.c.l.b16 %v1643
  %v1692 = vunpack.c.h.b16 %v1643
  %v1693 = vunpack.c.l.b16 %v1644
  %v1694 = vunpack.c.h.b16 %v1644
  %v1695 = vunpack.c.l.b16 %v1645
  %v1696 = vunpack.c.h.b16 %v1645
  %v1697 = vunpack.c.l.b16 %v1646
  %v1698 = vunpack.c.h.b16 %v1646
  %v1699 = vunpack.c.l.b16 %v1647
  %v1700 = vunpack.c.h.b16 %v1647
  %v1701 = vunpack.c.l.b16 %v1648
  %v1702 = vunpack.c.h.b16 %v1648
  %v1703 = vunpack.c.l.b16 %v1649
  %v1704 = vunpack.c.h.b16 %v1649
  %v1705 = vunpack.c.l.b16 %v1650
  %v1706 = vunpack.c.h.b16 %v1650
  %v1707 = vunpack.c.l.b16 %v1651
  %v1708 = vunpack.c.h.b16 %v1651
  %v1709 = vunpack.c.l.b16 %v1652
  %v1710 = vunpack.c.h.b16 %v1652
  %v1711 = vunpack.c.l.b16 %v1653
  %v1712 = vunpack.c.h.b16 %v1653
  %v1713 = vunpack.c.l.b16 %v1654
  %v1714 = vunpack.c.h.b16 %v1654
  %v1715 = vunpack.c.l.b16 %v1655
  %v1716 = vunpack.c.h.b16 %v1655
  %v1717 = vunpack.c.l.b16 %v1656
  %v1718 = vunpack.c.h.b16 %v1656
  %v1719 = vunpack.c.l.b16 %v1657
  %v1720 = vunpack.c.h.b16 %v1657
  %v1721 = vpack.c.b16 %v1681, %v1679
  %v1722 = vpack.c.b16 %v1682, %v1680
  %v1723 = vpack.c.b16 %v1685, %v1683
  %v1724 = vpack.c.b16 %v1686, %v1684
  %v1725 = vpack.c.b16 %v1689, %v1687
  %v1726 = vpack.c.b16 %v1690, %v1688
  %v1727 = vpack.c.b16 %v1693, %v1691
  %v1728 = vpack.c.b16 %v1694, %v1692
  %v1729 = vpack.c.b16 %v1697, %v1695
  %v1730 = vpack.c.b16 %v1698, %v1696
  %v1731 = vpack.c.b16 %v1701, %v1699
  %v1732 = vpack.c.b16 %v1702, %v1700
  %v1733 = vpack.c.b16 %v1705, %v1703
  %v1734 = vpack.c.b16 %v1706, %v1704
  %v1735 = vpack.c.b16 %v1709, %v1707
  %v1736 = vpack.c.b16 %v1710, %v1708
  %v1737 = vpack.c.b16 %v1713, %v1711
  %v1738 = vpack.c.b16 %v1714, %v1712
  %v1739 = vpack.c.b16 %v1717, %v1715
  %v1740 = vpack.c.b16 %v1718, %v1716
  %v1741 = vpack.c.b16 %v1719, %v1719
  %v1742 = vpack.c.b16 %v1720, %v1720
  %v1764 = vsel %vm912, %v467, 0
  %v1767 = vsel %vm922, %v1741, 0
  %v1770 = vsel %vm922, %v1742, 0
  %1772 = vmatprep.subr.bf16.mxu0 %v1736
  %1773 = vmatpush1.bf16.msra.mxu0 %v1735
  %1774 = vmatprep.subr.bf16.mxu0 %v1734
  %1775 = vmatpush1.bf16.msra.mxu0 %v1733
  %1776 = vmatprep.subr.bf16.mxu0 %v1732
  %1777 = vmatpush1.bf16.msra.mxu0 %v1731
  %1778 = vmatprep.subr.bf16.mxu0 %v1730
  %1779 = vmatpush1.bf16.msra.mxu0 %v1729
  %1780 = vmatprep.subr.bf16.mxu0 %v1728
  %1781 = vmatpush1.bf16.msra.mxu0 %v1727
  %1782 = vmatprep.subr.bf16.mxu0 %v1726
  %1783 = vmatpush1.bf16.msra.mxu0 %v1725
  %1784 = vmatprep.subr.bf16.mxu0 %v1724
  %1785 = vmatpush1.bf16.msra.mxu0 %v1723
  %1786 = vmatprep.subr.bf16.mxu0 %v1722
  %1787 = vmatpush1.bf16.msra.mxu0 %v1721
  %1788 = vmatprep.subr.bf16.mxu0 0
  %1789 = vmatpush2.bf16.msra.mxu0 0
  %1790 = vmatprep.subr.bf16.mxu0 0
  %1791 = vmatpush2.bf16.msra.mxu0 0
  %1792 = vmatprep.subr.bf16.mxu0 0
  %1793 = vmatpush2.bf16.msra.mxu0 0
  %1794 = vmatprep.subr.bf16.mxu0 0
  %1795 = vmatpush2.bf16.msra.mxu0 0
  %1796 = vmatprep.subr.bf16.mxu0 0
  %1797 = vmatpush2.bf16.msra.mxu0 0
  %1798 = vmatprep.subr.bf16.mxu0 %v1770
  %1799 = vmatpush2.bf16.msra.mxu0 %v1767
  %1800 = vmatprep.subr.bf16.mxu0 %v1740
  %1801 = vmatpush2.bf16.msra.mxu0 %v1739
  %1802 = vmatprep.subr.bf16.mxu0 %v1738
  %1803 = vmatpush2.bf16.msra.mxu0 %v1737
  %1804 = vmatprep.mubr.bf16.mxu0 %v1099
  %1805 = vmatmul.mubr.bf16.gmra.mxu0 %v462
  %v1806 = vpop.f32.mrf.mxu0
  %v1807 = vadd.f32 0.0, %v1806
  %v1808 = vpop.f32.mrf.mxu0
  %v1809 = vadd.f32 0.0, %v1808
  %v1810 = vpop.f32.mrf.mxu0
  %v1811 = vadd.f32 0.0, %v1810
  %v1812 = vpop.f32.mrf.mxu0
  %v1813 = vadd.f32 0.0, %v1812
  %1814 = vmatprep.mubr.bf16.mxu0 %v1102
  %1815 = vmatmul.mubr.bf16.gmra.mxu0 %v464
  %v1816 = vpop.f32.mrf.mxu0
  %v1817 = vadd.f32 0.0, %v1816
  %v1818 = vpop.f32.mrf.mxu0
  %v1819 = vadd.f32 0.0, %v1818
  %v1820 = vpop.f32.mrf.mxu0
  %v1821 = vadd.f32 0.0, %v1820
  %v1822 = vpop.f32.mrf.mxu0
  %v1823 = vadd.f32 0.0, %v1822
  %1824 = vmatprep.mubr.bf16.mxu0 %v1764
  %1825 = vmatmul.mubr.bf16.gmra.mxu0 %v466
  %v1826 = vpop.f32.mrf.mxu0
  %v1827 = vadd.f32 0.0, %v1826
  %v1828 = vpop.f32.mrf.mxu0
  %v1829 = vadd.f32 0.0, %v1828
  %v1830 = vpop.f32.mrf.mxu0
  %v1831 = vpop.f32.mrf.mxu0
  %1832 = vdwg.mxu0
  %v1833 = vadd.f32 %v1626, %v1807
  %v1834 = vadd.f32 %v1627, %v1809
  %v1835 = vadd.f32 %v1628, %v1811
  %v1836 = vadd.f32 %v1629, %v1813
  %v1837 = vadd.f32 %v1630, %v1817
  %v1838 = vadd.f32 %v1631, %v1819
  %v1839 = vadd.f32 %v1632, %v1821
  %v1840 = vadd.f32 %v1633, %v1823
  %v1841 = vadd.f32 %v1634, %v1827
  %v1842 = vadd.f32 %v1635, %v1829
  %v1843 = vld [vmem:[%s4] sm:$0x3]
  %v1845 = vlaneseq
  %v1846 = vshrl.u32 %v1845, 7
  %v1847 = vsub.s32 0, %v1846
  %v1848 = vrot.slane %v1843, %v1847
  %v1849 = vlaneseq
  %v1850 = vshrl.u32 %v1849, 7
  %v1851 = vsub.s32 1, %v1850
  %v1852 = vrot.slane %v1843, %v1851
  %v1855 = vadd.f32 %v1833, %v1848
  %v1856 = vadd.f32 %v1834, %v1852
  %v1857 = vadd.f32 %v1835, %v1848
  %v1858 = vadd.f32 %v1836, %v1852
  %v1859 = vadd.f32 %v1837, %v1848
  %v1860 = vadd.f32 %v1838, %v1852
  %v1861 = vadd.f32 %v1839, %v1848
  %v1862 = vadd.f32 %v1840, %v1852
  %v1863 = vadd.f32 %v1841, %v1848
  %v1864 = vadd.f32 %v1842, %v1852
  %v1865 = vmax.f32 %v1855, 0.0
  %v1866 = vmax.f32 %v1856, 0.0
  %v1867 = vmax.f32 %v1857, 0.0
  %v1868 = vmax.f32 %v1858, 0.0
  %v1869 = vmax.f32 %v1859, 0.0
  %v1870 = vmax.f32 %v1860, 0.0
  %v1871 = vmax.f32 %v1861, 0.0
  %v1872 = vmax.f32 %v1862, 0.0
  %v1873 = vmax.f32 %v1863, 0.0
  %v1874 = vmax.f32 %v1864, 0.0
  %1875 = vmatprep.subr.bf16.mxu0 %v885
  %1876 = vmatpush1.bf16.msra.mxu0 %v884
  %1877 = vmatprep.subr.bf16.mxu0 %v883
  %1878 = vmatpush1.bf16.msra.mxu0 %v882
  %1879 = vmatprep.subr.bf16.mxu0 %v881
  %1880 = vmatpush1.bf16.msra.mxu0 %v880
  %1881 = vmatprep.subr.bf16.mxu0 %v879
  %1882 = vmatpush1.bf16.msra.mxu0 %v878
  %1883 = vmatprep.subr.bf16.mxu0 %v877
  %1884 = vmatpush1.bf16.msra.mxu0 %v876
  %1885 = vmatprep.subr.bf16.mxu0 %v875
  %1886 = vmatpush1.bf16.msra.mxu0 %v874
  %1887 = vmatprep.subr.bf16.mxu0 %v873
  %1888 = vmatpush1.bf16.msra.mxu0 %v872
  %1889 = vmatprep.subr.bf16.mxu0 %v871
  %1890 = vmatpush1.bf16.msra.mxu0 %v870
  %1891 = vmatprep.subr.bf16.mxu0 0
  %1892 = vmatpush2.bf16.msra.mxu0 0
  %1893 = vmatprep.subr.bf16.mxu0 0
  %1894 = vmatpush2.bf16.msra.mxu0 0
  %1895 = vmatprep.subr.bf16.mxu0 0
  %1896 = vmatpush2.bf16.msra.mxu0 0
  %1897 = vmatprep.subr.bf16.mxu0 0
  %1898 = vmatpush2.bf16.msra.mxu0 0
  %1899 = vmatprep.subr.bf16.mxu0 0
  %1900 = vmatpush2.bf16.msra.mxu0 0
  %1901 = vmatprep.subr.bf16.mxu0 %v927
  %1902 = vmatpush2.bf16.msra.mxu0 %v924
  %1903 = vmatprep.subr.bf16.mxu0 %v889
  %1904 = vmatpush2.bf16.msra.mxu0 %v888
  %1905 = vmatprep.subr.bf16.mxu0 %v887
  %1906 = vmatpush2.bf16.msra.mxu0 %v886
  %1907 = vmatprep.mubr.bf16.mxu0 %v1319
  %1908 = vmatmul.mubr.bf16.gmra.mxu0 %v1202
  %v1909 = vpop.f32.mrf.mxu0
  %v1910 = vadd.f32 0.0, %v1909
  %v1911 = vpop.f32.mrf.mxu0
  %v1912 = vadd.f32 0.0, %v1911
  %v1913 = vpop.f32.mrf.mxu0
  %v1914 = vadd.f32 0.0, %v1913
  %v1915 = vpop.f32.mrf.mxu0
  %v1916 = vadd.f32 0.0, %v1915
  %1917 = vmatprep.mubr.bf16.mxu0 %v1322
  %1918 = vmatmul.mubr.bf16.gmra.mxu0 %v1207
  %v1919 = vpop.f32.mrf.mxu0
  %v1920 = vadd.f32 0.0, %v1919
  %v1921 = vpop.f32.mrf.mxu0
  %v1922 = vadd.f32 0.0, %v1921
  %v1923 = vpop.f32.mrf.mxu0
  %v1924 = vadd.f32 0.0, %v1923
  %v1925 = vpop.f32.mrf.mxu0
  %v1926 = vadd.f32 0.0, %v1925
  %1927 = vmatprep.mubr.bf16.mxu0 %v1325
  %1928 = vmatmul.mubr.bf16.gmra.mxu0 %v1206
  %v1929 = vpop.f32.mrf.mxu0
  %v1930 = vadd.f32 0.0, %v1929
  %v1931 = vpop.f32.mrf.mxu0
  %v1932 = vadd.f32 0.0, %v1931
  %v1933 = vpop.f32.mrf.mxu0
  %v1934 = vpop.f32.mrf.mxu0
  %1935 = vdwg.mxu0
  %1936 = vmatprep.subr.bf16.mxu0 %v1068
  %1937 = vmatpush1.bf16.msra.mxu0 %v1067
  %1938 = vmatprep.subr.bf16.mxu0 %v1066
  %1939 = vmatpush1.bf16.msra.mxu0 %v1065
  %1940 = vmatprep.subr.bf16.mxu0 %v1064
  %1941 = vmatpush1.bf16.msra.mxu0 %v1063
  %1942 = vmatprep.subr.bf16.mxu0 %v1062
  %1943 = vmatpush1.bf16.msra.mxu0 %v1061
  %1944 = vmatprep.subr.bf16.mxu0 %v1060
  %1945 = vmatpush1.bf16.msra.mxu0 %v1059
  %1946 = vmatprep.subr.bf16.mxu0 %v1058
  %1947 = vmatpush1.bf16.msra.mxu0 %v1057
  %1948 = vmatprep.subr.bf16.mxu0 %v1056
  %1949 = vmatpush1.bf16.msra.mxu0 %v1055
  %1950 = vmatprep.subr.bf16.mxu0 %v1054
  %1951 = vmatpush1.bf16.msra.mxu0 %v1053
  %1952 = vmatprep.subr.bf16.mxu0 0
  %1953 = vmatpush2.bf16.msra.mxu0 0
  %1954 = vmatprep.subr.bf16.mxu0 0
  %1955 = vmatpush2.bf16.msra.mxu0 0
  %1956 = vmatprep.subr.bf16.mxu0 0
  %1957 = vmatpush2.bf16.msra.mxu0 0
  %1958 = vmatprep.subr.bf16.mxu0 0
  %1959 = vmatpush2.bf16.msra.mxu0 0
  %1960 = vmatprep.subr.bf16.mxu0 0
  %1961 = vmatpush2.bf16.msra.mxu0 0
  %1962 = vmatprep.subr.bf16.mxu0 %v1108
  %1963 = vmatpush2.bf16.msra.mxu0 %v1105
  %1964 = vmatprep.subr.bf16.mxu0 %v1072
  %1965 = vmatpush2.bf16.msra.mxu0 %v1071
  %1966 = vmatprep.subr.bf16.mxu0 %v1070
  %1967 = vmatpush2.bf16.msra.mxu0 %v1069
  %1968 = vmatprep.mubr.bf16.mxu0 %v914
  %1969 = vmatmul.mubr.bf16.gmra.mxu0 %v756
  %v1970 = vpop.f32.mrf.mxu0
  %v1971 = vadd.f32 %v1910, %v1970
  %v1972 = vpop.f32.mrf.mxu0
  %v1973 = vadd.f32 %v1912, %v1972
  %v1974 = vpop.f32.mrf.mxu0
  %v1975 = vadd.f32 %v1914, %v1974
  %v1976 = vpop.f32.mrf.mxu0
  %v1977 = vadd.f32 %v1916, %v1976
  %1978 = vmatprep.mubr.bf16.mxu0 %v917
  %1979 = vmatmul.mubr.bf16.gmra.mxu0 %v758
  %v1980 = vpop.f32.mrf.mxu0
  %v1981 = vadd.f32 %v1920, %v1980
  %v1982 = vpop.f32.mrf.mxu0
  %v1983 = vadd.f32 %v1922, %v1982
  %v1984 = vpop.f32.mrf.mxu0
  %v1985 = vadd.f32 %v1924, %v1984
  %v1986 = vpop.f32.mrf.mxu0
  %v1987 = vadd.f32 %v1926, %v1986
  %1988 = vmatprep.mubr.bf16.mxu0 %v920
  %1989 = vmatmul.mubr.bf16.gmra.mxu0 %v760
  %v1990 = vpop.f32.mrf.mxu0
  %v1991 = vadd.f32 %v1930, %v1990
  %v1992 = vpop.f32.mrf.mxu0
  %v1993 = vadd.f32 %v1932, %v1992
  %v1994 = vpop.f32.mrf.mxu0
  %v1995 = vpop.f32.mrf.mxu0
  %1996 = vdwg.mxu0
  %1997 = vmatprep.subr.bf16.mxu0 %v1291
  %1998 = vmatpush1.bf16.msra.mxu0 %v1290
  %1999 = vmatprep.subr.bf16.mxu0 %v1289
  %2000 = vmatpush1.bf16.msra.mxu0 %v1288
  %2001 = vmatprep.subr.bf16.mxu0 %v1287
  %2002 = vmatpush1.bf16.msra.mxu0 %v1286
  %2003 = vmatprep.subr.bf16.mxu0 %v1285
  %2004 = vmatpush1.bf16.msra.mxu0 %v1284
  %2005 = vmatprep.subr.bf16.mxu0 %v1283
  %2006 = vmatpush1.bf16.msra.mxu0 %v1282
  %2007 = vmatprep.subr.bf16.mxu0 %v1281
  %2008 = vmatpush1.bf16.msra.mxu0 %v1280
  %2009 = vmatprep.subr.bf16.mxu0 %v1279
  %2010 = vmatpush1.bf16.msra.mxu0 %v1278
  %2011 = vmatprep.subr.bf16.mxu0 %v1277
  %2012 = vmatpush1.bf16.msra.mxu0 %v1276
  %2013 = vmatprep.subr.bf16.mxu0 0
  %2014 = vmatpush2.bf16.msra.mxu0 0
  %2015 = vmatprep.subr.bf16.mxu0 0
  %2016 = vmatpush2.bf16.msra.mxu0 0
  %2017 = vmatprep.subr.bf16.mxu0 0
  %2018 = vmatpush2.bf16.msra.mxu0 0
  %2019 = vmatprep.subr.bf16.mxu0 0
  %2020 = vmatpush2.bf16.msra.mxu0 0
  %2021 = vmatprep.subr.bf16.mxu0 0
  %2022 = vmatpush2.bf16.msra.mxu0 0
  %2023 = vmatprep.subr.bf16.mxu0 %v1331
  %2024 = vmatpush2.bf16.msra.mxu0 %v1328
  %2025 = vmatprep.subr.bf16.mxu0 %v1295
  %2026 = vmatpush2.bf16.msra.mxu0 %v1294
  %2027 = vmatprep.subr.bf16.mxu0 %v1293
  %2028 = vmatpush2.bf16.msra.mxu0 %v1292
  %2029 = vmatprep.mubr.bf16.mxu0 %v1551
  %2030 = vmatmul.mubr.bf16.gmra.mxu0 %v1434
  %v2031 = vpop.f32.mrf.mxu0
  %v2032 = vadd.f32 0.0, %v2031
  %v2033 = vpop.f32.mrf.mxu0
  %v2034 = vadd.f32 0.0, %v2033
  %v2035 = vpop.f32.mrf.mxu0
  %v2036 = vadd.f32 0.0, %v2035
  %v2037 = vpop.f32.mrf.mxu0
  %v2038 = vadd.f32 0.0, %v2037
  %2039 = vmatprep.mubr.bf16.mxu0 %v1554
  %2040 = vmatmul.mubr.bf16.gmra.mxu0 %v1439
  %v2041 = vpop.f32.mrf.mxu0
  %v2042 = vadd.f32 0.0, %v2041
  %v2043 = vpop.f32.mrf.mxu0
  %v2044 = vadd.f32 0.0, %v2043
  %v2045 = vpop.f32.mrf.mxu0
  %v2046 = vadd.f32 0.0, %v2045
  %v2047 = vpop.f32.mrf.mxu0
  %v2048 = vadd.f32 0.0, %v2047
  %2049 = vmatprep.mubr.bf16.mxu0 %v1557
  %2050 = vmatmul.mubr.bf16.gmra.mxu0 %v1438
  %v2051 = vpop.f32.mrf.mxu0
  %v2052 = vadd.f32 0.0, %v2051
  %v2053 = vpop.f32.mrf.mxu0
  %v2054 = vadd.f32 0.0, %v2053
  %v2055 = vpop.f32.mrf.mxu0
  %v2056 = vpop.f32.mrf.mxu0
  %2057 = vdwg.mxu0
  %v2058 = vadd.f32 %v1971, %v2032
  %v2059 = vadd.f32 %v1973, %v2034
  %v2060 = vadd.f32 %v1975, %v2036
  %v2061 = vadd.f32 %v1977, %v2038
  %v2062 = vadd.f32 %v1981, %v2042
  %v2063 = vadd.f32 %v1983, %v2044
  %v2064 = vadd.f32 %v1985, %v2046
  %v2065 = vadd.f32 %v1987, %v2048
  %v2066 = vadd.f32 %v1991, %v2052
  %v2067 = vadd.f32 %v1993, %v2054
  %2068 = vmatprep.subr.bf16.mxu0 %v1523
  %2069 = vmatpush1.bf16.msra.mxu0 %v1522
  %2070 = vmatprep.subr.bf16.mxu0 %v1521
  %2071 = vmatpush1.bf16.msra.mxu0 %v1520
  %2072 = vmatprep.subr.bf16.mxu0 %v1519
  %2073 = vmatpush1.bf16.msra.mxu0 %v1518
  %2074 = vmatprep.subr.bf16.mxu0 %v1517
  %2075 = vmatpush1.bf16.msra.mxu0 %v1516
  %2076 = vmatprep.subr.bf16.mxu0 %v1515
  %2077 = vmatpush1.bf16.msra.mxu0 %v1514
  %2078 = vmatprep.subr.bf16.mxu0 %v1513
  %2079 = vmatpush1.bf16.msra.mxu0 %v1512
  %2080 = vmatprep.subr.bf16.mxu0 %v1511
  %2081 = vmatpush1.bf16.msra.mxu0 %v1510
  %2082 = vmatprep.subr.bf16.mxu0 %v1509
  %2083 = vmatpush1.bf16.msra.mxu0 %v1508
  %2084 = vmatprep.subr.bf16.mxu0 0
  %2085 = vmatpush2.bf16.msra.mxu0 0
  %2086 = vmatprep.subr.bf16.mxu0 0
  %2087 = vmatpush2.bf16.msra.mxu0 0
  %2088 = vmatprep.subr.bf16.mxu0 0
  %2089 = vmatpush2.bf16.msra.mxu0 0
  %2090 = vmatprep.subr.bf16.mxu0 0
  %2091 = vmatpush2.bf16.msra.mxu0 0
  %2092 = vmatprep.subr.bf16.mxu0 0
  %2093 = vmatpush2.bf16.msra.mxu0 0
  %2094 = vmatprep.subr.bf16.mxu0 %v1563
  %2095 = vmatpush2.bf16.msra.mxu0 %v1560
  %2096 = vmatprep.subr.bf16.mxu0 %v1527
  %2097 = vmatpush2.bf16.msra.mxu0 %v1526
  %2098 = vmatprep.subr.bf16.mxu0 %v1525
  %2099 = vmatpush2.bf16.msra.mxu0 %v1524
  %2100 = vmatprep.mubr.bf16.mxu0 %v1099
  %2101 = vmatmul.mubr.bf16.gmra.mxu0 %v462
  %v2102 = vpop.f32.mrf.mxu0
  %v2103 = vadd.f32 0.0, %v2102
  %v2104 = vpop.f32.mrf.mxu0
  %v2105 = vadd.f32 0.0, %v2104
  %v2106 = vpop.f32.mrf.mxu0
  %v2107 = vadd.f32 0.0, %v2106
  %v2108 = vpop.f32.mrf.mxu0
  %v2109 = vadd.f32 0.0, %v2108
  %2110 = vmatprep.mubr.bf16.mxu0 %v1102
  %2111 = vmatmul.mubr.bf16.gmra.mxu0 %v464
  %v2112 = vpop.f32.mrf.mxu0
  %v2113 = vadd.f32 0.0, %v2112
  %v2114 = vpop.f32.mrf.mxu0
  %v2115 = vadd.f32 0.0, %v2114
  %v2116 = vpop.f32.mrf.mxu0
  %v2117 = vadd.f32 0.0, %v2116
  %v2118 = vpop.f32.mrf.mxu0
  %v2119 = vadd.f32 0.0, %v2118
  %2120 = vmatprep.mubr.bf16.mxu0 %v1764
  %2121 = vmatmul.mubr.bf16.gmra.mxu0 %v466
  %v2122 = vpop.f32.mrf.mxu0
  %v2123 = vadd.f32 0.0, %v2122
  %v2124 = vpop.f32.mrf.mxu0
  %v2125 = vadd.f32 0.0, %v2124
  %v2126 = vpop.f32.mrf.mxu0
  %v2127 = vpop.f32.mrf.mxu0
  %2128 = vdwg.mxu0
  %v2129 = vadd.f32 %v2058, %v2103
  %v2130 = vadd.f32 %v2059, %v2105
  %v2131 = vadd.f32 %v2060, %v2107
  %v2132 = vadd.f32 %v2061, %v2109
  %v2133 = vadd.f32 %v2062, %v2113
  %v2134 = vadd.f32 %v2063, %v2115
  %v2135 = vadd.f32 %v2064, %v2117
  %v2136 = vadd.f32 %v2065, %v2119
  %v2137 = vadd.f32 %v2066, %v2123
  %v2138 = vadd.f32 %v2067, %v2125
  %v2140 = vsel %vm912, %v763, 0
  %2142 = vmatprep.subr.bf16.mxu0 %v1736
  %2143 = vmatpush1.bf16.msra.mxu0 %v1735
  %2144 = vmatprep.subr.bf16.mxu0 %v1734
  %2145 = vmatpush1.bf16.msra.mxu0 %v1733
  %2146 = vmatprep.subr.bf16.mxu0 %v1732
  %2147 = vmatpush1.bf16.msra.mxu0 %v1731
  %2148 = vmatprep.subr.bf16.mxu0 %v1730
  %2149 = vmatpush1.bf16.msra.mxu0 %v1729
  %2150 = vmatprep.subr.bf16.mxu0 %v1728
  %2151 = vmatpush1.bf16.msra.mxu0 %v1727
  %2152 = vmatprep.subr.bf16.mxu0 %v1726
  %2153 = vmatpush1.bf16.msra.mxu0 %v1725
  %2154 = vmatprep.subr.bf16.mxu0 %v1724
  %2155 = vmatpush1.bf16.msra.mxu0 %v1723
  %2156 = vmatprep.subr.bf16.mxu0 %v1722
  %2157 = vmatpush1.bf16.msra.mxu0 %v1721
  %2158 = vmatprep.subr.bf16.mxu0 0
  %2159 = vmatpush2.bf16.msra.mxu0 0
  %2160 = vmatprep.subr.bf16.mxu0 0
  %2161 = vmatpush2.bf16.msra.mxu0 0
  %2162 = vmatprep.subr.bf16.mxu0 0
  %2163 = vmatpush2.bf16.msra.mxu0 0
  %2164 = vmatprep.subr.bf16.mxu0 0
  %2165 = vmatpush2.bf16.msra.mxu0 0
  %2166 = vmatprep.subr.bf16.mxu0 0
  %2167 = vmatpush2.bf16.msra.mxu0 0
  %2168 = vmatprep.subr.bf16.mxu0 %v1770
  %2169 = vmatpush2.bf16.msra.mxu0 %v1767
  %2170 = vmatprep.subr.bf16.mxu0 %v1740
  %2171 = vmatpush2.bf16.msra.mxu0 %v1739
  %2172 = vmatprep.subr.bf16.mxu0 %v1738
  %2173 = vmatpush2.bf16.msra.mxu0 %v1737
  %2174 = vmatprep.mubr.bf16.mxu0 %v917
  %2175 = vmatmul.mubr.bf16.gmra.mxu0 %v758
  %v2176 = vpop.f32.mrf.mxu0
  %v2177 = vadd.f32 0.0, %v2176
  %v2178 = vpop.f32.mrf.mxu0
  %v2179 = vadd.f32 0.0, %v2178
  %v2180 = vpop.f32.mrf.mxu0
  %v2181 = vadd.f32 0.0, %v2180
  %v2182 = vpop.f32.mrf.mxu0
  %v2183 = vadd.f32 0.0, %v2182
  %2184 = vmatprep.mubr.bf16.mxu0 %v920
  %2185 = vmatmul.mubr.bf16.gmra.mxu0 %v760
  %v2186 = vpop.f32.mrf.mxu0
  %v2187 = vadd.f32 0.0, %v2186
  %v2188 = vpop.f32.mrf.mxu0
  %v2189 = vadd.f32 0.0, %v2188
  %v2190 = vpop.f32.mrf.mxu0
  %v2191 = vadd.f32 0.0, %v2190
  %v2192 = vpop.f32.mrf.mxu0
  %v2193 = vadd.f32 0.0, %v2192
  %2194 = vmatprep.mubr.bf16.mxu0 %v2140
  %2195 = vmatmul.mubr.bf16.gmra.mxu0 %v762
  %v2196 = vpop.f32.mrf.mxu0
  %v2197 = vadd.f32 0.0, %v2196
  %v2198 = vpop.f32.mrf.mxu0
  %v2199 = vadd.f32 0.0, %v2198
  %v2200 = vpop.f32.mrf.mxu0
  %v2201 = vpop.f32.mrf.mxu0
  %2202 = vdwg.mxu0
  %v2203 = vadd.f32 %v2129, %v2177
  %v2204 = vadd.f32 %v2130, %v2179
  %v2205 = vadd.f32 %v2131, %v2181
  %v2206 = vadd.f32 %v2132, %v2183
  %v2207 = vadd.f32 %v2133, %v2187
  %v2208 = vadd.f32 %v2134, %v2189
  %v2209 = vadd.f32 %v2135, %v2191
  %v2210 = vadd.f32 %v2136, %v2193
  %v2211 = vadd.f32 %v2137, %v2197
  %v2212 = vadd.f32 %v2138, %v2199
  %v2213 = vadd.f32 %v2203, %v1848
  %v2214 = vadd.f32 %v2204, %v1852
  %v2215 = vadd.f32 %v2205, %v1848
  %v2216 = vadd.f32 %v2206, %v1852
  %v2217 = vadd.f32 %v2207, %v1848
  %v2218 = vadd.f32 %v2208, %v1852
  %v2219 = vadd.f32 %v2209, %v1848
  %v2220 = vadd.f32 %v2210, %v1852
  %v2221 = vadd.f32 %v2211, %v1848
  %v2222 = vadd.f32 %v2212, %v1852
  %v2223 = vmax.f32 %v2213, 0.0
  %v2224 = vmax.f32 %v2214, 0.0
  %v2225 = vmax.f32 %v2215, 0.0
  %v2226 = vmax.f32 %v2216, 0.0
  %v2227 = vmax.f32 %v2217, 0.0
  %v2228 = vmax.f32 %v2218, 0.0
  %v2229 = vmax.f32 %v2219, 0.0
  %v2230 = vmax.f32 %v2220, 0.0
  %v2231 = vmax.f32 %v2221, 0.0
  %v2232 = vmax.f32 %v2222, 0.0
  %v2233 = vadd.f32 %v1865, %v2223
  %v2234 = vadd.f32 %v1866, %v2224
  %v2235 = vadd.f32 %v1867, %v2225
  %v2236 = vadd.f32 %v1868, %v2226
  %v2237 = vadd.f32 %v1869, %v2227
  %v2238 = vadd.f32 %v1870, %v2228
  %v2239 = vadd.f32 %v1871, %v2229
  %v2240 = vadd.f32 %v1872, %v2230
  %v2241 = vadd.f32 %v1873, %v2231
  %v2242 = vadd.f32 %v1874, %v2232
  %v2243 = vpack.c.bf16 %v2235, %v2233
  %v2244 = vpack.c.bf16 %v2236, %v2234
  %v2245 = vpack.c.bf16 %v2239, %v2237
  %v2246 = vpack.c.bf16 %v2240, %v2238
  %v2247 = vpack.c.bf16 %v2241, %v2241
  %v2248 = vpack.c.bf16 %v2242, %v2242
  %v2249 = vld [vmem:[%s5] sm:$0xf]
  %v2250 = vld [vmem:[%s5 + $0x4] sm:$0xf]
  %v2251 = vld [vmem:[%s5 + $0x8] sm:$0xf]
  %v2252 = vld [vmem:[%s5 + $0xc] sm:$0xf]
  %v2253 = vld [vmem:[%s5 + $0x10] sm:$0xf]
  %v2254 = vld [vmem:[%s5 + $0x14] sm:$0xf]
  %v2255 = vld [vmem:[%s5 + $0x18] sm:$0xf]
  %v2256 = vld [vmem:[%s5 + $0x1c] sm:$0xf]
  %v2257 = vld [vmem:[%s5 + $0x20] sm:$0xf]
  %v2258 = vld [vmem:[%s5 + $0x24] sm:$0xf]
  %v2259 = vld [vmem:[%s5 + $0x28] sm:$0xf]
  %v2260 = vld [vmem:[%s5 + $0x2c] sm:$0xf]
  %v2261 = vld [vmem:[%s5 + $0x30] sm:$0xf]
  %v2262 = vld [vmem:[%s5 + $0x34] sm:$0xf]
  %v2263 = vld [vmem:[%s5 + $0x38] sm:$0xf]
  %v2264 = vld [vmem:[%s5 + $0x3c] sm:$0xf]
  %v2265 = vld [vmem:[%s5 + $0x40] sm:$0xf]
  %v2266 = vld [vmem:[%s5 + $0x44] sm:$0xf]
  %v2267 = vld [vmem:[%s5 + $0x48] sm:$0xf]
  %v2268 = vld [vmem:[%s5 + $0x4c] sm:$0xf]
  %s2269 = scalar_lea.vmem %s5, 80
  %v2270 = vld [vmem:[%s2269] sm:$0xf]
  %v2271 = vld [vmem:[%s2269 + $0x4] sm:$0xf]
  %v2272 = vld [vmem:[%s2269 + $0x8] sm:$0xf]
  %v2273 = vld [vmem:[%s2269 + $0xc] sm:$0xf]
  %v2274 = vld [vmem:[%s2269 + $0x10] sm:$0xf]
  %v2275 = vld [vmem:[%s2269 + $0x14] sm:$0xf]
  %v2276 = vld [vmem:[%s2269 + $0x18] sm:$0xf]
  %v2277 = vld [vmem:[%s2269 + $0x1c] sm:$0xf]
  %v2278 = vld [vmem:[%s2269 + $0x20] sm:$0xf]
  %v2279 = vld [vmem:[%s2269 + $0x24] sm:$0xf]
  %v2280 = vld [vmem:[%s2269 + $0x28] sm:$0xf]
  %v2281 = vld [vmem:[%s2269 + $0x2c] sm:$0xf]
  %v2282 = vld [vmem:[%s2269 + $0x30] sm:$0xf]
  %v2283 = vld [vmem:[%s2269 + $0x34] sm:$0xf]
  %v2284 = vld [vmem:[%s2269 + $0x38] sm:$0xf]
  %v2285 = vld [vmem:[%s2269 + $0x3c] sm:$0xf]
  %v2286 = vld [vmem:[%s2269 + $0x40] sm:$0xf]
  %v2287 = vld [vmem:[%s2269 + $0x44] sm:$0xf]
  %v2288 = vld [vmem:[%s2269 + $0x48] sm:$0xf]
  %v2289 = vld [vmem:[%s2269 + $0x4c] sm:$0xf]
  %v2292 = vrot.slane %v2243, 4
  %v2293 = vrot.slane %v2244, 4
  %v2315 = vunpack.c.l.b16 %v2270
  %v2316 = vunpack.c.l.b16 %v2271
  %v2317 = vunpack.c.l.b16 %v2272
  %v2318 = vunpack.c.l.b16 %v2273
  %v2319 = vunpack.c.l.b16 %v2274
  %v2320 = vunpack.c.l.b16 %v2275
  %v2321 = vunpack.c.l.b16 %v2276
  %v2322 = vunpack.c.l.b16 %v2277
  %v2323 = vunpack.c.l.b16 %v2278
  %v2324 = vunpack.c.l.b16 %v2279
  %v2325 = vunpack.c.l.b16 %v2280
  %v2326 = vunpack.c.l.b16 %v2281
  %v2327 = vunpack.c.l.b16 %v2282
  %v2328 = vunpack.c.l.b16 %v2283
  %v2329 = vunpack.c.l.b16 %v2284
  %v2330 = vunpack.c.l.b16 %v2285
  %v2331 = vunpack.c.l.b16 %v2286
  %v2332 = vunpack.c.l.b16 %v2287
  %v2333 = vunpack.c.l.b16 %v2288
  %v2334 = vunpack.c.l.b16 %v2289
  %v2335 = vpack.c.b16 %v2316, %v2315
  %v2336 = vpack.c.b16 %v2318, %v2317
  %v2337 = vpack.c.b16 %v2320, %v2319
  %v2338 = vpack.c.b16 %v2322, %v2321
  %v2339 = vpack.c.b16 %v2324, %v2323
  %v2340 = vpack.c.b16 %v2326, %v2325
  %v2341 = vpack.c.b16 %v2328, %v2327
  %v2342 = vpack.c.b16 %v2330, %v2329
  %v2343 = vpack.c.b16 %v2332, %v2331
  %v2344 = vpack.c.b16 %v2334, %v2333
  %v2356 = vsel %vm211, %v2293, 0
  %2358 = vmatprep.subr.bf16.mxu0 0
  %2359 = vmatpush1.bf16.msra.mxu0 %v2342
  %2360 = vmatprep.subr.bf16.mxu0 0
  %2361 = vmatpush1.bf16.msra.mxu0 %v2341
  %2362 = vmatprep.subr.bf16.mxu0 0
  %2363 = vmatpush1.bf16.msra.mxu0 %v2340
  %2364 = vmatprep.subr.bf16.mxu0 0
  %2365 = vmatpush1.bf16.msra.mxu0 %v2339
  %2366 = vmatprep.subr.bf16.mxu0 0
  %2367 = vmatpush1.bf16.msra.mxu0 %v2338
  %2368 = vmatprep.subr.bf16.mxu0 0
  %2369 = vmatpush1.bf16.msra.mxu0 %v2337
  %2370 = vmatprep.subr.bf16.mxu0 0
  %2371 = vmatpush1.bf16.msra.mxu0 %v2336
  %2372 = vmatprep.subr.bf16.mxu0 0
  %2373 = vmatpush1.bf16.msra.mxu0 %v2335
  %2374 = vmatprep.subr.bf16.mxu0 0
  %2375 = vmatpush2.bf16.msra.mxu0 0
  %2376 = vmatprep.subr.bf16.mxu0 0
  %2377 = vmatpush2.bf16.msra.mxu0 0
  %2378 = vmatprep.subr.bf16.mxu0 0
  %2379 = vmatpush2.bf16.msra.mxu0 0
  %2380 = vmatprep.subr.bf16.mxu0 0
  %2381 = vmatpush2.bf16.msra.mxu0 0
  %2382 = vmatprep.subr.bf16.mxu0 0
  %2383 = vmatpush2.bf16.msra.mxu0 0
  %2384 = vmatprep.subr.bf16.mxu0 0
  %2385 = vmatpush2.bf16.msra.mxu0 0
  %2386 = vmatprep.subr.bf16.mxu0 0
  %2387 = vmatpush2.bf16.msra.mxu0 %v2344
  %2388 = vmatprep.subr.bf16.mxu0 0
  %2389 = vmatpush2.bf16.msra.mxu0 %v2343
  %2390 = vmatprep.mubr.bf16.mxu0 %v2356
  %2391 = vmatmul.mubr.bf16.gmra.mxu0 %v2292
  %v2392 = vpop.f32.mrf.mxu0
  %v2393 = vadd.f32 0.0, %v2392
  %v2394 = vpop.f32.mrf.mxu0
  %v2395 = vpop.f32.mrf.mxu0
  %v2396 = vpop.f32.mrf.mxu0
  %2397 = vdwg.mxu0
  %v2418 = vunpack.c.l.b16 %v2249
  %v2419 = vunpack.c.l.b16 %v2250
  %v2420 = vunpack.c.l.b16 %v2251
  %v2421 = vunpack.c.l.b16 %v2252
  %v2422 = vunpack.c.l.b16 %v2253
  %v2423 = vunpack.c.l.b16 %v2254
  %v2424 = vunpack.c.l.b16 %v2255
  %v2425 = vunpack.c.l.b16 %v2256
  %v2426 = vunpack.c.l.b16 %v2257
  %v2427 = vunpack.c.l.b16 %v2258
  %v2428 = vunpack.c.l.b16 %v2259
  %v2429 = vunpack.c.l.b16 %v2260
  %v2430 = vunpack.c.l.b16 %v2261
  %v2431 = vunpack.c.l.b16 %v2262
  %v2432 = vunpack.c.l.b16 %v2263
  %v2433 = vunpack.c.l.b16 %v2264
  %v2434 = vunpack.c.l.b16 %v2265
  %v2435 = vunpack.c.l.b16 %v2266
  %v2436 = vunpack.c.l.b16 %v2267
  %v2437 = vunpack.c.l.b16 %v2268
  %v2438 = vpack.c.b16 %v2419, %v2418
  %v2439 = vpack.c.b16 %v2421, %v2420
  %v2440 = vpack.c.b16 %v2423, %v2422
  %v2441 = vpack.c.b16 %v2425, %v2424
  %v2442 = vpack.c.b16 %v2427, %v2426
  %v2443 = vpack.c.b16 %v2429, %v2428
  %v2444 = vpack.c.b16 %v2431, %v2430
  %v2445 = vpack.c.b16 %v2433, %v2432
  %v2446 = vpack.c.b16 %v2435, %v2434
  %v2447 = vpack.c.b16 %v2437, %v2436
  %v2459 = vsel %vm211, %v2244, 0
  %2461 = vmatprep.subr.bf16.mxu0 0
  %2462 = vmatpush1.bf16.msra.mxu0 %v2445
  %2463 = vmatprep.subr.bf16.mxu0 0
  %2464 = vmatpush1.bf16.msra.mxu0 %v2444
  %2465 = vmatprep.subr.bf16.mxu0 0
  %2466 = vmatpush1.bf16.msra.mxu0 %v2443
  %2467 = vmatprep.subr.bf16.mxu0 0
  %2468 = vmatpush1.bf16.msra.mxu0 %v2442
  %2469 = vmatprep.subr.bf16.mxu0 0
  %2470 = vmatpush1.bf16.msra.mxu0 %v2441
  %2471 = vmatprep.subr.bf16.mxu0 0
  %2472 = vmatpush1.bf16.msra.mxu0 %v2440
  %2473 = vmatprep.subr.bf16.mxu0 0
  %2474 = vmatpush1.bf16.msra.mxu0 %v2439
  %2475 = vmatprep.subr.bf16.mxu0 0
  %2476 = vmatpush1.bf16.msra.mxu0 %v2438
  %2477 = vmatprep.subr.bf16.mxu0 0
  %2478 = vmatpush2.bf16.msra.mxu0 0
  %2479 = vmatprep.subr.bf16.mxu0 0
  %2480 = vmatpush2.bf16.msra.mxu0 0
  %2481 = vmatprep.subr.bf16.mxu0 0
  %2482 = vmatpush2.bf16.msra.mxu0 0
  %2483 = vmatprep.subr.bf16.mxu0 0
  %2484 = vmatpush2.bf16.msra.mxu0 0
  %2485 = vmatprep.subr.bf16.mxu0 0
  %2486 = vmatpush2.bf16.msra.mxu0 0
  %2487 = vmatprep.subr.bf16.mxu0 0
  %2488 = vmatpush2.bf16.msra.mxu0 0
  %2489 = vmatprep.subr.bf16.mxu0 0
  %2490 = vmatpush2.bf16.msra.mxu0 %v2447
  %2491 = vmatprep.subr.bf16.mxu0 0
  %2492 = vmatpush2.bf16.msra.mxu0 %v2446
  %2493 = vmatprep.mubr.bf16.mxu0 %v2459
  %2494 = vmatmul.mubr.bf16.gmra.mxu0 %v2243
  %v2495 = vpop.f32.mrf.mxu0
  %v2496 = vadd.f32 %v2393, %v2495
  %v2497 = vpop.f32.mrf.mxu0
  %v2498 = vpop.f32.mrf.mxu0
  %v2499 = vpop.f32.mrf.mxu0
  %2500 = vdwg.mxu0
  %s2501 = scalar_lea.vmem %s5, 160
  %v2502 = vld [vmem:[%s2501] sm:$0xf]
  %v2503 = vld [vmem:[%s2501 + $0x4] sm:$0xf]
  %v2504 = vld [vmem:[%s2501 + $0x8] sm:$0xf]
  %v2505 = vld [vmem:[%s2501 + $0xc] sm:$0xf]
  %v2506 = vld [vmem:[%s2501 + $0x10] sm:$0xf]
  %v2507 = vld [vmem:[%s2501 + $0x14] sm:$0xf]
  %v2508 = vld [vmem:[%s2501 + $0x18] sm:$0xf]
  %v2509 = vld [vmem:[%s2501 + $0x1c] sm:$0xf]
  %v2510 = vld [vmem:[%s2501 + $0x20] sm:$0xf]
  %v2511 = vld [vmem:[%s2501 + $0x24] sm:$0xf]
  %v2512 = vld [vmem:[%s2501 + $0x28] sm:$0xf]
  %v2513 = vld [vmem:[%s2501 + $0x2c] sm:$0xf]
  %v2514 = vld [vmem:[%s2501 + $0x30] sm:$0xf]
  %v2515 = vld [vmem:[%s2501 + $0x34] sm:$0xf]
  %v2516 = vld [vmem:[%s2501 + $0x38] sm:$0xf]
  %v2517 = vld [vmem:[%s2501 + $0x3c] sm:$0xf]
  %v2518 = vld [vmem:[%s2501 + $0x40] sm:$0xf]
  %v2519 = vld [vmem:[%s2501 + $0x44] sm:$0xf]
  %v2520 = vld [vmem:[%s2501 + $0x48] sm:$0xf]
  %v2521 = vld [vmem:[%s2501 + $0x4c] sm:$0xf]
  %v2542 = vunpack.c.l.b16 %v2502
  %v2543 = vunpack.c.l.b16 %v2503
  %v2544 = vunpack.c.l.b16 %v2504
  %v2545 = vunpack.c.l.b16 %v2505
  %v2546 = vunpack.c.l.b16 %v2506
  %v2547 = vunpack.c.l.b16 %v2507
  %v2548 = vunpack.c.l.b16 %v2508
  %v2549 = vunpack.c.l.b16 %v2509
  %v2550 = vunpack.c.l.b16 %v2510
  %v2551 = vunpack.c.l.b16 %v2511
  %v2552 = vunpack.c.l.b16 %v2512
  %v2553 = vunpack.c.l.b16 %v2513
  %v2554 = vunpack.c.l.b16 %v2514
  %v2555 = vunpack.c.l.b16 %v2515
  %v2556 = vunpack.c.l.b16 %v2516
  %v2557 = vunpack.c.l.b16 %v2517
  %v2558 = vunpack.c.l.b16 %v2518
  %v2559 = vunpack.c.l.b16 %v2519
  %v2560 = vunpack.c.l.b16 %v2520
  %v2561 = vunpack.c.l.b16 %v2521
  %v2562 = vpack.c.b16 %v2543, %v2542
  %v2563 = vpack.c.b16 %v2545, %v2544
  %v2564 = vpack.c.b16 %v2547, %v2546
  %v2565 = vpack.c.b16 %v2549, %v2548
  %v2566 = vpack.c.b16 %v2551, %v2550
  %v2567 = vpack.c.b16 %v2553, %v2552
  %v2568 = vpack.c.b16 %v2555, %v2554
  %v2569 = vpack.c.b16 %v2557, %v2556
  %v2570 = vpack.c.b16 %v2559, %v2558
  %v2571 = vpack.c.b16 %v2561, %v2560
  %v2583 = vsel %vm211, %v2246, 0
  %2585 = vmatprep.subr.bf16.mxu0 0
  %2586 = vmatpush1.bf16.msra.mxu0 %v2569
  %2587 = vmatprep.subr.bf16.mxu0 0
  %2588 = vmatpush1.bf16.msra.mxu0 %v2568
  %2589 = vmatprep.subr.bf16.mxu0 0
  %2590 = vmatpush1.bf16.msra.mxu0 %v2567
  %2591 = vmatprep.subr.bf16.mxu0 0
  %2592 = vmatpush1.bf16.msra.mxu0 %v2566
  %2593 = vmatprep.subr.bf16.mxu0 0
  %2594 = vmatpush1.bf16.msra.mxu0 %v2565
  %2595 = vmatprep.subr.bf16.mxu0 0
  %2596 = vmatpush1.bf16.msra.mxu0 %v2564
  %2597 = vmatprep.subr.bf16.mxu0 0
  %2598 = vmatpush1.bf16.msra.mxu0 %v2563
  %2599 = vmatprep.subr.bf16.mxu0 0
  %2600 = vmatpush1.bf16.msra.mxu0 %v2562
  %2601 = vmatprep.subr.bf16.mxu0 0
  %2602 = vmatpush2.bf16.msra.mxu0 0
  %2603 = vmatprep.subr.bf16.mxu0 0
  %2604 = vmatpush2.bf16.msra.mxu0 0
  %2605 = vmatprep.subr.bf16.mxu0 0
  %2606 = vmatpush2.bf16.msra.mxu0 0
  %2607 = vmatprep.subr.bf16.mxu0 0
  %2608 = vmatpush2.bf16.msra.mxu0 0
  %2609 = vmatprep.subr.bf16.mxu0 0
  %2610 = vmatpush2.bf16.msra.mxu0 0
  %2611 = vmatprep.subr.bf16.mxu0 0
  %2612 = vmatpush2.bf16.msra.mxu0 0
  %2613 = vmatprep.subr.bf16.mxu0 0
  %2614 = vmatpush2.bf16.msra.mxu0 %v2571
  %2615 = vmatprep.subr.bf16.mxu0 0
  %2616 = vmatpush2.bf16.msra.mxu0 %v2570
  %2617 = vmatprep.mubr.bf16.mxu0 %v2583
  %2618 = vmatmul.mubr.bf16.gmra.mxu0 %v2245
  %v2619 = vpop.f32.mrf.mxu0
  %v2620 = vadd.f32 0.0, %v2619
  %v2621 = vpop.f32.mrf.mxu0
  %v2622 = vpop.f32.mrf.mxu0
  %v2623 = vpop.f32.mrf.mxu0
  %2624 = vdwg.mxu0
  %v2625 = vadd.f32 %v2496, %v2620
  %s2626 = scalar_lea.vmem %s5, 240
  %v2627 = vld [vmem:[%s2626] sm:$0xf]
  %v2628 = vld [vmem:[%s2626 + $0x4] sm:$0xf]
  %v2629 = vld [vmem:[%s2626 + $0x8] sm:$0xf]
  %v2630 = vld [vmem:[%s2626 + $0xc] sm:$0xf]
  %v2631 = vld [vmem:[%s2626 + $0x10] sm:$0xf]
  %v2632 = vld [vmem:[%s2626 + $0x14] sm:$0xf]
  %v2633 = vld [vmem:[%s2626 + $0x18] sm:$0xf]
  %v2634 = vld [vmem:[%s2626 + $0x1c] sm:$0xf]
  %v2635 = vld [vmem:[%s2626 + $0x20] sm:$0xf]
  %v2636 = vld [vmem:[%s2626 + $0x24] sm:$0xf]
  %v2637 = vld [vmem:[%s2626 + $0x28] sm:$0xf]
  %v2638 = vld [vmem:[%s2626 + $0x2c] sm:$0xf]
  %v2639 = vld [vmem:[%s2626 + $0x30] sm:$0xf]
  %v2640 = vld [vmem:[%s2626 + $0x34] sm:$0xf]
  %v2641 = vld [vmem:[%s2626 + $0x38] sm:$0xf]
  %v2642 = vld [vmem:[%s2626 + $0x3c] sm:$0xf]
  %v2643 = vld [vmem:[%s2626 + $0x40] sm:$0xf]
  %v2644 = vld [vmem:[%s2626 + $0x44] sm:$0xf]
  %v2645 = vld [vmem:[%s2626 + $0x48] sm:$0xf]
  %v2646 = vld [vmem:[%s2626 + $0x4c] sm:$0xf]
  %v2649 = vrot.slane %v2245, 4
  %v2650 = vrot.slane %v2246, 4
  %v2672 = vunpack.c.l.b16 %v2627
  %v2673 = vunpack.c.l.b16 %v2628
  %v2674 = vunpack.c.l.b16 %v2629
  %v2675 = vunpack.c.l.b16 %v2630
  %v2676 = vunpack.c.l.b16 %v2631
  %v2677 = vunpack.c.l.b16 %v2632
  %v2678 = vunpack.c.l.b16 %v2633
  %v2679 = vunpack.c.l.b16 %v2634
  %v2680 = vunpack.c.l.b16 %v2635
  %v2681 = vunpack.c.l.b16 %v2636
  %v2682 = vunpack.c.l.b16 %v2637
  %v2683 = vunpack.c.l.b16 %v2638
  %v2684 = vunpack.c.l.b16 %v2639
  %v2685 = vunpack.c.l.b16 %v2640
  %v2686 = vunpack.c.l.b16 %v2641
  %v2687 = vunpack.c.l.b16 %v2642
  %v2688 = vunpack.c.l.b16 %v2643
  %v2689 = vunpack.c.l.b16 %v2644
  %v2690 = vunpack.c.l.b16 %v2645
  %v2691 = vunpack.c.l.b16 %v2646
  %v2692 = vpack.c.b16 %v2673, %v2672
  %v2693 = vpack.c.b16 %v2675, %v2674
  %v2694 = vpack.c.b16 %v2677, %v2676
  %v2695 = vpack.c.b16 %v2679, %v2678
  %v2696 = vpack.c.b16 %v2681, %v2680
  %v2697 = vpack.c.b16 %v2683, %v2682
  %v2698 = vpack.c.b16 %v2685, %v2684
  %v2699 = vpack.c.b16 %v2687, %v2686
  %v2700 = vpack.c.b16 %v2689, %v2688
  %v2701 = vpack.c.b16 %v2691, %v2690
  %v2713 = vsel %vm211, %v2650, 0
  %2715 = vmatprep.subr.bf16.mxu0 0
  %2716 = vmatpush1.bf16.msra.mxu0 %v2699
  %2717 = vmatprep.subr.bf16.mxu0 0
  %2718 = vmatpush1.bf16.msra.mxu0 %v2698
  %2719 = vmatprep.subr.bf16.mxu0 0
  %2720 = vmatpush1.bf16.msra.mxu0 %v2697
  %2721 = vmatprep.subr.bf16.mxu0 0
  %2722 = vmatpush1.bf16.msra.mxu0 %v2696
  %2723 = vmatprep.subr.bf16.mxu0 0
  %2724 = vmatpush1.bf16.msra.mxu0 %v2695
  %2725 = vmatprep.subr.bf16.mxu0 0
  %2726 = vmatpush1.bf16.msra.mxu0 %v2694
  %2727 = vmatprep.subr.bf16.mxu0 0
  %2728 = vmatpush1.bf16.msra.mxu0 %v2693
  %2729 = vmatprep.subr.bf16.mxu0 0
  %2730 = vmatpush1.bf16.msra.mxu0 %v2692
  %2731 = vmatprep.subr.bf16.mxu0 0
  %2732 = vmatpush2.bf16.msra.mxu0 0
  %2733 = vmatprep.subr.bf16.mxu0 0
  %2734 = vmatpush2.bf16.msra.mxu0 0
  %2735 = vmatprep.subr.bf16.mxu0 0
  %2736 = vmatpush2.bf16.msra.mxu0 0
  %2737 = vmatprep.subr.bf16.mxu0 0
  %2738 = vmatpush2.bf16.msra.mxu0 0
  %2739 = vmatprep.subr.bf16.mxu0 0
  %2740 = vmatpush2.bf16.msra.mxu0 0
  %2741 = vmatprep.subr.bf16.mxu0 0
  %2742 = vmatpush2.bf16.msra.mxu0 0
  %2743 = vmatprep.subr.bf16.mxu0 0
  %2744 = vmatpush2.bf16.msra.mxu0 %v2701
  %2745 = vmatprep.subr.bf16.mxu0 0
  %2746 = vmatpush2.bf16.msra.mxu0 %v2700
  %2747 = vmatprep.mubr.bf16.mxu0 %v2713
  %2748 = vmatmul.mubr.bf16.gmra.mxu0 %v2649
  %v2749 = vpop.f32.mrf.mxu0
  %v2750 = vadd.f32 0.0, %v2749
  %v2751 = vpop.f32.mrf.mxu0
  %v2752 = vpop.f32.mrf.mxu0
  %v2753 = vpop.f32.mrf.mxu0
  %2754 = vdwg.mxu0
  %v2755 = vadd.f32 %v2625, %v2750
  %s2756 = scalar_lea.vmem %s5, 320
  %v2757 = vld [vmem:[%s2756] sm:$0xf]
  %v2758 = vld [vmem:[%s2756 + $0x4] sm:$0xf]
  %v2759 = vld [vmem:[%s2756 + $0x8] sm:$0xf]
  %v2760 = vld [vmem:[%s2756 + $0xc] sm:$0xf]
  %v2761 = vld [vmem:[%s2756 + $0x10] sm:$0xf]
  %v2762 = vld [vmem:[%s2756 + $0x14] sm:$0xf]
  %v2763 = vld [vmem:[%s2756 + $0x18] sm:$0xf]
  %v2764 = vld [vmem:[%s2756 + $0x1c] sm:$0xf]
  %v2765 = vld [vmem:[%s2756 + $0x20] sm:$0xf]
  %v2766 = vld [vmem:[%s2756 + $0x24] sm:$0xf]
  %v2767 = vld [vmem:[%s2756 + $0x28] sm:$0xf]
  %v2768 = vld [vmem:[%s2756 + $0x2c] sm:$0xf]
  %v2769 = vld [vmem:[%s2756 + $0x30] sm:$0xf]
  %v2770 = vld [vmem:[%s2756 + $0x34] sm:$0xf]
  %v2771 = vld [vmem:[%s2756 + $0x38] sm:$0xf]
  %v2772 = vld [vmem:[%s2756 + $0x3c] sm:$0xf]
  %v2773 = vld [vmem:[%s2756 + $0x40] sm:$0xf]
  %v2774 = vld [vmem:[%s2756 + $0x44] sm:$0xf]
  %v2775 = vld [vmem:[%s2756 + $0x48] sm:$0xf]
  %v2776 = vld [vmem:[%s2756 + $0x4c] sm:$0xf]
  %v2797 = vunpack.c.l.b16 %v2757
  %v2798 = vunpack.c.l.b16 %v2758
  %v2799 = vunpack.c.l.b16 %v2759
  %v2800 = vunpack.c.l.b16 %v2760
  %v2801 = vunpack.c.l.b16 %v2761
  %v2802 = vunpack.c.l.b16 %v2762
  %v2803 = vunpack.c.l.b16 %v2763
  %v2804 = vunpack.c.l.b16 %v2764
  %v2805 = vunpack.c.l.b16 %v2765
  %v2806 = vunpack.c.l.b16 %v2766
  %v2807 = vunpack.c.l.b16 %v2767
  %v2808 = vunpack.c.l.b16 %v2768
  %v2809 = vunpack.c.l.b16 %v2769
  %v2810 = vunpack.c.l.b16 %v2770
  %v2811 = vunpack.c.l.b16 %v2771
  %v2812 = vunpack.c.l.b16 %v2772
  %v2813 = vunpack.c.l.b16 %v2773
  %v2814 = vunpack.c.l.b16 %v2774
  %v2815 = vunpack.c.l.b16 %v2775
  %v2816 = vunpack.c.l.b16 %v2776
  %v2817 = vpack.c.b16 %v2798, %v2797
  %v2818 = vpack.c.b16 %v2800, %v2799
  %v2819 = vpack.c.b16 %v2802, %v2801
  %v2820 = vpack.c.b16 %v2804, %v2803
  %v2821 = vpack.c.b16 %v2806, %v2805
  %v2822 = vpack.c.b16 %v2808, %v2807
  %v2823 = vpack.c.b16 %v2810, %v2809
  %v2824 = vpack.c.b16 %v2812, %v2811
  %v2825 = vpack.c.b16 %v2814, %v2813
  %v2826 = vpack.c.b16 %v2816, %v2815
  %v2838 = vsel %vm211, %v2248, 0
  %2840 = vmatprep.subr.bf16.mxu0 0
  %2841 = vmatpush1.bf16.msra.mxu0 %v2824
  %2842 = vmatprep.subr.bf16.mxu0 0
  %2843 = vmatpush1.bf16.msra.mxu0 %v2823
  %2844 = vmatprep.subr.bf16.mxu0 0
  %2845 = vmatpush1.bf16.msra.mxu0 %v2822
  %2846 = vmatprep.subr.bf16.mxu0 0
  %2847 = vmatpush1.bf16.msra.mxu0 %v2821
  %2848 = vmatprep.subr.bf16.mxu0 0
  %2849 = vmatpush1.bf16.msra.mxu0 %v2820
  %2850 = vmatprep.subr.bf16.mxu0 0
  %2851 = vmatpush1.bf16.msra.mxu0 %v2819
  %2852 = vmatprep.subr.bf16.mxu0 0
  %2853 = vmatpush1.bf16.msra.mxu0 %v2818
  %2854 = vmatprep.subr.bf16.mxu0 0
  %2855 = vmatpush1.bf16.msra.mxu0 %v2817
  %2856 = vmatprep.subr.bf16.mxu0 0
  %2857 = vmatpush2.bf16.msra.mxu0 0
  %2858 = vmatprep.subr.bf16.mxu0 0
  %2859 = vmatpush2.bf16.msra.mxu0 0
  %2860 = vmatprep.subr.bf16.mxu0 0
  %2861 = vmatpush2.bf16.msra.mxu0 0
  %2862 = vmatprep.subr.bf16.mxu0 0
  %2863 = vmatpush2.bf16.msra.mxu0 0
  %2864 = vmatprep.subr.bf16.mxu0 0
  %2865 = vmatpush2.bf16.msra.mxu0 0
  %2866 = vmatprep.subr.bf16.mxu0 0
  %2867 = vmatpush2.bf16.msra.mxu0 0
  %2868 = vmatprep.subr.bf16.mxu0 0
  %2869 = vmatpush2.bf16.msra.mxu0 %v2826
  %2870 = vmatprep.subr.bf16.mxu0 0
  %2871 = vmatpush2.bf16.msra.mxu0 %v2825
  %2872 = vmatprep.mubr.bf16.mxu0 %v2838
  %2873 = vmatmul.mubr.bf16.gmra.mxu0 %v2247
  %v2874 = vpop.f32.mrf.mxu0
  %v2875 = vadd.f32 0.0, %v2874
  %v2876 = vpop.f32.mrf.mxu0
  %v2877 = vpop.f32.mrf.mxu0
  %v2878 = vpop.f32.mrf.mxu0
  %2879 = vdwg.mxu0
  %v2880 = vadd.f32 %v2755, %v2875
  %v2881 = vld [vmem:[%s6] sm:$0x1]
  %v2883 = vlaneseq
  %v2884 = vshrl.u32 %v2883, 7
  %v2885 = vsub.s32 0, %v2884
  %v2886 = vrot.slane %v2881, %v2885
  %v2888 = vadd.f32 %v2880, %v2886
  %v2889 = vmax.f32 %v2888, 0.0
  %v2890 = vpack.c.bf16 %v2889, %v2889
  %v2891 = vld [vmem:[%s7] sm:$0xf]
  %v2892 = vld [vmem:[%s7 + $0x4] sm:$0xf]
  %v2893 = vld [vmem:[%s7 + $0x8] sm:$0xf]
  %v2894 = vld [vmem:[%s7 + $0xc] sm:$0xf]
  %v2895 = vld [vmem:[%s7 + $0x10] sm:$0xf]
  %v2896 = vld [vmem:[%s7 + $0x14] sm:$0xf]
  %v2897 = vld [vmem:[%s7 + $0x18] sm:$0xf]
  %v2898 = vld [vmem:[%s7 + $0x1c] sm:$0xf]
  %v2899 = vld [vmem:[%s7 + $0x20] sm:$0xf]
  %v2900 = vld [vmem:[%s7 + $0x24] sm:$0xf]
  %v2901 = vld [vmem:[%s7 + $0x28] sm:$0xf]
  %v2902 = vld [vmem:[%s7 + $0x2c] sm:$0xf]
  %v2903 = vld [vmem:[%s7 + $0x30] sm:$0xf]
  %v2904 = vld [vmem:[%s7 + $0x34] sm:$0xf]
  %v2905 = vld [vmem:[%s7 + $0x38] sm:$0xf]
  %v2906 = vld [vmem:[%s8] sm:$0x1]
  %v2908 = vlaneseq
  %v2909 = vshrl.u32 %v2908, 7
  %v2910 = vsub.s32 0, %v2909
  %v2911 = vrot.slane %v2906, %v2910
  %v2928 = vunpack.c.l.b16 %v2891
  %v2929 = vunpack.c.l.b16 %v2892
  %v2930 = vunpack.c.l.b16 %v2893
  %v2931 = vunpack.c.l.b16 %v2894
  %v2932 = vunpack.c.l.b16 %v2895
  %v2933 = vunpack.c.l.b16 %v2896
  %v2934 = vunpack.c.l.b16 %v2897
  %v2935 = vunpack.c.l.b16 %v2898
  %v2936 = vunpack.c.l.b16 %v2899
  %v2937 = vunpack.c.l.b16 %v2900
  %v2938 = vunpack.c.l.b16 %v2901
  %v2939 = vunpack.c.l.b16 %v2902
  %v2940 = vunpack.c.l.b16 %v2903
  %v2941 = vunpack.c.l.b16 %v2904
  %v2942 = vunpack.c.l.b16 %v2905
  %v2943 = vpack.c.b16 %v2929, %v2928
  %v2944 = vpack.c.b16 %v2931, %v2930
  %v2945 = vpack.c.b16 %v2933, %v2932
  %v2946 = vpack.c.b16 %v2935, %v2934
  %v2947 = vpack.c.b16 %v2937, %v2936
  %v2948 = vpack.c.b16 %v2939, %v2938
  %v2949 = vpack.c.b16 %v2941, %v2940
  %v2950 = vpack.c.b16 %v2942, %v2942
  %vm2958 = vcmask 982016
  %v2960 = vsel %vm2958, %v2890, 0
  %v2963 = vsel %vm922, %v2950, 0
  %2965 = vmatprep.subr.bf16.mxu0 0
  %2966 = vmatpush1.bf16.msra.mxu0 %v2963
  %2967 = vmatprep.subr.bf16.mxu0 0
  %2968 = vmatpush1.bf16.msra.mxu0 %v2949
  %2969 = vmatprep.subr.bf16.mxu0 0
  %2970 = vmatpush1.bf16.msra.mxu0 %v2948
  %2971 = vmatprep.subr.bf16.mxu0 0
  %2972 = vmatpush1.bf16.msra.mxu0 %v2947
  %2973 = vmatprep.subr.bf16.mxu0 0
  %2974 = vmatpush1.bf16.msra.mxu0 %v2946
  %2975 = vmatprep.subr.bf16.mxu0 0
  %2976 = vmatpush1.bf16.msra.mxu0 %v2945
  %2977 = vmatprep.subr.bf16.mxu0 0
  %2978 = vmatpush1.bf16.msra.mxu0 %v2944
  %2979 = vmatprep.subr.bf16.mxu0 0
  %2980 = vmatpush1.bf16.msra.mxu0 %v2943
  %2981 = vmatprep.subr.bf16.mxu0 0
  %2982 = vmatpush2.bf16.msra.mxu0 0
  %2983 = vmatprep.subr.bf16.mxu0 0
  %2984 = vmatpush2.bf16.msra.mxu0 0
  %2985 = vmatprep.subr.bf16.mxu0 0
  %2986 = vmatpush2.bf16.msra.mxu0 0
  %2987 = vmatprep.subr.bf16.mxu0 0
  %2988 = vmatpush2.bf16.msra.mxu0 0
  %2989 = vmatprep.subr.bf16.mxu0 0
  %2990 = vmatpush2.bf16.msra.mxu0 0
  %2991 = vmatprep.subr.bf16.mxu0 0
  %2992 = vmatpush2.bf16.msra.mxu0 0
  %2993 = vmatprep.subr.bf16.mxu0 0
  %2994 = vmatpush2.bf16.msra.mxu0 0
  %2995 = vmatprep.subr.bf16.mxu0 0
  %2996 = vmatpush2.bf16.msra.mxu0 0
  %2997 = vmatprep.mubr.bf16.mxu0 0
  %2998 = vmatmul.mubr.bf16.gmra.mxu0 %v2960
  %v2999 = vpop.f32.mrf.mxu0
  %v3000 = vadd.f32 %v2911, %v2999
  %v3001 = vpop.f32.mrf.mxu0
  %v3002 = vpop.f32.mrf.mxu0
  %v3003 = vpop.f32.mrf.mxu0
  %3004 = vdwg.mxu0
  %v3005 = vmax.f32 %v3000, 0.0
  %v3006 = vpack.c.bf16 %v3005, %v3005
  %v3007 = vld [vmem:[%s9] sm:$0xf]
  %v3008 = vld [vmem:[%s9 + $0x4] sm:$0xf]
  %v3009 = vld [vmem:[%s9 + $0x8] sm:$0xf]
  %v3010 = vld [vmem:[%s9 + $0xc] sm:$0xf]
  %v3011 = vld [vmem:[%s9 + $0x10] sm:$0xf]
  %v3012 = vld [vmem:[%s9 + $0x14] sm:$0xf]
  %v3013 = vld [vmem:[%s9 + $0x18] sm:$0xf]
  %v3014 = vld [vmem:[%s9 + $0x1c] sm:$0xf]
  %v3015 = vld [vmem:[%s9 + $0x20] sm:$0xf]
  %v3016 = vld [vmem:[%s9 + $0x24] sm:$0xf]
  %v3017 = vld [vmem:[%s9 + $0x28] sm:$0x3]
  %v3018 = vld [vmem:[%s10] sm:$0x1]
  %v3020 = vlaneseq
  %v3021 = vshrl.u32 %v3020, 7
  %v3022 = vsub.s32 0, %v3021
  %v3023 = vrot.slane %v3018, %v3022
  %v3036 = vunpack.c.l.b16 %v3007
  %v3037 = vunpack.c.l.b16 %v3008
  %v3038 = vunpack.c.l.b16 %v3009
  %v3039 = vunpack.c.l.b16 %v3010
  %v3040 = vunpack.c.l.b16 %v3011
  %v3041 = vunpack.c.l.b16 %v3012
  %v3042 = vunpack.c.l.b16 %v3013
  %v3043 = vunpack.c.l.b16 %v3014
  %v3044 = vunpack.c.l.b16 %v3015
  %v3045 = vunpack.c.l.b16 %v3016
  %v3046 = vunpack.c.l.b16 %v3017
  %v3047 = vpack.c.b16 %v3037, %v3036
  %v3048 = vpack.c.b16 %v3039, %v3038
  %v3049 = vpack.c.b16 %v3041, %v3040
  %v3050 = vpack.c.b16 %v3043, %v3042
  %v3051 = vpack.c.b16 %v3045, %v3044
  %v3052 = vpack.c.b16 %v3046, %v3046
  %vm3058 = vcmask 687104
  %v3060 = vsel %vm3058, %v3006, 0
  %vm3062 = vcmask 1041408
  %v3064 = vsel %vm3062, %v3052, 0
  %3066 = vmatprep.subr.bf16.mxu0 0
  %3067 = vmatpush1.bf16.msra.mxu0 0
  %3068 = vmatprep.subr.bf16.mxu0 0
  %3069 = vmatpush1.bf16.msra.mxu0 0
  %3070 = vmatprep.subr.bf16.mxu0 0
  %3071 = vmatpush1.bf16.msra.mxu0 %v3064
  %3072 = vmatprep.subr.bf16.mxu0 0
  %3073 = vmatpush1.bf16.msra.mxu0 %v3051
  %3074 = vmatprep.subr.bf16.mxu0 0
  %3075 = vmatpush1.bf16.msra.mxu0 %v3050
  %3076 = vmatprep.subr.bf16.mxu0 0
  %3077 = vmatpush1.bf16.msra.mxu0 %v3049
  %3078 = vmatprep.subr.bf16.mxu0 0
  %3079 = vmatpush1.bf16.msra.mxu0 %v3048
  %3080 = vmatprep.subr.bf16.mxu0 0
  %3081 = vmatpush1.bf16.msra.mxu0 %v3047
  %3082 = vmatprep.subr.bf16.mxu0 0
  %3083 = vmatpush2.bf16.msra.mxu0 0
  %3084 = vmatprep.subr.bf16.mxu0 0
  %3085 = vmatpush2.bf16.msra.mxu0 0
  %3086 = vmatprep.subr.bf16.mxu0 0
  %3087 = vmatpush2.bf16.msra.mxu0 0
  %3088 = vmatprep.subr.bf16.mxu0 0
  %3089 = vmatpush2.bf16.msra.mxu0 0
  %3090 = vmatprep.subr.bf16.mxu0 0
  %3091 = vmatpush2.bf16.msra.mxu0 0
  %3092 = vmatprep.subr.bf16.mxu0 0
  %3093 = vmatpush2.bf16.msra.mxu0 0
  %3094 = vmatprep.subr.bf16.mxu0 0
  %3095 = vmatpush2.bf16.msra.mxu0 0
  %3096 = vmatprep.subr.bf16.mxu0 0
  %3097 = vmatpush2.bf16.msra.mxu0 0
  %3098 = vmatprep.mubr.bf16.mxu0 0
  %3099 = vmatmul.mubr.bf16.gmra.mxu0 %v3060
  %v3100 = vpop.f32.mrf.mxu0
  %v3101 = vadd.f32 %v3023, %v3100
  %v3102 = vpop.f32.mrf.mxu0
  %v3103 = vpop.f32.mrf.mxu0
  %v3104 = vpop.f32.mrf.mxu0
  %3105 = vdwg.mxu0
  %3106 = vst [vmem:[%s11] sm:$0xff] %v3101
  // Predicated region
  $region46: #{lenet5_forward.1} parent=0 // pred_check
    _
  $region47: #{lenet5_forward.1} parent=0 // pred_check_branch
    %3108 = sbr.rel (0) target = $region49
  $region48: #{lenet5_forward.1} parent=0 // pred_region
    _
  $region49: #{lenet5_forward.1} parent=0 // pred_fallthru
    _
  // Predicated region
  $region50: #{lenet5_forward.1} parent=0 // pred_check
    _
  $region51: #{lenet5_forward.1} parent=0 // pred_check_branch
    %3110 = sbr.rel (0) target = $region53
  $region52: #{lenet5_forward.1} parent=0 // pred_region
    _
  $region53: #{lenet5_forward.1} parent=0 // pred_fallthru
    _

</llo_original>
